<compile_context>
chip_gen: v6e
topology: v6e:2x2x1
jax: 0.10.0
libtpu: 0.0.40
codegen_flags: <defaults>
</compile_context>

<pallas_src>
import math
import jax
import jax.numpy as jnp
from jax.experimental import pallas as pl
from jax.experimental.pallas import tpu as pltpu

K_IN = 784          # 28*28 (full contraction dim; no K padding)
H = 1024            # hidden width
N_OUT = 10          # logits
N_PAD = 128         # padded fc3 output width (lane-dense stores)


def _round_up(x, m):
    return (x + m - 1) // m * m


def _choose_tm(B):
    """Batch tile size.

    B <= 16: one tile (latency path).  Otherwise aim for >= 2 tiles so
    ("parallel",) can shard across v7x's two TensorCores and x tiles
    double-buffer behind compute; cap at 512 (VMEM- and overhead-friendly on
    all of v5e/v6e/v7x).
    """
    if B <= 16:
        return _round_up(max(B, 8), 8)
    return min(512, _round_up((B + 1) // 2, 8))


def mlp_kernel(x_ref, w1_ref, b1_ref, w2_ref, b2_ref, w3_ref, b3_ref, o_ref):
    # Cast of x to bf16 happens here (folded behind the pipelined DMA), not in
    # a separate wrapper-side XLA pass.
    x = x_ref[...].astype(jnp.bfloat16)
    # fc1 + ReLU  (bf16 operands, f32 accumulate on the MXU, f32 bias add)
    h1 = jnp.dot(x, w1_ref[...], preferred_element_type=jnp.float32)
    h1 = jnp.maximum(h1 + b1_ref[...], 0.0).astype(jnp.bfloat16)
    # fc2 + ReLU
    h2 = jnp.dot(h1, w2_ref[...], preferred_element_type=jnp.float32)
    h2 = jnp.maximum(h2 + b2_ref[...], 0.0).astype(jnp.bfloat16)
    # fc3 (output padded to 128 lanes; the extra columns are exact zeros)
    out = jnp.dot(h2, w3_ref[...], preferred_element_type=jnp.float32) + b3_ref[...]
    o_ref[...] = out.astype(o_ref.dtype)


@jax.jit
def simple_fcn_forward(x_nchw, params):
    """x_nchw: [B, 1, 28, 28] float32 -> logits [B, 10] float32."""
    w1, b1, w2, b2, w3, b3 = params
    B = x_nchw.shape[0]

    # Flatten only (view-like); no pad-to-1024 / no bf16 cast in the wrapper.
    x = x_nchw.reshape(B, K_IN)

    TM = _choose_tm(B)
    B_pad = _round_up(B, TM)
    if B_pad != B:
        x = jnp.pad(x, ((0, B_pad - B), (0, 0)))

    # Weights bf16 (MXU operands); fc3 cols and bias padded with exact zeros.
    w1b = w1.astype(jnp.bfloat16)                                         # [784, 1024]
    w2b = w2.astype(jnp.bfloat16)                                         # [1024,1024]
    w3p = jnp.pad(w3, ((0, 0), (0, N_PAD - N_OUT))).astype(jnp.bfloat16)  # [1024, 128]
    b3p = jnp.pad(b3, ((0, 0), (0, N_PAD - N_OUT)))                       # [1, 128] f32

    grid = (B_pad // TM,)
    const = lambda shape: pl.BlockSpec(shape, lambda i: tuple(0 for _ in shape))

    flops = 2 * B_pad * (K_IN * H + H * H + H * N_PAD)
    bytes_accessed = (
        B_pad * K_IN * 4                                  # x (f32 in)
        + (K_IN * H + H * H + H * N_PAD) * 2              # bf16 weights
        + (H + H + N_PAD) * 4                             # f32 biases
        + B_pad * N_PAD * 4                               # f32 out
    )

    out_padded = pl.pallas_call(
        mlp_kernel,
        out_shape=jax.ShapeDtypeStruct((B_pad, N_PAD), jnp.float32),
        grid=grid,
        in_specs=[
            pl.BlockSpec((TM, K_IN), lambda i: (i, 0)),   # x tile (pipelined, f32)
            const((K_IN, H)),                             # w1 (VMEM-resident)
            const((1, H)),                                # b1
            const((H, H)),                                # w2
            const((1, H)),                                # b2
            const((H, N_PAD)),                            # w3
            const((1, N_PAD)),                            # b3
        ],
        out_specs=pl.BlockSpec((TM, N_PAD), lambda i: (i, 0)),
        compiler_params=pltpu.CompilerParams(
            dimension_semantics=("parallel",),
            vmem_limit_bytes=32 << 20,
        ),
        cost_estimate=pl.CostEstimate(
            flops=flops, transcendentals=0, bytes_accessed=bytes_accessed),
    )(x, w1b, b1, w2b, b2, w3p, b3p)

    # Trailing slice is a small XLA copy; keep it so the public API matches the
    # PyTorch module's [B, 10] f32 logits.
    return out_padded[:B, :N_OUT]


def init_params(key):
    """Deterministic init mirroring the PyTorch module's __init__.

    kaiming_normal_ (fan_in mode): std = gain / sqrt(fan_in); relu gain = sqrt(2),
    linear gain = 1.  nn.Linear bias default: U(-1/sqrt(fan_in), 1/sqrt(fan_in)).
    Weights returned transposed to [in, out] (f32; the wrapper pads/casts).
    """
    k1, k2, k3, kb1, kb2, kb3 = jax.random.split(key, 6)

    def kaiming(k, fan_in, fan_out, gain):
        std = gain / math.sqrt(fan_in)
        return (jax.random.normal(k, (fan_out, fan_in), jnp.float32) * std).T

    def bias(k, fan_in, fan_out):
        bound = 1.0 / math.sqrt(fan_in)
        return jax.random.uniform(k, (1, fan_out), jnp.float32, -bound, bound)

    w1 = kaiming(k1, K_IN, H, math.sqrt(2.0))
    w2 = kaiming(k2, H, H, math.sqrt(2.0))
    w3 = kaiming(k3, H, N_OUT, 1.0)
    b1 = bias(kb1, K_IN, H)
    b2 = bias(kb2, H, H)
    b3 = bias(kb3, H, N_OUT)
    return (w1, b1, w2, b2, w3, b3)


if __name__ == "__main__":
    key = jax.random.PRNGKey(0)
    kx, kp = jax.random.split(key)

    B = 8  # small, sublane-aligned batch
    x = jax.random.normal(kx, (B, 1, 28, 28), jnp.float32)  # NCHW, MNIST-shaped
    params = init_params(kp)

    logits = simple_fcn_forward(x, params)
    jax.block_until_ready(logits)
    assert logits.shape == (B, N_OUT)

    # Reference with the same bf16 weight/activation rounding as the kernel.
    w1, b1, w2, b2, w3, b3 = params
    xf = x.reshape(B, -1).astype(jnp.bfloat16)
    h = jnp.dot(xf, w1.astype(jnp.bfloat16), preferred_element_type=jnp.float32) + b1
    h = jnp.maximum(h, 0.0).astype(jnp.bfloat16)
    h = jnp.dot(h, w2.astype(jnp.bfloat16), preferred_element_type=jnp.float32) + b2
    h = jnp.maximum(h, 0.0).astype(jnp.bfloat16)
    ref = jnp.dot(h, w3.astype(jnp.bfloat16), preferred_element_type=jnp.float32) + b3

    assert jnp.allclose(logits, ref, atol=1e-2, rtol=1e-2), (
        float(jnp.max(jnp.abs(logits - ref))))

    print("KERNEL_OK")
</pallas_src>

<mosaic_0001>
module attributes {stable_mosaic.version = 11 : i64} {
  func.func @mlp_kernel(%arg0: i32, %arg1: memref<8x784xf32, #tpu.memory_space<vmem>>, %arg2: memref<784x1024xbf16, #tpu.memory_space<vmem>>, %arg3: memref<1x1024xf32, #tpu.memory_space<vmem>>, %arg4: memref<1024x1024xbf16, #tpu.memory_space<vmem>>, %arg5: memref<1x1024xf32, #tpu.memory_space<vmem>>, %arg6: memref<1024x128xbf16, #tpu.memory_space<vmem>>, %arg7: memref<1x128xf32, #tpu.memory_space<vmem>>, %arg8: memref<8x128xf32, #tpu.memory_space<vmem>>) attributes {dimension_semantics = [#tpu.dimension_semantics<parallel>], iteration_bounds = array<i64: 1>, scalar_prefetch = 0 : i64, scratch_operands = 0 : i64, tpu.core_type = #tpu.core_type<tc>, window_params = [{transform_indices = @transform_0, window_bounds = array<i64: 8, 784>}, {pipeline_mode = #tpu.pipeline_mode<synchronous>, transform_indices = @transform_1, window_bounds = array<i64: 784, 1024>}, {pipeline_mode = #tpu.pipeline_mode<synchronous>, transform_indices = @transform_2, window_bounds = array<i64: 1, 1024>}, {pipeline_mode = #tpu.pipeline_mode<synchronous>, transform_indices = @transform_3, window_bounds = array<i64: 1024, 1024>}, {pipeline_mode = #tpu.pipeline_mode<synchronous>, transform_indices = @transform_4, window_bounds = array<i64: 1, 1024>}, {pipeline_mode = #tpu.pipeline_mode<synchronous>, transform_indices = @transform_5, window_bounds = array<i64: 1024, 128>}, {pipeline_mode = #tpu.pipeline_mode<synchronous>, transform_indices = @transform_6, window_bounds = array<i64: 1, 128>}, {transform_indices = @transform_7, window_bounds = array<i64: 8, 128>}]} {
    %c0 = arith.constant 0 : index
    %c0_0 = arith.constant 0 : index
    %0 = vector.load %arg1[%c0, %c0_0] : memref<8x784xf32, #tpu.memory_space<vmem>>, vector<8x784xf32>
    %1 = arith.truncf %0 : vector<8x784xf32> to vector<8x784xbf16>
    %c0_1 = arith.constant 0 : index
    %c0_2 = arith.constant 0 : index
    %2 = vector.load %arg2[%c0_1, %c0_2] : memref<784x1024xbf16, #tpu.memory_space<vmem>>, vector<784x1024xbf16>
    %cst = arith.constant dense<0.000000e+00> : vector<8x1024xf32>
    %3 = tpu.matmul %1, %2, %cst {dimension_numbers = #tpu.dot_dimension_numbers<[1], [0], [0], [1], [0, 0, 1, 1], [], []>} : vector<8x784xbf16>, vector<784x1024xbf16>, vector<8x1024xf32> -> vector<8x1024xf32>
    %c0_3 = arith.constant 0 : index
    %c0_4 = arith.constant 0 : index
    %4 = vector.load %arg3[%c0_3, %c0_4] : memref<1x1024xf32, #tpu.memory_space<vmem>>, vector<1x1024xf32>
    %5 = vector.broadcast %4 : vector<1x1024xf32> to vector<8x1024xf32>
    %6 = arith.addf %3, %5 : vector<8x1024xf32>
    %cst_5 = arith.constant 0.000000e+00 : f32
    %7 = vector.broadcast %cst_5 : f32 to vector<8x1024xf32>
    %8 = arith.maximumf %6, %7 : vector<8x1024xf32>
    %9 = arith.truncf %8 : vector<8x1024xf32> to vector<8x1024xbf16>
    %c0_6 = arith.constant 0 : index
    %c0_7 = arith.constant 0 : index
    %10 = vector.load %arg4[%c0_6, %c0_7] : memref<1024x1024xbf16, #tpu.memory_space<vmem>>, vector<1024x1024xbf16>
    %cst_8 = arith.constant dense<0.000000e+00> : vector<8x1024xf32>
    %11 = tpu.matmul %9, %10, %cst_8 {dimension_numbers = #tpu.dot_dimension_numbers<[1], [0], [0], [1], [0, 0, 1, 1], [], []>} : vector<8x1024xbf16>, vector<1024x1024xbf16>, vector<8x1024xf32> -> vector<8x1024xf32>
    %c0_9 = arith.constant 0 : index
    %c0_10 = arith.constant 0 : index
    %12 = vector.load %arg5[%c0_9, %c0_10] : memref<1x1024xf32, #tpu.memory_space<vmem>>, vector<1x1024xf32>
    %13 = vector.broadcast %12 : vector<1x1024xf32> to vector<8x1024xf32>
    %14 = arith.addf %11, %13 : vector<8x1024xf32>
    %cst_11 = arith.constant 0.000000e+00 : f32
    %15 = vector.broadcast %cst_11 : f32 to vector<8x1024xf32>
    %16 = arith.maximumf %14, %15 : vector<8x1024xf32>
    %17 = arith.truncf %16 : vector<8x1024xf32> to vector<8x1024xbf16>
    %c0_12 = arith.constant 0 : index
    %c0_13 = arith.constant 0 : index
    %18 = vector.load %arg6[%c0_12, %c0_13] : memref<1024x128xbf16, #tpu.memory_space<vmem>>, vector<1024x128xbf16>
    %cst_14 = arith.constant dense<0.000000e+00> : vector<8x128xf32>
    %19 = tpu.matmul %17, %18, %cst_14 {dimension_numbers = #tpu.dot_dimension_numbers<[1], [0], [0], [1], [0, 0, 1, 1], [], []>} : vector<8x1024xbf16>, vector<1024x128xbf16>, vector<8x128xf32> -> vector<8x128xf32>
    %c0_15 = arith.constant 0 : index
    %c0_16 = arith.constant 0 : index
    %20 = vector.load %arg7[%c0_15, %c0_16] : memref<1x128xf32, #tpu.memory_space<vmem>>, vector<1x128xf32>
    %21 = vector.broadcast %20 : vector<1x128xf32> to vector<8x128xf32>
    %22 = arith.addf %19, %21 : vector<8x128xf32>
    %c0_17 = arith.constant 0 : index
    %c0_18 = arith.constant 0 : index
    %23 = vector.load %arg8[%c0_17, %c0_18] : memref<8x128xf32, #tpu.memory_space<vmem>>, vector<8x128xf32>
    tpu.vector_store %arg8[%c0_17, %c0_18], %22 {strides = array<i32>} : memref<8x128xf32, #tpu.memory_space<vmem>>, vector<8x128xf32>,
    return
  }
  func.func @transform_0(%arg0: i32) -> (i32, i32) {
    %c0_i32 = arith.constant 0 : i32
    %c0_i32_0 = arith.constant 0 : i32
    return %arg0, %c0_i32 : i32, i32
  }
  func.func @transform_1(%arg0: i32) -> (i32, i32) {
    %c0_i32 = arith.constant 0 : i32
    %c0_i32_0 = arith.constant 0 : i32
    %c0_i32_1 = arith.constant 0 : i32
    return %c0_i32, %c0_i32_0 : i32, i32
  }
  func.func @transform_2(%arg0: i32) -> (i32, i32) {
    %c0_i32 = arith.constant 0 : i32
    %c0_i32_0 = arith.constant 0 : i32
    %c0_i32_1 = arith.constant 0 : i32
    return %c0_i32, %c0_i32_0 : i32, i32
  }
  func.func @transform_3(%arg0: i32) -> (i32, i32) {
    %c0_i32 = arith.constant 0 : i32
    %c0_i32_0 = arith.constant 0 : i32
    %c0_i32_1 = arith.constant 0 : i32
    return %c0_i32, %c0_i32_0 : i32, i32
  }
  func.func @transform_4(%arg0: i32) -> (i32, i32) {
    %c0_i32 = arith.constant 0 : i32
    %c0_i32_0 = arith.constant 0 : i32
    %c0_i32_1 = arith.constant 0 : i32
    return %c0_i32, %c0_i32_0 : i32, i32
  }
  func.func @transform_5(%arg0: i32) -> (i32, i32) {
    %c0_i32 = arith.constant 0 : i32
    %c0_i32_0 = arith.constant 0 : i32
    %c0_i32_1 = arith.constant 0 : i32
    return %c0_i32, %c0_i32_0 : i32, i32
  }
  func.func @transform_6(%arg0: i32) -> (i32, i32) {
    %c0_i32 = arith.constant 0 : i32
    %c0_i32_0 = arith.constant 0 : i32
    %c0_i32_1 = arith.constant 0 : i32
    return %c0_i32, %c0_i32_0 : i32, i32
  }
  func.func @transform_7(%arg0: i32) -> (i32, i32) {
    %c0_i32 = arith.constant 0 : i32
    %c0_i32_0 = arith.constant 0 : i32
    return %arg0, %c0_i32 : i32, i32
  }
}

</mosaic_0001>

<llo_original>
// kernel: simple_fcn_forward.1
$region0: #{simple_fcn_forward.1}
  #allocation0 [shape = 'u32[]', space=smem, size = 0x4, offset = 0x4, fixed_abs, tag = 'smem constant byte address 0x4 - core index']
  #allocation1 [shape = 'u32[144,128]{1,0:T(1,128)}', space=vmem, size = 0x12000, scoped, tag = 'internal scratch']
  %s0 = inlined_call_operand.vmem [shape: f32[8,784], index: 0, kind: input, shape index: {}]
  %s1 = inlined_call_operand.vmem [shape: bf16[784,1024], index: 1, kind: input, shape index: {}]
  %s2 = inlined_call_operand.vmem [shape: f32[1,1024], index: 2, kind: input, shape index: {}]
  %s3 = inlined_call_operand.vmem [shape: bf16[1024,1024], index: 3, kind: input, shape index: {}]
  %s4 = inlined_call_operand.vmem [shape: f32[1,1024], index: 4, kind: input, shape index: {}]
  %s5 = inlined_call_operand.vmem [shape: bf16[1024,128], index: 5, kind: input, shape index: {}]
  %s6 = inlined_call_operand.vmem [shape: f32[1,128], index: 6, kind: input, shape index: {}]
  %s7 = inlined_call_operand.hbm [shape: f32[8,128], index: 7, kind: output, shape index: {}]
  %s8 = sld [smem:[#allocation0]]
  $region38: #{simple_fcn_forward.1} parent=0
    _
  %s10 = ssub.s32 1, %s8
  %s11 = scalar_select 0, %s10, %s8
  $region1: #{simple_fcn_forward.1} parent=0
    #allocation2 [shape = 'u8[4096]{0}', space=vmem, size = 0x1000, scoped, tag = 'output window, operand 0, single buffered']
    #allocation3 [shape = 's32[1]{0}', space=sflag, size = 0x4, scoped, tag = 'scoped memory for simple_fcn_forward.1']
    %12 = vsyncpa [#allocation3], 0
    // Predicated region
    $region2: #{simple_fcn_forward.1} parent=1 // pred_check
      _
    $region3: #{simple_fcn_forward.1} parent=1 // pred_check_branch
      %14 = sbr.rel (0) target = $region5
    $region4: #{simple_fcn_forward.1} parent=1 // pred_region
      _
    $region5: #{simple_fcn_forward.1} parent=1 // pred_fallthru
      _
    // Predicated region
    $region6: #{simple_fcn_forward.1} parent=1 // pred_check
      _
    $region7: #{simple_fcn_forward.1} parent=1 // pred_check_branch
      %16 = sbr.rel (0) target = $region9
    $region8: #{simple_fcn_forward.1} parent=1 // pred_region
      _
    $region9: #{simple_fcn_forward.1} parent=1 // pred_fallthru
      _
    // Predicated region
    $region10: #{simple_fcn_forward.1} parent=1 // pred_check
      _
    $region11: #{simple_fcn_forward.1} parent=1 // pred_check_branch
      %18 = sbr.rel (0) target = $region13
    $region12: #{simple_fcn_forward.1} parent=1 // pred_region
      _
    $region13: #{simple_fcn_forward.1} parent=1 // pred_fallthru
      _
    // Predicated region
    $region14: #{simple_fcn_forward.1} parent=1 // pred_check
      _
    $region15: #{simple_fcn_forward.1} parent=1 // pred_check_branch
      %20 = sbr.rel (0) target = $region17
    $region16: #{simple_fcn_forward.1} parent=1 // pred_region
      _
    $region17: #{simple_fcn_forward.1} parent=1 // pred_fallthru
      _
    // Predicated region
    $region18: #{simple_fcn_forward.1} parent=1 // pred_check
      _
    $region19: #{simple_fcn_forward.1} parent=1 // pred_check_branch
      %22 = sbr.rel (0) target = $region21
    $region20: #{simple_fcn_forward.1} parent=1 // pred_region
      _
    $region21: #{simple_fcn_forward.1} parent=1 // pred_fallthru
      _
    // Predicated region
    $region22: #{simple_fcn_forward.1} parent=1 // pred_check
      _
    $region23: #{simple_fcn_forward.1} parent=1 // pred_check_branch
      %24 = sbr.rel (0) target = $region25
    $region24: #{simple_fcn_forward.1} parent=1 // pred_region
      _
    $region25: #{simple_fcn_forward.1} parent=1 // pred_fallthru
      _
    // Predicated region
    $region26: #{simple_fcn_forward.1} parent=1 // pred_check
      _
    $region27: #{simple_fcn_forward.1} parent=1 // pred_check_branch
      %26 = sbr.rel (0) target = $region29
    $region28: #{simple_fcn_forward.1} parent=1 // pred_region
      _
    $region29: #{simple_fcn_forward.1} parent=1 // pred_fallthru
      _
    %v28 = vld [vmem:[%s0] sm:$0xff]
    %v29 = vld [vmem:[%s0 + $0x8] sm:$0xff]
    %v30 = vld [vmem:[%s0 + $0x10] sm:$0xff]
    %v31 = vld [vmem:[%s0 + $0x18] sm:$0xff]
    %v32 = vld [vmem:[%s0 + $0x20] sm:$0xff]
    %v33 = vld [vmem:[%s0 + $0x28] sm:$0xff]
    %v34 = vld [vmem:[%s0 + $0x30] sm:$0xff]
    %v35 = vpack.c.bf16 %v28, %v28
    %v36 = vpack.c.bf16 %v29, %v29
    %v37 = vpack.c.bf16 %v30, %v30
    %v38 = vpack.c.bf16 %v31, %v31
    %v39 = vpack.c.bf16 %v32, %v32
    %v40 = vpack.c.bf16 %v33, %v33
    %v41 = vpack.c.bf16 %v34, %v34
    %v42 = vld [vmem:[%s1] sm:$0xff]
    %v43 = vld [vmem:[%s1 + $0x8] sm:$0xff]
    %v44 = vld [vmem:[%s1 + $0x10] sm:$0xff]
    %v45 = vld [vmem:[%s1 + $0x18] sm:$0xff]
    %v46 = vld [vmem:[%s1 + $0x20] sm:$0xff]
    %v47 = vld [vmem:[%s1 + $0x28] sm:$0xff]
    %v48 = vld [vmem:[%s1 + $0x30] sm:$0xff]
    %v49 = vld [vmem:[%s1 + $0x38] sm:$0xff]
    %v50 = vld [vmem:[%s1 + $0x40] sm:$0xff]
    %v51 = vld [vmem:[%s1 + $0x48] sm:$0xff]
    %v52 = vld [vmem:[%s1 + $0x50] sm:$0xff]
    %v53 = vld [vmem:[%s1 + $0x58] sm:$0xff]
    %v54 = vld [vmem:[%s1 + $0x60] sm:$0xff]
    %v55 = vld [vmem:[%s1 + $0x68] sm:$0xff]
    %v56 = vld [vmem:[%s1 + $0x70] sm:$0xff]
    %v57 = vld [vmem:[%s1 + $0x78] sm:$0xff]
    %v58 = vld [vmem:[%s1 + $0x80] sm:$0xff]
    %v59 = vld [vmem:[%s1 + $0x88] sm:$0xff]
    %v60 = vld [vmem:[%s1 + $0x90] sm:$0xff]
    %v61 = vld [vmem:[%s1 + $0x98] sm:$0xff]
    %v62 = vld [vmem:[%s1 + $0xa0] sm:$0xff]
    %v63 = vld [vmem:[%s1 + $0xa8] sm:$0xff]
    %v64 = vld [vmem:[%s1 + $0xb0] sm:$0xff]
    %v65 = vld [vmem:[%s1 + $0xb8] sm:$0xff]
    %v66 = vld [vmem:[%s1 + $0xc0] sm:$0xff]
    %v67 = vld [vmem:[%s1 + $0xc8] sm:$0xff]
    %v68 = vld [vmem:[%s1 + $0xd0] sm:$0xff]
    %v69 = vld [vmem:[%s1 + $0xd8] sm:$0xff]
    %v70 = vld [vmem:[%s1 + $0xe0] sm:$0xff]
    %v71 = vld [vmem:[%s1 + $0xe8] sm:$0xff]
    %v72 = vld [vmem:[%s1 + $0xf0] sm:$0xff]
    %v73 = vld [vmem:[%s1 + $0xf8] sm:$0xff]
    %v74 = vld [vmem:[%s1 + $0x100] sm:$0xff]
    %v75 = vld [vmem:[%s1 + $0x108] sm:$0xff]
    %v76 = vld [vmem:[%s1 + $0x110] sm:$0xff]
    %v77 = vld [vmem:[%s1 + $0x118] sm:$0xff]
    %v78 = vld [vmem:[%s1 + $0x120] sm:$0xff]
    %v79 = vld [vmem:[%s1 + $0x128] sm:$0xff]
    %v80 = vld [vmem:[%s1 + $0x130] sm:$0xff]
    %v81 = vld [vmem:[%s1 + $0x138] sm:$0xff]
    %v82 = vld [vmem:[%s1 + $0x140] sm:$0xff]
    %v83 = vld [vmem:[%s1 + $0x148] sm:$0xff]
    %v84 = vld [vmem:[%s1 + $0x150] sm:$0xff]
    %v85 = vld [vmem:[%s1 + $0x158] sm:$0xff]
    %v86 = vld [vmem:[%s1 + $0x160] sm:$0xff]
    %v87 = vld [vmem:[%s1 + $0x168] sm:$0xff]
    %v88 = vld [vmem:[%s1 + $0x170] sm:$0xff]
    %v89 = vld [vmem:[%s1 + $0x178] sm:$0xff]
    %v90 = vld [vmem:[%s1 + $0x180] sm:$0xff]
    %v91 = vld [vmem:[%s1 + $0x188] sm:$0xff]
    %v92 = vld [vmem:[%s1 + $0x190] sm:$0xff]
    %v93 = vld [vmem:[%s1 + $0x198] sm:$0xff]
    %v94 = vld [vmem:[%s1 + $0x1a0] sm:$0xff]
    %v95 = vld [vmem:[%s1 + $0x1a8] sm:$0xff]
    %v96 = vld [vmem:[%s1 + $0x1b0] sm:$0xff]
    %v97 = vld [vmem:[%s1 + $0x1b8] sm:$0xff]
    %v98 = vld [vmem:[%s1 + $0x1c0] sm:$0xff]
    %v99 = vld [vmem:[%s1 + $0x1c8] sm:$0xff]
    %v100 = vld [vmem:[%s1 + $0x1d0] sm:$0xff]
    %v101 = vld [vmem:[%s1 + $0x1d8] sm:$0xff]
    %v102 = vld [vmem:[%s1 + $0x1e0] sm:$0xff]
    %v103 = vld [vmem:[%s1 + $0x1e8] sm:$0xff]
    %v104 = vld [vmem:[%s1 + $0x1f0] sm:$0xff]
    %v105 = vld [vmem:[%s1 + $0x1f8] sm:$0xff]
    %v106 = vld [vmem:[%s1 + $0x200] sm:$0xff]
    %v107 = vld [vmem:[%s1 + $0x208] sm:$0xff]
    %v108 = vld [vmem:[%s1 + $0x210] sm:$0xff]
    %v109 = vld [vmem:[%s1 + $0x218] sm:$0xff]
    %v110 = vld [vmem:[%s1 + $0x220] sm:$0xff]
    %v111 = vld [vmem:[%s1 + $0x228] sm:$0xff]
    %v112 = vld [vmem:[%s1 + $0x230] sm:$0xff]
    %v113 = vld [vmem:[%s1 + $0x238] sm:$0xff]
    %v114 = vld [vmem:[%s1 + $0x240] sm:$0xff]
    %v115 = vld [vmem:[%s1 + $0x248] sm:$0xff]
    %v116 = vld [vmem:[%s1 + $0x250] sm:$0xff]
    %v117 = vld [vmem:[%s1 + $0x258] sm:$0xff]
    %v118 = vld [vmem:[%s1 + $0x260] sm:$0xff]
    %v119 = vld [vmem:[%s1 + $0x268] sm:$0xff]
    %v120 = vld [vmem:[%s1 + $0x270] sm:$0xff]
    %v121 = vld [vmem:[%s1 + $0x278] sm:$0xff]
    %v122 = vld [vmem:[%s1 + $0x280] sm:$0xff]
    %v123 = vld [vmem:[%s1 + $0x288] sm:$0xff]
    %v124 = vld [vmem:[%s1 + $0x290] sm:$0xff]
    %v125 = vld [vmem:[%s1 + $0x298] sm:$0xff]
    %v126 = vld [vmem:[%s1 + $0x2a0] sm:$0xff]
    %v127 = vld [vmem:[%s1 + $0x2a8] sm:$0xff]
    %v128 = vld [vmem:[%s1 + $0x2b0] sm:$0xff]
    %v129 = vld [vmem:[%s1 + $0x2b8] sm:$0xff]
    %v130 = vld [vmem:[%s1 + $0x2c0] sm:$0xff]
    %v131 = vld [vmem:[%s1 + $0x2c8] sm:$0xff]
    %v132 = vld [vmem:[%s1 + $0x2d0] sm:$0xff]
    %v133 = vld [vmem:[%s1 + $0x2d8] sm:$0xff]
    %v134 = vld [vmem:[%s1 + $0x2e0] sm:$0xff]
    %v135 = vld [vmem:[%s1 + $0x2e8] sm:$0xff]
    %v136 = vld [vmem:[%s1 + $0x2f0] sm:$0xff]
    %v137 = vld [vmem:[%s1 + $0x2f8] sm:$0xff]
    %v138 = vld [vmem:[%s1 + $0x300] sm:$0xff]
    %v139 = vld [vmem:[%s1 + $0x308] sm:$0xff]
    %v140 = vld [vmem:[%s1 + $0x310] sm:$0xff]
    %v141 = vld [vmem:[%s1 + $0x318] sm:$0xff]
    %v142 = vld [vmem:[%s1 + $0x320] sm:$0xff]
    %v143 = vld [vmem:[%s1 + $0x328] sm:$0xff]
    %v144 = vld [vmem:[%s1 + $0x330] sm:$0xff]
    %v145 = vld [vmem:[%s1 + $0x338] sm:$0xff]
    %v146 = vld [vmem:[%s1 + $0x340] sm:$0xff]
    %v147 = vld [vmem:[%s1 + $0x348] sm:$0xff]
    %v148 = vld [vmem:[%s1 + $0x350] sm:$0xff]
    %v149 = vld [vmem:[%s1 + $0x358] sm:$0xff]
    %v150 = vld [vmem:[%s1 + $0x360] sm:$0xff]
    %v151 = vld [vmem:[%s1 + $0x368] sm:$0xff]
    %v152 = vld [vmem:[%s1 + $0x370] sm:$0xff]
    %v153 = vld [vmem:[%s1 + $0x378] sm:$0xff]
    %v154 = vld [vmem:[%s1 + $0x380] sm:$0xff]
    %v155 = vld [vmem:[%s1 + $0x388] sm:$0xff]
    %v156 = vld [vmem:[%s1 + $0x390] sm:$0xff]
    %v157 = vld [vmem:[%s1 + $0x398] sm:$0xff]
    %v158 = vld [vmem:[%s1 + $0x3a0] sm:$0xff]
    %v159 = vld [vmem:[%s1 + $0x3a8] sm:$0xff]
    %v160 = vld [vmem:[%s1 + $0x3b0] sm:$0xff]
    %v161 = vld [vmem:[%s1 + $0x3b8] sm:$0xff]
    %v162 = vld [vmem:[%s1 + $0x3c0] sm:$0xff]
    %v163 = vld [vmem:[%s1 + $0x3c8] sm:$0xff]
    %v164 = vld [vmem:[%s1 + $0x3d0] sm:$0xff]
    %v165 = vld [vmem:[%s1 + $0x3d8] sm:$0xff]
    %v166 = vld [vmem:[%s1 + $0x3e0] sm:$0xff]
    %v167 = vld [vmem:[%s1 + $0x3e8] sm:$0xff]
    %v168 = vld [vmem:[%s1 + $0x3f0] sm:$0xff]
    %v169 = vld [vmem:[%s1 + $0x3f8] sm:$0xff]
    %v170 = vld [vmem:[%s1 + $0x400] sm:$0xff]
    %v171 = vld [vmem:[%s1 + $0x408] sm:$0xff]
    %v172 = vld [vmem:[%s1 + $0x410] sm:$0xff]
    %v173 = vld [vmem:[%s1 + $0x418] sm:$0xff]
    %v174 = vld [vmem:[%s1 + $0x420] sm:$0xff]
    %v175 = vld [vmem:[%s1 + $0x428] sm:$0xff]
    %v176 = vld [vmem:[%s1 + $0x430] sm:$0xff]
    %v177 = vld [vmem:[%s1 + $0x438] sm:$0xff]
    %v178 = vld [vmem:[%s1 + $0x440] sm:$0xff]
    %v179 = vld [vmem:[%s1 + $0x448] sm:$0xff]
    %v180 = vld [vmem:[%s1 + $0x450] sm:$0xff]
    %v181 = vld [vmem:[%s1 + $0x458] sm:$0xff]
    %v182 = vld [vmem:[%s1 + $0x460] sm:$0xff]
    %v183 = vld [vmem:[%s1 + $0x468] sm:$0xff]
    %v184 = vld [vmem:[%s1 + $0x470] sm:$0xff]
    %v185 = vld [vmem:[%s1 + $0x478] sm:$0xff]
    %v186 = vld [vmem:[%s1 + $0x480] sm:$0xff]
    %v187 = vld [vmem:[%s1 + $0x488] sm:$0xff]
    %v188 = vld [vmem:[%s1 + $0x490] sm:$0xff]
    %v189 = vld [vmem:[%s1 + $0x498] sm:$0xff]
    %v190 = vld [vmem:[%s1 + $0x4a0] sm:$0xff]
    %v191 = vld [vmem:[%s1 + $0x4a8] sm:$0xff]
    %v192 = vld [vmem:[%s1 + $0x4b0] sm:$0xff]
    %v193 = vld [vmem:[%s1 + $0x4b8] sm:$0xff]
    %v194 = vld [vmem:[%s1 + $0x4c0] sm:$0xff]
    %v195 = vld [vmem:[%s1 + $0x4c8] sm:$0xff]
    %v196 = vld [vmem:[%s1 + $0x4d0] sm:$0xff]
    %v197 = vld [vmem:[%s1 + $0x4d8] sm:$0xff]
    %v198 = vld [vmem:[%s1 + $0x4e0] sm:$0xff]
    %v199 = vld [vmem:[%s1 + $0x4e8] sm:$0xff]
    %v200 = vld [vmem:[%s1 + $0x4f0] sm:$0xff]
    %v201 = vld [vmem:[%s1 + $0x4f8] sm:$0xff]
    %v202 = vld [vmem:[%s1 + $0x500] sm:$0xff]
    %v203 = vld [vmem:[%s1 + $0x508] sm:$0xff]
    %v204 = vld [vmem:[%s1 + $0x510] sm:$0xff]
    %v205 = vld [vmem:[%s1 + $0x518] sm:$0xff]
    %v206 = vld [vmem:[%s1 + $0x520] sm:$0xff]
    %v207 = vld [vmem:[%s1 + $0x528] sm:$0xff]
    %v208 = vld [vmem:[%s1 + $0x530] sm:$0xff]
    %v209 = vld [vmem:[%s1 + $0x538] sm:$0xff]
    %v210 = vld [vmem:[%s1 + $0x540] sm:$0xff]
    %v211 = vld [vmem:[%s1 + $0x548] sm:$0xff]
    %v212 = vld [vmem:[%s1 + $0x550] sm:$0xff]
    %v213 = vld [vmem:[%s1 + $0x558] sm:$0xff]
    %v214 = vld [vmem:[%s1 + $0x560] sm:$0xff]
    %v215 = vld [vmem:[%s1 + $0x568] sm:$0xff]
    %v216 = vld [vmem:[%s1 + $0x570] sm:$0xff]
    %v217 = vld [vmem:[%s1 + $0x578] sm:$0xff]
    %v218 = vld [vmem:[%s1 + $0x580] sm:$0xff]
    %v219 = vld [vmem:[%s1 + $0x588] sm:$0xff]
    %v220 = vld [vmem:[%s1 + $0x590] sm:$0xff]
    %v221 = vld [vmem:[%s1 + $0x598] sm:$0xff]
    %v222 = vld [vmem:[%s1 + $0x5a0] sm:$0xff]
    %v223 = vld [vmem:[%s1 + $0x5a8] sm:$0xff]
    %v224 = vld [vmem:[%s1 + $0x5b0] sm:$0xff]
    %v225 = vld [vmem:[%s1 + $0x5b8] sm:$0xff]
    %v226 = vld [vmem:[%s1 + $0x5c0] sm:$0xff]
    %v227 = vld [vmem:[%s1 + $0x5c8] sm:$0xff]
    %v228 = vld [vmem:[%s1 + $0x5d0] sm:$0xff]
    %v229 = vld [vmem:[%s1 + $0x5d8] sm:$0xff]
    %v230 = vld [vmem:[%s1 + $0x5e0] sm:$0xff]
    %v231 = vld [vmem:[%s1 + $0x5e8] sm:$0xff]
    %v232 = vld [vmem:[%s1 + $0x5f0] sm:$0xff]
    %v233 = vld [vmem:[%s1 + $0x5f8] sm:$0xff]
    %v234 = vld [vmem:[%s1 + $0x600] sm:$0xff]
    %v235 = vld [vmem:[%s1 + $0x608] sm:$0xff]
    %v236 = vld [vmem:[%s1 + $0x610] sm:$0xff]
    %v237 = vld [vmem:[%s1 + $0x618] sm:$0xff]
    %v238 = vld [vmem:[%s1 + $0x620] sm:$0xff]
    %v239 = vld [vmem:[%s1 + $0x628] sm:$0xff]
    %v240 = vld [vmem:[%s1 + $0x630] sm:$0xff]
    %v241 = vld [vmem:[%s1 + $0x638] sm:$0xff]
    %v242 = vld [vmem:[%s1 + $0x640] sm:$0xff]
    %v243 = vld [vmem:[%s1 + $0x648] sm:$0xff]
    %v244 = vld [vmem:[%s1 + $0x650] sm:$0xff]
    %v245 = vld [vmem:[%s1 + $0x658] sm:$0xff]
    %v246 = vld [vmem:[%s1 + $0x660] sm:$0xff]
    %v247 = vld [vmem:[%s1 + $0x668] sm:$0xff]
    %v248 = vld [vmem:[%s1 + $0x670] sm:$0xff]
    %v249 = vld [vmem:[%s1 + $0x678] sm:$0xff]
    %v250 = vld [vmem:[%s1 + $0x680] sm:$0xff]
    %v251 = vld [vmem:[%s1 + $0x688] sm:$0xff]
    %v252 = vld [vmem:[%s1 + $0x690] sm:$0xff]
    %v253 = vld [vmem:[%s1 + $0x698] sm:$0xff]
    %v254 = vld [vmem:[%s1 + $0x6a0] sm:$0xff]
    %v255 = vld [vmem:[%s1 + $0x6a8] sm:$0xff]
    %v256 = vld [vmem:[%s1 + $0x6b0] sm:$0xff]
    %v257 = vld [vmem:[%s1 + $0x6b8] sm:$0xff]
    %v258 = vld [vmem:[%s1 + $0x6c0] sm:$0xff]
    %v259 = vld [vmem:[%s1 + $0x6c8] sm:$0xff]
    %v260 = vld [vmem:[%s1 + $0x6d0] sm:$0xff]
    %v261 = vld [vmem:[%s1 + $0x6d8] sm:$0xff]
    %v262 = vld [vmem:[%s1 + $0x6e0] sm:$0xff]
    %v263 = vld [vmem:[%s1 + $0x6e8] sm:$0xff]
    %v264 = vld [vmem:[%s1 + $0x6f0] sm:$0xff]
    %v265 = vld [vmem:[%s1 + $0x6f8] sm:$0xff]
    %v266 = vld [vmem:[%s1 + $0x700] sm:$0xff]
    %v267 = vld [vmem:[%s1 + $0x708] sm:$0xff]
    %v268 = vld [vmem:[%s1 + $0x710] sm:$0xff]
    %v269 = vld [vmem:[%s1 + $0x718] sm:$0xff]
    %v270 = vld [vmem:[%s1 + $0x720] sm:$0xff]
    %v271 = vld [vmem:[%s1 + $0x728] sm:$0xff]
    %v272 = vld [vmem:[%s1 + $0x730] sm:$0xff]
    %v273 = vld [vmem:[%s1 + $0x738] sm:$0xff]
    %v274 = vld [vmem:[%s1 + $0x740] sm:$0xff]
    %v275 = vld [vmem:[%s1 + $0x748] sm:$0xff]
    %v276 = vld [vmem:[%s1 + $0x750] sm:$0xff]
    %v277 = vld [vmem:[%s1 + $0x758] sm:$0xff]
    %v278 = vld [vmem:[%s1 + $0x760] sm:$0xff]
    %v279 = vld [vmem:[%s1 + $0x768] sm:$0xff]
    %v280 = vld [vmem:[%s1 + $0x770] sm:$0xff]
    %v281 = vld [vmem:[%s1 + $0x778] sm:$0xff]
    %v282 = vld [vmem:[%s1 + $0x780] sm:$0xff]
    %v283 = vld [vmem:[%s1 + $0x788] sm:$0xff]
    %v284 = vld [vmem:[%s1 + $0x790] sm:$0xff]
    %v285 = vld [vmem:[%s1 + $0x798] sm:$0xff]
    %v286 = vld [vmem:[%s1 + $0x7a0] sm:$0xff]
    %v287 = vld [vmem:[%s1 + $0x7a8] sm:$0xff]
    %v288 = vld [vmem:[%s1 + $0x7b0] sm:$0xff]
    %v289 = vld [vmem:[%s1 + $0x7b8] sm:$0xff]
    %v290 = vld [vmem:[%s1 + $0x7c0] sm:$0xff]
    %v291 = vld [vmem:[%s1 + $0x7c8] sm:$0xff]
    %v292 = vld [vmem:[%s1 + $0x7d0] sm:$0xff]
    %v293 = vld [vmem:[%s1 + $0x7d8] sm:$0xff]
    %v294 = vld [vmem:[%s1 + $0x7e0] sm:$0xff]
    %v295 = vld [vmem:[%s1 + $0x7e8] sm:$0xff]
    %v296 = vld [vmem:[%s1 + $0x7f0] sm:$0xff]
    %v297 = vld [vmem:[%s1 + $0x7f8] sm:$0xff]
    %v298 = vld [vmem:[%s1 + $0x800] sm:$0xff]
    %v299 = vld [vmem:[%s1 + $0x808] sm:$0xff]
    %v300 = vld [vmem:[%s1 + $0x810] sm:$0xff]
    %v301 = vld [vmem:[%s1 + $0x818] sm:$0xff]
    %v302 = vld [vmem:[%s1 + $0x820] sm:$0xff]
    %v303 = vld [vmem:[%s1 + $0x828] sm:$0xff]
    %v304 = vld [vmem:[%s1 + $0x830] sm:$0xff]
    %v305 = vld [vmem:[%s1 + $0x838] sm:$0xff]
    %v306 = vld [vmem:[%s1 + $0x840] sm:$0xff]
    %v307 = vld [vmem:[%s1 + $0x848] sm:$0xff]
    %v308 = vld [vmem:[%s1 + $0x850] sm:$0xff]
    %v309 = vld [vmem:[%s1 + $0x858] sm:$0xff]
    %v310 = vld [vmem:[%s1 + $0x860] sm:$0xff]
    %v311 = vld [vmem:[%s1 + $0x868] sm:$0xff]
    %v312 = vld [vmem:[%s1 + $0x870] sm:$0xff]
    %v313 = vld [vmem:[%s1 + $0x878] sm:$0xff]
    %v314 = vld [vmem:[%s1 + $0x880] sm:$0xff]
    %v315 = vld [vmem:[%s1 + $0x888] sm:$0xff]
    %v316 = vld [vmem:[%s1 + $0x890] sm:$0xff]
    %v317 = vld [vmem:[%s1 + $0x898] sm:$0xff]
    %v318 = vld [vmem:[%s1 + $0x8a0] sm:$0xff]
    %v319 = vld [vmem:[%s1 + $0x8a8] sm:$0xff]
    %v320 = vld [vmem:[%s1 + $0x8b0] sm:$0xff]
    %v321 = vld [vmem:[%s1 + $0x8b8] sm:$0xff]
    %v322 = vld [vmem:[%s1 + $0x8c0] sm:$0xff]
    %v323 = vld [vmem:[%s1 + $0x8c8] sm:$0xff]
    %v324 = vld [vmem:[%s1 + $0x8d0] sm:$0xff]
    %v325 = vld [vmem:[%s1 + $0x8d8] sm:$0xff]
    %v326 = vld [vmem:[%s1 + $0x8e0] sm:$0xff]
    %v327 = vld [vmem:[%s1 + $0x8e8] sm:$0xff]
    %v328 = vld [vmem:[%s1 + $0x8f0] sm:$0xff]
    %v329 = vld [vmem:[%s1 + $0x8f8] sm:$0xff]
    %v330 = vld [vmem:[%s1 + $0x900] sm:$0xff]
    %v331 = vld [vmem:[%s1 + $0x908] sm:$0xff]
    %v332 = vld [vmem:[%s1 + $0x910] sm:$0xff]
    %v333 = vld [vmem:[%s1 + $0x918] sm:$0xff]
    %v334 = vld [vmem:[%s1 + $0x920] sm:$0xff]
    %v335 = vld [vmem:[%s1 + $0x928] sm:$0xff]
    %v336 = vld [vmem:[%s1 + $0x930] sm:$0xff]
    %v337 = vld [vmem:[%s1 + $0x938] sm:$0xff]
    %v338 = vld [vmem:[%s1 + $0x940] sm:$0xff]
    %v339 = vld [vmem:[%s1 + $0x948] sm:$0xff]
    %v340 = vld [vmem:[%s1 + $0x950] sm:$0xff]
    %v341 = vld [vmem:[%s1 + $0x958] sm:$0xff]
    %v342 = vld [vmem:[%s1 + $0x960] sm:$0xff]
    %v343 = vld [vmem:[%s1 + $0x968] sm:$0xff]
    %v344 = vld [vmem:[%s1 + $0x970] sm:$0xff]
    %v345 = vld [vmem:[%s1 + $0x978] sm:$0xff]
    %v346 = vld [vmem:[%s1 + $0x980] sm:$0xff]
    %v347 = vld [vmem:[%s1 + $0x988] sm:$0xff]
    %v348 = vld [vmem:[%s1 + $0x990] sm:$0xff]
    %v349 = vld [vmem:[%s1 + $0x998] sm:$0xff]
    %v350 = vld [vmem:[%s1 + $0x9a0] sm:$0xff]
    %v351 = vld [vmem:[%s1 + $0x9a8] sm:$0xff]
    %v352 = vld [vmem:[%s1 + $0x9b0] sm:$0xff]
    %v353 = vld [vmem:[%s1 + $0x9b8] sm:$0xff]
    %v354 = vld [vmem:[%s1 + $0x9c0] sm:$0xff]
    %v355 = vld [vmem:[%s1 + $0x9c8] sm:$0xff]
    %v356 = vld [vmem:[%s1 + $0x9d0] sm:$0xff]
    %v357 = vld [vmem:[%s1 + $0x9d8] sm:$0xff]
    %v358 = vld [vmem:[%s1 + $0x9e0] sm:$0xff]
    %v359 = vld [vmem:[%s1 + $0x9e8] sm:$0xff]
    %v360 = vld [vmem:[%s1 + $0x9f0] sm:$0xff]
    %v361 = vld [vmem:[%s1 + $0x9f8] sm:$0xff]
    %v362 = vld [vmem:[%s1 + $0xa00] sm:$0xff]
    %v363 = vld [vmem:[%s1 + $0xa08] sm:$0xff]
    %v364 = vld [vmem:[%s1 + $0xa10] sm:$0xff]
    %v365 = vld [vmem:[%s1 + $0xa18] sm:$0xff]
    %v366 = vld [vmem:[%s1 + $0xa20] sm:$0xff]
    %v367 = vld [vmem:[%s1 + $0xa28] sm:$0xff]
    %v368 = vld [vmem:[%s1 + $0xa30] sm:$0xff]
    %v369 = vld [vmem:[%s1 + $0xa38] sm:$0xff]
    %v370 = vld [vmem:[%s1 + $0xa40] sm:$0xff]
    %v371 = vld [vmem:[%s1 + $0xa48] sm:$0xff]
    %v372 = vld [vmem:[%s1 + $0xa50] sm:$0xff]
    %v373 = vld [vmem:[%s1 + $0xa58] sm:$0xff]
    %v374 = vld [vmem:[%s1 + $0xa60] sm:$0xff]
    %v375 = vld [vmem:[%s1 + $0xa68] sm:$0xff]
    %v376 = vld [vmem:[%s1 + $0xa70] sm:$0xff]
    %v377 = vld [vmem:[%s1 + $0xa78] sm:$0xff]
    %v378 = vld [vmem:[%s1 + $0xa80] sm:$0xff]
    %v379 = vld [vmem:[%s1 + $0xa88] sm:$0xff]
    %v380 = vld [vmem:[%s1 + $0xa90] sm:$0xff]
    %v381 = vld [vmem:[%s1 + $0xa98] sm:$0xff]
    %v382 = vld [vmem:[%s1 + $0xaa0] sm:$0xff]
    %v383 = vld [vmem:[%s1 + $0xaa8] sm:$0xff]
    %v384 = vld [vmem:[%s1 + $0xab0] sm:$0xff]
    %v385 = vld [vmem:[%s1 + $0xab8] sm:$0xff]
    %v386 = vld [vmem:[%s1 + $0xac0] sm:$0xff]
    %v387 = vld [vmem:[%s1 + $0xac8] sm:$0xff]
    %v388 = vld [vmem:[%s1 + $0xad0] sm:$0xff]
    %v389 = vld [vmem:[%s1 + $0xad8] sm:$0xff]
    %v390 = vld [vmem:[%s1 + $0xae0] sm:$0xff]
    %v391 = vld [vmem:[%s1 + $0xae8] sm:$0xff]
    %v392 = vld [vmem:[%s1 + $0xaf0] sm:$0xff]
    %v393 = vld [vmem:[%s1 + $0xaf8] sm:$0xff]
    %v394 = vld [vmem:[%s1 + $0xb00] sm:$0xff]
    %v395 = vld [vmem:[%s1 + $0xb08] sm:$0xff]
    %v396 = vld [vmem:[%s1 + $0xb10] sm:$0xff]
    %v397 = vld [vmem:[%s1 + $0xb18] sm:$0xff]
    %v398 = vld [vmem:[%s1 + $0xb20] sm:$0xff]
    %v399 = vld [vmem:[%s1 + $0xb28] sm:$0xff]
    %v400 = vld [vmem:[%s1 + $0xb30] sm:$0xff]
    %v401 = vld [vmem:[%s1 + $0xb38] sm:$0xff]
    %v402 = vld [vmem:[%s1 + $0xb40] sm:$0xff]
    %v403 = vld [vmem:[%s1 + $0xb48] sm:$0xff]
    %v404 = vld [vmem:[%s1 + $0xb50] sm:$0xff]
    %v405 = vld [vmem:[%s1 + $0xb58] sm:$0xff]
    %v406 = vld [vmem:[%s1 + $0xb60] sm:$0xff]
    %v407 = vld [vmem:[%s1 + $0xb68] sm:$0xff]
    %v408 = vld [vmem:[%s1 + $0xb70] sm:$0xff]
    %v409 = vld [vmem:[%s1 + $0xb78] sm:$0xff]
    %v410 = vld [vmem:[%s1 + $0xb80] sm:$0xff]
    %v411 = vld [vmem:[%s1 + $0xb88] sm:$0xff]
    %v412 = vld [vmem:[%s1 + $0xb90] sm:$0xff]
    %v413 = vld [vmem:[%s1 + $0xb98] sm:$0xff]
    %v414 = vld [vmem:[%s1 + $0xba0] sm:$0xff]
    %v415 = vld [vmem:[%s1 + $0xba8] sm:$0xff]
    %v416 = vld [vmem:[%s1 + $0xbb0] sm:$0xff]
    %v417 = vld [vmem:[%s1 + $0xbb8] sm:$0xff]
    %v418 = vld [vmem:[%s1 + $0xbc0] sm:$0xff]
    %v419 = vld [vmem:[%s1 + $0xbc8] sm:$0xff]
    %v420 = vld [vmem:[%s1 + $0xbd0] sm:$0xff]
    %v421 = vld [vmem:[%s1 + $0xbd8] sm:$0xff]
    %v422 = vld [vmem:[%s1 + $0xbe0] sm:$0xff]
    %v423 = vld [vmem:[%s1 + $0xbe8] sm:$0xff]
    %v424 = vld [vmem:[%s1 + $0xbf0] sm:$0xff]
    %v425 = vld [vmem:[%s1 + $0xbf8] sm:$0xff]
    %v426 = vld [vmem:[%s1 + $0xc00] sm:$0xff]
    %v427 = vld [vmem:[%s1 + $0xc08] sm:$0xff]
    %v428 = vld [vmem:[%s1 + $0xc10] sm:$0xff]
    %v429 = vld [vmem:[%s1 + $0xc18] sm:$0xff]
    %v430 = vld [vmem:[%s1 + $0xc20] sm:$0xff]
    %v431 = vld [vmem:[%s1 + $0xc28] sm:$0xff]
    %v432 = vld [vmem:[%s1 + $0xc30] sm:$0xff]
    %v433 = vld [vmem:[%s1 + $0xc38] sm:$0xff]
    %v434 = vld [vmem:[%s2] sm:$0xff]
    %v436 = vlaneseq
    %v437 = vshrl.u32 %v436, 7
    %v438 = vsub.s32 0, %v437
    %v439 = vrot.slane %v434, %v438
    %v440 = vlaneseq
    %v441 = vshrl.u32 %v440, 7
    %v442 = vsub.s32 1, %v441
    %v443 = vrot.slane %v434, %v442
    %v444 = vlaneseq
    %v445 = vshrl.u32 %v444, 7
    %v446 = vsub.s32 2, %v445
    %v447 = vrot.slane %v434, %v446
    %v448 = vlaneseq
    %v449 = vshrl.u32 %v448, 7
    %v450 = vsub.s32 3, %v449
    %v451 = vrot.slane %v434, %v450
    %v452 = vlaneseq
    %v453 = vshrl.u32 %v452, 7
    %v454 = vsub.s32 4, %v453
    %v455 = vrot.slane %v434, %v454
    %v456 = vlaneseq
    %v457 = vshrl.u32 %v456, 7
    %v458 = vsub.s32 5, %v457
    %v459 = vrot.slane %v434, %v458
    %v460 = vlaneseq
    %v461 = vshrl.u32 %v460, 7
    %v462 = vsub.s32 6, %v461
    %v463 = vrot.slane %v434, %v462
    %v464 = vlaneseq
    %v465 = vshrl.u32 %v464, 7
    %v466 = vsub.s32 7, %v465
    %v467 = vrot.slane %v434, %v466
    %v868 = vunpack.c.l.b16 %v42
    %v869 = vunpack.c.h.b16 %v42
    %v870 = vunpack.c.l.b16 %v43
    %v871 = vunpack.c.h.b16 %v43
    %v872 = vunpack.c.l.b16 %v44
    %v873 = vunpack.c.h.b16 %v44
    %v874 = vunpack.c.l.b16 %v45
    %v875 = vunpack.c.h.b16 %v45
    %v876 = vunpack.c.l.b16 %v46
    %v877 = vunpack.c.h.b16 %v46
    %v878 = vunpack.c.l.b16 %v47
    %v879 = vunpack.c.h.b16 %v47
    %v880 = vunpack.c.l.b16 %v48
    %v881 = vunpack.c.h.b16 %v48
    %v882 = vunpack.c.l.b16 %v49
    %v883 = vunpack.c.h.b16 %v49
    %v884 = vunpack.c.l.b16 %v50
    %v885 = vunpack.c.h.b16 %v50
    %v886 = vunpack.c.l.b16 %v51
    %v887 = vunpack.c.h.b16 %v51
    %v888 = vunpack.c.l.b16 %v52
    %v889 = vunpack.c.h.b16 %v52
    %v890 = vunpack.c.l.b16 %v53
    %v891 = vunpack.c.h.b16 %v53
    %v892 = vunpack.c.l.b16 %v54
    %v893 = vunpack.c.h.b16 %v54
    %v894 = vunpack.c.l.b16 %v55
    %v895 = vunpack.c.h.b16 %v55
    %v896 = vunpack.c.l.b16 %v56
    %v897 = vunpack.c.h.b16 %v56
    %v898 = vunpack.c.l.b16 %v57
    %v899 = vunpack.c.h.b16 %v57
    %v900 = vunpack.c.l.b16 %v58
    %v901 = vunpack.c.h.b16 %v58
    %v902 = vunpack.c.l.b16 %v59
    %v903 = vunpack.c.h.b16 %v59
    %v904 = vunpack.c.l.b16 %v60
    %v905 = vunpack.c.h.b16 %v60
    %v906 = vunpack.c.l.b16 %v61
    %v907 = vunpack.c.h.b16 %v61
    %v908 = vunpack.c.l.b16 %v62
    %v909 = vunpack.c.h.b16 %v62
    %v910 = vunpack.c.l.b16 %v63
    %v911 = vunpack.c.h.b16 %v63
    %v912 = vunpack.c.l.b16 %v64
    %v913 = vunpack.c.h.b16 %v64
    %v914 = vunpack.c.l.b16 %v65
    %v915 = vunpack.c.h.b16 %v65
    %v916 = vunpack.c.l.b16 %v66
    %v917 = vunpack.c.h.b16 %v66
    %v918 = vunpack.c.l.b16 %v67
    %v919 = vunpack.c.h.b16 %v67
    %v920 = vunpack.c.l.b16 %v68
    %v921 = vunpack.c.h.b16 %v68
    %v922 = vunpack.c.l.b16 %v69
    %v923 = vunpack.c.h.b16 %v69
    %v924 = vunpack.c.l.b16 %v70
    %v925 = vunpack.c.h.b16 %v70
    %v926 = vunpack.c.l.b16 %v71
    %v927 = vunpack.c.h.b16 %v71
    %v928 = vunpack.c.l.b16 %v72
    %v929 = vunpack.c.h.b16 %v72
    %v930 = vunpack.c.l.b16 %v73
    %v931 = vunpack.c.h.b16 %v73
    %v932 = vunpack.c.l.b16 %v74
    %v933 = vunpack.c.h.b16 %v74
    %v934 = vunpack.c.l.b16 %v75
    %v935 = vunpack.c.h.b16 %v75
    %v936 = vunpack.c.l.b16 %v76
    %v937 = vunpack.c.h.b16 %v76
    %v938 = vunpack.c.l.b16 %v77
    %v939 = vunpack.c.h.b16 %v77
    %v940 = vunpack.c.l.b16 %v78
    %v941 = vunpack.c.h.b16 %v78
    %v942 = vunpack.c.l.b16 %v79
    %v943 = vunpack.c.h.b16 %v79
    %v944 = vunpack.c.l.b16 %v80
    %v945 = vunpack.c.h.b16 %v80
    %v946 = vunpack.c.l.b16 %v81
    %v947 = vunpack.c.h.b16 %v81
    %v948 = vunpack.c.l.b16 %v82
    %v949 = vunpack.c.h.b16 %v82
    %v950 = vunpack.c.l.b16 %v83
    %v951 = vunpack.c.h.b16 %v83
    %v952 = vunpack.c.l.b16 %v84
    %v953 = vunpack.c.h.b16 %v84
    %v954 = vunpack.c.l.b16 %v85
    %v955 = vunpack.c.h.b16 %v85
    %v956 = vunpack.c.l.b16 %v86
    %v957 = vunpack.c.h.b16 %v86
    %v958 = vunpack.c.l.b16 %v87
    %v959 = vunpack.c.h.b16 %v87
    %v960 = vunpack.c.l.b16 %v88
    %v961 = vunpack.c.h.b16 %v88
    %v962 = vunpack.c.l.b16 %v89
    %v963 = vunpack.c.h.b16 %v89
    %v964 = vunpack.c.l.b16 %v90
    %v965 = vunpack.c.h.b16 %v90
    %v966 = vunpack.c.l.b16 %v91
    %v967 = vunpack.c.h.b16 %v91
    %v968 = vunpack.c.l.b16 %v92
    %v969 = vunpack.c.h.b16 %v92
    %v970 = vunpack.c.l.b16 %v93
    %v971 = vunpack.c.h.b16 %v93
    %v972 = vunpack.c.l.b16 %v94
    %v973 = vunpack.c.h.b16 %v94
    %v974 = vunpack.c.l.b16 %v95
    %v975 = vunpack.c.h.b16 %v95
    %v976 = vunpack.c.l.b16 %v96
    %v977 = vunpack.c.h.b16 %v96
    %v978 = vunpack.c.l.b16 %v97
    %v979 = vunpack.c.h.b16 %v97
    %v980 = vunpack.c.l.b16 %v98
    %v981 = vunpack.c.h.b16 %v98
    %v982 = vunpack.c.l.b16 %v99
    %v983 = vunpack.c.h.b16 %v99
    %v984 = vunpack.c.l.b16 %v100
    %v985 = vunpack.c.h.b16 %v100
    %v986 = vunpack.c.l.b16 %v101
    %v987 = vunpack.c.h.b16 %v101
    %v988 = vunpack.c.l.b16 %v102
    %v989 = vunpack.c.h.b16 %v102
    %v990 = vunpack.c.l.b16 %v103
    %v991 = vunpack.c.h.b16 %v103
    %v992 = vunpack.c.l.b16 %v104
    %v993 = vunpack.c.h.b16 %v104
    %v994 = vunpack.c.l.b16 %v105
    %v995 = vunpack.c.h.b16 %v105
    %v996 = vunpack.c.l.b16 %v106
    %v997 = vunpack.c.h.b16 %v106
    %v998 = vunpack.c.l.b16 %v107
    %v999 = vunpack.c.h.b16 %v107
    %v1000 = vunpack.c.l.b16 %v108
    %v1001 = vunpack.c.h.b16 %v108
    %v1002 = vunpack.c.l.b16 %v109
    %v1003 = vunpack.c.h.b16 %v109
    %v1004 = vunpack.c.l.b16 %v110
    %v1005 = vunpack.c.h.b16 %v110
    %v1006 = vunpack.c.l.b16 %v111
    %v1007 = vunpack.c.h.b16 %v111
    %v1008 = vunpack.c.l.b16 %v112
    %v1009 = vunpack.c.h.b16 %v112
    %v1010 = vunpack.c.l.b16 %v113
    %v1011 = vunpack.c.h.b16 %v113
    %v1012 = vunpack.c.l.b16 %v114
    %v1013 = vunpack.c.h.b16 %v114
    %v1014 = vunpack.c.l.b16 %v115
    %v1015 = vunpack.c.h.b16 %v115
    %v1016 = vunpack.c.l.b16 %v116
    %v1017 = vunpack.c.h.b16 %v116
    %v1018 = vunpack.c.l.b16 %v117
    %v1019 = vunpack.c.h.b16 %v117
    %v1020 = vunpack.c.l.b16 %v118
    %v1021 = vunpack.c.h.b16 %v118
    %v1022 = vunpack.c.l.b16 %v119
    %v1023 = vunpack.c.h.b16 %v119
    %v1024 = vunpack.c.l.b16 %v120
    %v1025 = vunpack.c.h.b16 %v120
    %v1026 = vunpack.c.l.b16 %v121
    %v1027 = vunpack.c.h.b16 %v121
    %v1028 = vunpack.c.l.b16 %v122
    %v1029 = vunpack.c.h.b16 %v122
    %v1030 = vunpack.c.l.b16 %v123
    %v1031 = vunpack.c.h.b16 %v123
    %v1032 = vunpack.c.l.b16 %v124
    %v1033 = vunpack.c.h.b16 %v124
    %v1034 = vunpack.c.l.b16 %v125
    %v1035 = vunpack.c.h.b16 %v125
    %v1036 = vunpack.c.l.b16 %v126
    %v1037 = vunpack.c.h.b16 %v126
    %v1038 = vunpack.c.l.b16 %v127
    %v1039 = vunpack.c.h.b16 %v127
    %v1040 = vunpack.c.l.b16 %v128
    %v1041 = vunpack.c.h.b16 %v128
    %v1042 = vunpack.c.l.b16 %v129
    %v1043 = vunpack.c.h.b16 %v129
    %v1044 = vunpack.c.l.b16 %v130
    %v1045 = vunpack.c.h.b16 %v130
    %v1046 = vunpack.c.l.b16 %v131
    %v1047 = vunpack.c.h.b16 %v131
    %v1048 = vunpack.c.l.b16 %v132
    %v1049 = vunpack.c.h.b16 %v132
    %v1050 = vunpack.c.l.b16 %v133
    %v1051 = vunpack.c.h.b16 %v133
    %v1052 = vunpack.c.l.b16 %v134
    %v1053 = vunpack.c.h.b16 %v134
    %v1054 = vunpack.c.l.b16 %v135
    %v1055 = vunpack.c.h.b16 %v135
    %v1056 = vunpack.c.l.b16 %v136
    %v1057 = vunpack.c.h.b16 %v136
    %v1058 = vunpack.c.l.b16 %v137
    %v1059 = vunpack.c.h.b16 %v137
    %v1060 = vunpack.c.l.b16 %v138
    %v1061 = vunpack.c.h.b16 %v138
    %v1062 = vunpack.c.l.b16 %v139
    %v1063 = vunpack.c.h.b16 %v139
    %v1064 = vunpack.c.l.b16 %v140
    %v1065 = vunpack.c.h.b16 %v140
    %v1066 = vunpack.c.l.b16 %v141
    %v1067 = vunpack.c.h.b16 %v141
    %v1068 = vunpack.c.l.b16 %v142
    %v1069 = vunpack.c.h.b16 %v142
    %v1070 = vunpack.c.l.b16 %v143
    %v1071 = vunpack.c.h.b16 %v143
    %v1072 = vunpack.c.l.b16 %v144
    %v1073 = vunpack.c.h.b16 %v144
    %v1074 = vunpack.c.l.b16 %v145
    %v1075 = vunpack.c.h.b16 %v145
    %v1076 = vunpack.c.l.b16 %v146
    %v1077 = vunpack.c.h.b16 %v146
    %v1078 = vunpack.c.l.b16 %v147
    %v1079 = vunpack.c.h.b16 %v147
    %v1080 = vunpack.c.l.b16 %v148
    %v1081 = vunpack.c.h.b16 %v148
    %v1082 = vunpack.c.l.b16 %v149
    %v1083 = vunpack.c.h.b16 %v149
    %v1084 = vunpack.c.l.b16 %v150
    %v1085 = vunpack.c.h.b16 %v150
    %v1086 = vunpack.c.l.b16 %v151
    %v1087 = vunpack.c.h.b16 %v151
    %v1088 = vunpack.c.l.b16 %v152
    %v1089 = vunpack.c.h.b16 %v152
    %v1090 = vunpack.c.l.b16 %v153
    %v1091 = vunpack.c.h.b16 %v153
    %v1092 = vunpack.c.l.b16 %v154
    %v1093 = vunpack.c.h.b16 %v154
    %v1094 = vunpack.c.l.b16 %v155
    %v1095 = vunpack.c.h.b16 %v155
    %v1096 = vunpack.c.l.b16 %v156
    %v1097 = vunpack.c.h.b16 %v156
    %v1098 = vunpack.c.l.b16 %v157
    %v1099 = vunpack.c.h.b16 %v157
    %v1100 = vunpack.c.l.b16 %v158
    %v1101 = vunpack.c.h.b16 %v158
    %v1102 = vunpack.c.l.b16 %v159
    %v1103 = vunpack.c.h.b16 %v159
    %v1104 = vunpack.c.l.b16 %v160
    %v1105 = vunpack.c.h.b16 %v160
    %v1106 = vunpack.c.l.b16 %v161
    %v1107 = vunpack.c.h.b16 %v161
    %v1108 = vunpack.c.l.b16 %v162
    %v1109 = vunpack.c.h.b16 %v162
    %v1110 = vunpack.c.l.b16 %v163
    %v1111 = vunpack.c.h.b16 %v163
    %v1112 = vunpack.c.l.b16 %v164
    %v1113 = vunpack.c.h.b16 %v164
    %v1114 = vunpack.c.l.b16 %v165
    %v1115 = vunpack.c.h.b16 %v165
    %v1116 = vunpack.c.l.b16 %v166
    %v1117 = vunpack.c.h.b16 %v166
    %v1118 = vunpack.c.l.b16 %v167
    %v1119 = vunpack.c.h.b16 %v167
    %v1120 = vunpack.c.l.b16 %v168
    %v1121 = vunpack.c.h.b16 %v168
    %v1122 = vunpack.c.l.b16 %v169
    %v1123 = vunpack.c.h.b16 %v169
    %v1124 = vunpack.c.l.b16 %v170
    %v1125 = vunpack.c.h.b16 %v170
    %v1126 = vunpack.c.l.b16 %v171
    %v1127 = vunpack.c.h.b16 %v171
    %v1128 = vunpack.c.l.b16 %v172
    %v1129 = vunpack.c.h.b16 %v172
    %v1130 = vunpack.c.l.b16 %v173
    %v1131 = vunpack.c.h.b16 %v173
    %v1132 = vunpack.c.l.b16 %v174
    %v1133 = vunpack.c.h.b16 %v174
    %v1134 = vunpack.c.l.b16 %v175
    %v1135 = vunpack.c.h.b16 %v175
    %v1136 = vunpack.c.l.b16 %v176
    %v1137 = vunpack.c.h.b16 %v176
    %v1138 = vunpack.c.l.b16 %v177
    %v1139 = vunpack.c.h.b16 %v177
    %v1140 = vunpack.c.l.b16 %v178
    %v1141 = vunpack.c.h.b16 %v178
    %v1142 = vunpack.c.l.b16 %v179
    %v1143 = vunpack.c.h.b16 %v179
    %v1144 = vunpack.c.l.b16 %v180
    %v1145 = vunpack.c.h.b16 %v180
    %v1146 = vunpack.c.l.b16 %v181
    %v1147 = vunpack.c.h.b16 %v181
    %v1148 = vunpack.c.l.b16 %v182
    %v1149 = vunpack.c.h.b16 %v182
    %v1150 = vunpack.c.l.b16 %v183
    %v1151 = vunpack.c.h.b16 %v183
    %v1152 = vunpack.c.l.b16 %v184
    %v1153 = vunpack.c.h.b16 %v184
    %v1154 = vunpack.c.l.b16 %v185
    %v1155 = vunpack.c.h.b16 %v185
    %v1156 = vunpack.c.l.b16 %v186
    %v1157 = vunpack.c.h.b16 %v186
    %v1158 = vunpack.c.l.b16 %v187
    %v1159 = vunpack.c.h.b16 %v187
    %v1160 = vunpack.c.l.b16 %v188
    %v1161 = vunpack.c.h.b16 %v188
    %v1162 = vunpack.c.l.b16 %v189
    %v1163 = vunpack.c.h.b16 %v189
    %v1164 = vunpack.c.l.b16 %v190
    %v1165 = vunpack.c.h.b16 %v190
    %v1166 = vunpack.c.l.b16 %v191
    %v1167 = vunpack.c.h.b16 %v191
    %v1168 = vunpack.c.l.b16 %v192
    %v1169 = vunpack.c.h.b16 %v192
    %v1170 = vunpack.c.l.b16 %v193
    %v1171 = vunpack.c.h.b16 %v193
    %v1172 = vunpack.c.l.b16 %v194
    %v1173 = vunpack.c.h.b16 %v194
    %v1174 = vunpack.c.l.b16 %v195
    %v1175 = vunpack.c.h.b16 %v195
    %v1176 = vunpack.c.l.b16 %v196
    %v1177 = vunpack.c.h.b16 %v196
    %v1178 = vunpack.c.l.b16 %v197
    %v1179 = vunpack.c.h.b16 %v197
    %v1180 = vunpack.c.l.b16 %v198
    %v1181 = vunpack.c.h.b16 %v198
    %v1182 = vunpack.c.l.b16 %v199
    %v1183 = vunpack.c.h.b16 %v199
    %v1184 = vunpack.c.l.b16 %v200
    %v1185 = vunpack.c.h.b16 %v200
    %v1186 = vunpack.c.l.b16 %v201
    %v1187 = vunpack.c.h.b16 %v201
    %v1188 = vunpack.c.l.b16 %v202
    %v1189 = vunpack.c.h.b16 %v202
    %v1190 = vunpack.c.l.b16 %v203
    %v1191 = vunpack.c.h.b16 %v203
    %v1192 = vunpack.c.l.b16 %v204
    %v1193 = vunpack.c.h.b16 %v204
    %v1194 = vunpack.c.l.b16 %v205
    %v1195 = vunpack.c.h.b16 %v205
    %v1196 = vunpack.c.l.b16 %v206
    %v1197 = vunpack.c.h.b16 %v206
    %v1198 = vunpack.c.l.b16 %v207
    %v1199 = vunpack.c.h.b16 %v207
    %v1200 = vunpack.c.l.b16 %v208
    %v1201 = vunpack.c.h.b16 %v208
    %v1202 = vunpack.c.l.b16 %v209
    %v1203 = vunpack.c.h.b16 %v209
    %v1204 = vunpack.c.l.b16 %v210
    %v1205 = vunpack.c.h.b16 %v210
    %v1206 = vunpack.c.l.b16 %v211
    %v1207 = vunpack.c.h.b16 %v211
    %v1208 = vunpack.c.l.b16 %v212
    %v1209 = vunpack.c.h.b16 %v212
    %v1210 = vunpack.c.l.b16 %v213
    %v1211 = vunpack.c.h.b16 %v213
    %v1212 = vunpack.c.l.b16 %v214
    %v1213 = vunpack.c.h.b16 %v214
    %v1214 = vunpack.c.l.b16 %v215
    %v1215 = vunpack.c.h.b16 %v215
    %v1216 = vunpack.c.l.b16 %v216
    %v1217 = vunpack.c.h.b16 %v216
    %v1218 = vunpack.c.l.b16 %v217
    %v1219 = vunpack.c.h.b16 %v217
    %v1220 = vunpack.c.l.b16 %v218
    %v1221 = vunpack.c.h.b16 %v218
    %v1222 = vunpack.c.l.b16 %v219
    %v1223 = vunpack.c.h.b16 %v219
    %v1224 = vunpack.c.l.b16 %v220
    %v1225 = vunpack.c.h.b16 %v220
    %v1226 = vunpack.c.l.b16 %v221
    %v1227 = vunpack.c.h.b16 %v221
    %v1228 = vunpack.c.l.b16 %v222
    %v1229 = vunpack.c.h.b16 %v222
    %v1230 = vunpack.c.l.b16 %v223
    %v1231 = vunpack.c.h.b16 %v223
    %v1232 = vunpack.c.l.b16 %v224
    %v1233 = vunpack.c.h.b16 %v224
    %v1234 = vunpack.c.l.b16 %v225
    %v1235 = vunpack.c.h.b16 %v225
    %v1236 = vunpack.c.l.b16 %v226
    %v1237 = vunpack.c.h.b16 %v226
    %v1238 = vunpack.c.l.b16 %v227
    %v1239 = vunpack.c.h.b16 %v227
    %v1240 = vunpack.c.l.b16 %v228
    %v1241 = vunpack.c.h.b16 %v228
    %v1242 = vunpack.c.l.b16 %v229
    %v1243 = vunpack.c.h.b16 %v229
    %v1244 = vunpack.c.l.b16 %v230
    %v1245 = vunpack.c.h.b16 %v230
    %v1246 = vunpack.c.l.b16 %v231
    %v1247 = vunpack.c.h.b16 %v231
    %v1248 = vunpack.c.l.b16 %v232
    %v1249 = vunpack.c.h.b16 %v232
    %v1250 = vunpack.c.l.b16 %v233
    %v1251 = vunpack.c.h.b16 %v233
    %v1252 = vunpack.c.l.b16 %v234
    %v1253 = vunpack.c.h.b16 %v234
    %v1254 = vunpack.c.l.b16 %v235
    %v1255 = vunpack.c.h.b16 %v235
    %v1256 = vunpack.c.l.b16 %v236
    %v1257 = vunpack.c.h.b16 %v236
    %v1258 = vunpack.c.l.b16 %v237
    %v1259 = vunpack.c.h.b16 %v237
    %v1260 = vunpack.c.l.b16 %v238
    %v1261 = vunpack.c.h.b16 %v238
    %v1262 = vunpack.c.l.b16 %v239
    %v1263 = vunpack.c.h.b16 %v239
    %v1264 = vunpack.c.l.b16 %v240
    %v1265 = vunpack.c.h.b16 %v240
    %v1266 = vunpack.c.l.b16 %v241
    %v1267 = vunpack.c.h.b16 %v241
    %v1268 = vunpack.c.l.b16 %v242
    %v1269 = vunpack.c.h.b16 %v242
    %v1270 = vunpack.c.l.b16 %v243
    %v1271 = vunpack.c.h.b16 %v243
    %v1272 = vunpack.c.l.b16 %v244
    %v1273 = vunpack.c.h.b16 %v244
    %v1274 = vunpack.c.l.b16 %v245
    %v1275 = vunpack.c.h.b16 %v245
    %v1276 = vunpack.c.l.b16 %v246
    %v1277 = vunpack.c.h.b16 %v246
    %v1278 = vunpack.c.l.b16 %v247
    %v1279 = vunpack.c.h.b16 %v247
    %v1280 = vunpack.c.l.b16 %v248
    %v1281 = vunpack.c.h.b16 %v248
    %v1282 = vunpack.c.l.b16 %v249
    %v1283 = vunpack.c.h.b16 %v249
    %v1284 = vunpack.c.l.b16 %v250
    %v1285 = vunpack.c.h.b16 %v250
    %v1286 = vunpack.c.l.b16 %v251
    %v1287 = vunpack.c.h.b16 %v251
    %v1288 = vunpack.c.l.b16 %v252
    %v1289 = vunpack.c.h.b16 %v252
    %v1290 = vunpack.c.l.b16 %v253
    %v1291 = vunpack.c.h.b16 %v253
    %v1292 = vunpack.c.l.b16 %v254
    %v1293 = vunpack.c.h.b16 %v254
    %v1294 = vunpack.c.l.b16 %v255
    %v1295 = vunpack.c.h.b16 %v255
    %v1296 = vunpack.c.l.b16 %v256
    %v1297 = vunpack.c.h.b16 %v256
    %v1298 = vunpack.c.l.b16 %v257
    %v1299 = vunpack.c.h.b16 %v257
    %v1300 = vunpack.c.l.b16 %v258
    %v1301 = vunpack.c.h.b16 %v258
    %v1302 = vunpack.c.l.b16 %v259
    %v1303 = vunpack.c.h.b16 %v259
    %v1304 = vunpack.c.l.b16 %v260
    %v1305 = vunpack.c.h.b16 %v260
    %v1306 = vunpack.c.l.b16 %v261
    %v1307 = vunpack.c.h.b16 %v261
    %v1308 = vunpack.c.l.b16 %v262
    %v1309 = vunpack.c.h.b16 %v262
    %v1310 = vunpack.c.l.b16 %v263
    %v1311 = vunpack.c.h.b16 %v263
    %v1312 = vunpack.c.l.b16 %v264
    %v1313 = vunpack.c.h.b16 %v264
    %v1314 = vunpack.c.l.b16 %v265
    %v1315 = vunpack.c.h.b16 %v265
    %v1316 = vunpack.c.l.b16 %v266
    %v1317 = vunpack.c.h.b16 %v266
    %v1318 = vunpack.c.l.b16 %v267
    %v1319 = vunpack.c.h.b16 %v267
    %v1320 = vunpack.c.l.b16 %v268
    %v1321 = vunpack.c.h.b16 %v268
    %v1322 = vunpack.c.l.b16 %v269
    %v1323 = vunpack.c.h.b16 %v269
    %v1324 = vunpack.c.l.b16 %v270
    %v1325 = vunpack.c.h.b16 %v270
    %v1326 = vunpack.c.l.b16 %v271
    %v1327 = vunpack.c.h.b16 %v271
    %v1328 = vunpack.c.l.b16 %v272
    %v1329 = vunpack.c.h.b16 %v272
    %v1330 = vunpack.c.l.b16 %v273
    %v1331 = vunpack.c.h.b16 %v273
    %v1332 = vunpack.c.l.b16 %v274
    %v1333 = vunpack.c.h.b16 %v274
    %v1334 = vunpack.c.l.b16 %v275
    %v1335 = vunpack.c.h.b16 %v275
    %v1336 = vunpack.c.l.b16 %v276
    %v1337 = vunpack.c.h.b16 %v276
    %v1338 = vunpack.c.l.b16 %v277
    %v1339 = vunpack.c.h.b16 %v277
    %v1340 = vunpack.c.l.b16 %v278
    %v1341 = vunpack.c.h.b16 %v278
    %v1342 = vunpack.c.l.b16 %v279
    %v1343 = vunpack.c.h.b16 %v279
    %v1344 = vunpack.c.l.b16 %v280
    %v1345 = vunpack.c.h.b16 %v280
    %v1346 = vunpack.c.l.b16 %v281
    %v1347 = vunpack.c.h.b16 %v281
    %v1348 = vunpack.c.l.b16 %v282
    %v1349 = vunpack.c.h.b16 %v282
    %v1350 = vunpack.c.l.b16 %v283
    %v1351 = vunpack.c.h.b16 %v283
    %v1352 = vunpack.c.l.b16 %v284
    %v1353 = vunpack.c.h.b16 %v284
    %v1354 = vunpack.c.l.b16 %v285
    %v1355 = vunpack.c.h.b16 %v285
    %v1356 = vunpack.c.l.b16 %v286
    %v1357 = vunpack.c.h.b16 %v286
    %v1358 = vunpack.c.l.b16 %v287
    %v1359 = vunpack.c.h.b16 %v287
    %v1360 = vunpack.c.l.b16 %v288
    %v1361 = vunpack.c.h.b16 %v288
    %v1362 = vunpack.c.l.b16 %v289
    %v1363 = vunpack.c.h.b16 %v289
    %v1364 = vunpack.c.l.b16 %v290
    %v1365 = vunpack.c.h.b16 %v290
    %v1366 = vunpack.c.l.b16 %v291
    %v1367 = vunpack.c.h.b16 %v291
    %v1368 = vunpack.c.l.b16 %v292
    %v1369 = vunpack.c.h.b16 %v292
    %v1370 = vunpack.c.l.b16 %v293
    %v1371 = vunpack.c.h.b16 %v293
    %v1372 = vunpack.c.l.b16 %v294
    %v1373 = vunpack.c.h.b16 %v294
    %v1374 = vunpack.c.l.b16 %v295
    %v1375 = vunpack.c.h.b16 %v295
    %v1376 = vunpack.c.l.b16 %v296
    %v1377 = vunpack.c.h.b16 %v296
    %v1378 = vunpack.c.l.b16 %v297
    %v1379 = vunpack.c.h.b16 %v297
    %v1380 = vunpack.c.l.b16 %v298
    %v1381 = vunpack.c.h.b16 %v298
    %v1382 = vunpack.c.l.b16 %v299
    %v1383 = vunpack.c.h.b16 %v299
    %v1384 = vunpack.c.l.b16 %v300
    %v1385 = vunpack.c.h.b16 %v300
    %v1386 = vunpack.c.l.b16 %v301
    %v1387 = vunpack.c.h.b16 %v301
    %v1388 = vunpack.c.l.b16 %v302
    %v1389 = vunpack.c.h.b16 %v302
    %v1390 = vunpack.c.l.b16 %v303
    %v1391 = vunpack.c.h.b16 %v303
    %v1392 = vunpack.c.l.b16 %v304
    %v1393 = vunpack.c.h.b16 %v304
    %v1394 = vunpack.c.l.b16 %v305
    %v1395 = vunpack.c.h.b16 %v305
    %v1396 = vunpack.c.l.b16 %v306
    %v1397 = vunpack.c.h.b16 %v306
    %v1398 = vunpack.c.l.b16 %v307
    %v1399 = vunpack.c.h.b16 %v307
    %v1400 = vunpack.c.l.b16 %v308
    %v1401 = vunpack.c.h.b16 %v308
    %v1402 = vunpack.c.l.b16 %v309
    %v1403 = vunpack.c.h.b16 %v309
    %v1404 = vunpack.c.l.b16 %v310
    %v1405 = vunpack.c.h.b16 %v310
    %v1406 = vunpack.c.l.b16 %v311
    %v1407 = vunpack.c.h.b16 %v311
    %v1408 = vunpack.c.l.b16 %v312
    %v1409 = vunpack.c.h.b16 %v312
    %v1410 = vunpack.c.l.b16 %v313
    %v1411 = vunpack.c.h.b16 %v313
    %v1412 = vunpack.c.l.b16 %v314
    %v1413 = vunpack.c.h.b16 %v314
    %v1414 = vunpack.c.l.b16 %v315
    %v1415 = vunpack.c.h.b16 %v315
    %v1416 = vunpack.c.l.b16 %v316
    %v1417 = vunpack.c.h.b16 %v316
    %v1418 = vunpack.c.l.b16 %v317
    %v1419 = vunpack.c.h.b16 %v317
    %v1420 = vunpack.c.l.b16 %v318
    %v1421 = vunpack.c.h.b16 %v318
    %v1422 = vunpack.c.l.b16 %v319
    %v1423 = vunpack.c.h.b16 %v319
    %v1424 = vunpack.c.l.b16 %v320
    %v1425 = vunpack.c.h.b16 %v320
    %v1426 = vunpack.c.l.b16 %v321
    %v1427 = vunpack.c.h.b16 %v321
    %v1428 = vunpack.c.l.b16 %v322
    %v1429 = vunpack.c.h.b16 %v322
    %v1430 = vunpack.c.l.b16 %v323
    %v1431 = vunpack.c.h.b16 %v323
    %v1432 = vunpack.c.l.b16 %v324
    %v1433 = vunpack.c.h.b16 %v324
    %v1434 = vunpack.c.l.b16 %v325
    %v1435 = vunpack.c.h.b16 %v325
    %v1436 = vunpack.c.l.b16 %v326
    %v1437 = vunpack.c.h.b16 %v326
    %v1438 = vunpack.c.l.b16 %v327
    %v1439 = vunpack.c.h.b16 %v327
    %v1440 = vunpack.c.l.b16 %v328
    %v1441 = vunpack.c.h.b16 %v328
    %v1442 = vunpack.c.l.b16 %v329
    %v1443 = vunpack.c.h.b16 %v329
    %v1444 = vunpack.c.l.b16 %v330
    %v1445 = vunpack.c.h.b16 %v330
    %v1446 = vunpack.c.l.b16 %v331
    %v1447 = vunpack.c.h.b16 %v331
    %v1448 = vunpack.c.l.b16 %v332
    %v1449 = vunpack.c.h.b16 %v332
    %v1450 = vunpack.c.l.b16 %v333
    %v1451 = vunpack.c.h.b16 %v333
    %v1452 = vunpack.c.l.b16 %v334
    %v1453 = vunpack.c.h.b16 %v334
    %v1454 = vunpack.c.l.b16 %v335
    %v1455 = vunpack.c.h.b16 %v335
    %v1456 = vunpack.c.l.b16 %v336
    %v1457 = vunpack.c.h.b16 %v336
    %v1458 = vunpack.c.l.b16 %v337
    %v1459 = vunpack.c.h.b16 %v337
    %v1460 = vunpack.c.l.b16 %v338
    %v1461 = vunpack.c.h.b16 %v338
    %v1462 = vunpack.c.l.b16 %v339
    %v1463 = vunpack.c.h.b16 %v339
    %v1464 = vunpack.c.l.b16 %v340
    %v1465 = vunpack.c.h.b16 %v340
    %v1466 = vunpack.c.l.b16 %v341
    %v1467 = vunpack.c.h.b16 %v341
    %v1468 = vunpack.c.l.b16 %v342
    %v1469 = vunpack.c.h.b16 %v342
    %v1470 = vunpack.c.l.b16 %v343
    %v1471 = vunpack.c.h.b16 %v343
    %v1472 = vunpack.c.l.b16 %v344
    %v1473 = vunpack.c.h.b16 %v344
    %v1474 = vunpack.c.l.b16 %v345
    %v1475 = vunpack.c.h.b16 %v345
    %v1476 = vunpack.c.l.b16 %v346
    %v1477 = vunpack.c.h.b16 %v346
    %v1478 = vunpack.c.l.b16 %v347
    %v1479 = vunpack.c.h.b16 %v347
    %v1480 = vunpack.c.l.b16 %v348
    %v1481 = vunpack.c.h.b16 %v348
    %v1482 = vunpack.c.l.b16 %v349
    %v1483 = vunpack.c.h.b16 %v349
    %v1484 = vunpack.c.l.b16 %v350
    %v1485 = vunpack.c.h.b16 %v350
    %v1486 = vunpack.c.l.b16 %v351
    %v1487 = vunpack.c.h.b16 %v351
    %v1488 = vunpack.c.l.b16 %v352
    %v1489 = vunpack.c.h.b16 %v352
    %v1490 = vunpack.c.l.b16 %v353
    %v1491 = vunpack.c.h.b16 %v353
    %v1492 = vunpack.c.l.b16 %v354
    %v1493 = vunpack.c.h.b16 %v354
    %v1494 = vunpack.c.l.b16 %v355
    %v1495 = vunpack.c.h.b16 %v355
    %v1496 = vunpack.c.l.b16 %v356
    %v1497 = vunpack.c.h.b16 %v356
    %v1498 = vunpack.c.l.b16 %v357
    %v1499 = vunpack.c.h.b16 %v357
    %v1500 = vunpack.c.l.b16 %v358
    %v1501 = vunpack.c.h.b16 %v358
    %v1502 = vunpack.c.l.b16 %v359
    %v1503 = vunpack.c.h.b16 %v359
    %v1504 = vunpack.c.l.b16 %v360
    %v1505 = vunpack.c.h.b16 %v360
    %v1506 = vunpack.c.l.b16 %v361
    %v1507 = vunpack.c.h.b16 %v361
    %v1508 = vunpack.c.l.b16 %v362
    %v1509 = vunpack.c.h.b16 %v362
    %v1510 = vunpack.c.l.b16 %v363
    %v1511 = vunpack.c.h.b16 %v363
    %v1512 = vunpack.c.l.b16 %v364
    %v1513 = vunpack.c.h.b16 %v364
    %v1514 = vunpack.c.l.b16 %v365
    %v1515 = vunpack.c.h.b16 %v365
    %v1516 = vunpack.c.l.b16 %v366
    %v1517 = vunpack.c.h.b16 %v366
    %v1518 = vunpack.c.l.b16 %v367
    %v1519 = vunpack.c.h.b16 %v367
    %v1520 = vunpack.c.l.b16 %v368
    %v1521 = vunpack.c.h.b16 %v368
    %v1522 = vunpack.c.l.b16 %v369
    %v1523 = vunpack.c.h.b16 %v369
    %v1524 = vunpack.c.l.b16 %v370
    %v1525 = vunpack.c.h.b16 %v370
    %v1526 = vunpack.c.l.b16 %v371
    %v1527 = vunpack.c.h.b16 %v371
    %v1528 = vunpack.c.l.b16 %v372
    %v1529 = vunpack.c.h.b16 %v372
    %v1530 = vunpack.c.l.b16 %v373
    %v1531 = vunpack.c.h.b16 %v373
    %v1532 = vunpack.c.l.b16 %v374
    %v1533 = vunpack.c.h.b16 %v374
    %v1534 = vunpack.c.l.b16 %v375
    %v1535 = vunpack.c.h.b16 %v375
    %v1536 = vunpack.c.l.b16 %v376
    %v1537 = vunpack.c.h.b16 %v376
    %v1538 = vunpack.c.l.b16 %v377
    %v1539 = vunpack.c.h.b16 %v377
    %v1540 = vunpack.c.l.b16 %v378
    %v1541 = vunpack.c.h.b16 %v378
    %v1542 = vunpack.c.l.b16 %v379
    %v1543 = vunpack.c.h.b16 %v379
    %v1544 = vunpack.c.l.b16 %v380
    %v1545 = vunpack.c.h.b16 %v380
    %v1546 = vunpack.c.l.b16 %v381
    %v1547 = vunpack.c.h.b16 %v381
    %v1548 = vunpack.c.l.b16 %v382
    %v1549 = vunpack.c.h.b16 %v382
    %v1550 = vunpack.c.l.b16 %v383
    %v1551 = vunpack.c.h.b16 %v383
    %v1552 = vunpack.c.l.b16 %v384
    %v1553 = vunpack.c.h.b16 %v384
    %v1554 = vunpack.c.l.b16 %v385
    %v1555 = vunpack.c.h.b16 %v385
    %v1556 = vunpack.c.l.b16 %v386
    %v1557 = vunpack.c.h.b16 %v386
    %v1558 = vunpack.c.l.b16 %v387
    %v1559 = vunpack.c.h.b16 %v387
    %v1560 = vunpack.c.l.b16 %v388
    %v1561 = vunpack.c.h.b16 %v388
    %v1562 = vunpack.c.l.b16 %v389
    %v1563 = vunpack.c.h.b16 %v389
    %v1564 = vunpack.c.l.b16 %v390
    %v1565 = vunpack.c.h.b16 %v390
    %v1566 = vunpack.c.l.b16 %v391
    %v1567 = vunpack.c.h.b16 %v391
    %v1568 = vunpack.c.l.b16 %v392
    %v1569 = vunpack.c.h.b16 %v392
    %v1570 = vunpack.c.l.b16 %v393
    %v1571 = vunpack.c.h.b16 %v393
    %v1572 = vunpack.c.l.b16 %v394
    %v1573 = vunpack.c.h.b16 %v394
    %v1574 = vunpack.c.l.b16 %v395
    %v1575 = vunpack.c.h.b16 %v395
    %v1576 = vunpack.c.l.b16 %v396
    %v1577 = vunpack.c.h.b16 %v396
    %v1578 = vunpack.c.l.b16 %v397
    %v1579 = vunpack.c.h.b16 %v397
    %v1580 = vunpack.c.l.b16 %v398
    %v1581 = vunpack.c.h.b16 %v398
    %v1582 = vunpack.c.l.b16 %v399
    %v1583 = vunpack.c.h.b16 %v399
    %v1584 = vunpack.c.l.b16 %v400
    %v1585 = vunpack.c.h.b16 %v400
    %v1586 = vunpack.c.l.b16 %v401
    %v1587 = vunpack.c.h.b16 %v401
    %v1588 = vunpack.c.l.b16 %v402
    %v1589 = vunpack.c.h.b16 %v402
    %v1590 = vunpack.c.l.b16 %v403
    %v1591 = vunpack.c.h.b16 %v403
    %v1592 = vunpack.c.l.b16 %v404
    %v1593 = vunpack.c.h.b16 %v404
    %v1594 = vunpack.c.l.b16 %v405
    %v1595 = vunpack.c.h.b16 %v405
    %v1596 = vunpack.c.l.b16 %v406
    %v1597 = vunpack.c.h.b16 %v406
    %v1598 = vunpack.c.l.b16 %v407
    %v1599 = vunpack.c.h.b16 %v407
    %v1600 = vunpack.c.l.b16 %v408
    %v1601 = vunpack.c.h.b16 %v408
    %v1602 = vunpack.c.l.b16 %v409
    %v1603 = vunpack.c.h.b16 %v409
    %v1604 = vunpack.c.l.b16 %v410
    %v1605 = vunpack.c.h.b16 %v410
    %v1606 = vunpack.c.l.b16 %v411
    %v1607 = vunpack.c.h.b16 %v411
    %v1608 = vunpack.c.l.b16 %v412
    %v1609 = vunpack.c.h.b16 %v412
    %v1610 = vunpack.c.l.b16 %v413
    %v1611 = vunpack.c.h.b16 %v413
    %v1612 = vunpack.c.l.b16 %v414
    %v1613 = vunpack.c.h.b16 %v414
    %v1614 = vunpack.c.l.b16 %v415
    %v1615 = vunpack.c.h.b16 %v415
    %v1616 = vunpack.c.l.b16 %v416
    %v1617 = vunpack.c.h.b16 %v416
    %v1618 = vunpack.c.l.b16 %v417
    %v1619 = vunpack.c.h.b16 %v417
    %v1620 = vunpack.c.l.b16 %v418
    %v1621 = vunpack.c.h.b16 %v418
    %v1622 = vunpack.c.l.b16 %v419
    %v1623 = vunpack.c.h.b16 %v419
    %v1624 = vunpack.c.l.b16 %v420
    %v1625 = vunpack.c.h.b16 %v420
    %v1626 = vunpack.c.l.b16 %v421
    %v1627 = vunpack.c.h.b16 %v421
    %v1628 = vunpack.c.l.b16 %v422
    %v1629 = vunpack.c.h.b16 %v422
    %v1630 = vunpack.c.l.b16 %v423
    %v1631 = vunpack.c.h.b16 %v423
    %v1632 = vunpack.c.l.b16 %v424
    %v1633 = vunpack.c.h.b16 %v424
    %v1634 = vunpack.c.l.b16 %v425
    %v1635 = vunpack.c.h.b16 %v425
    %v1636 = vunpack.c.l.b16 %v426
    %v1637 = vunpack.c.h.b16 %v426
    %v1638 = vunpack.c.l.b16 %v427
    %v1639 = vunpack.c.h.b16 %v427
    %v1640 = vunpack.c.l.b16 %v428
    %v1641 = vunpack.c.h.b16 %v428
    %v1642 = vunpack.c.l.b16 %v429
    %v1643 = vunpack.c.h.b16 %v429
    %v1644 = vunpack.c.l.b16 %v430
    %v1645 = vunpack.c.h.b16 %v430
    %v1646 = vunpack.c.l.b16 %v431
    %v1647 = vunpack.c.h.b16 %v431
    %v1648 = vunpack.c.l.b16 %v432
    %v1649 = vunpack.c.h.b16 %v432
    %v1650 = vunpack.c.l.b16 %v433
    %v1651 = vunpack.c.h.b16 %v433
    %v1652 = vpack.c.b16 %v876, %v868
    %v1653 = vpack.c.b16 %v877, %v869
    %v1654 = vpack.c.b16 %v878, %v870
    %v1655 = vpack.c.b16 %v879, %v871
    %v1656 = vpack.c.b16 %v880, %v872
    %v1657 = vpack.c.b16 %v881, %v873
    %v1658 = vpack.c.b16 %v882, %v874
    %v1659 = vpack.c.b16 %v883, %v875
    %v1660 = vpack.c.b16 %v892, %v884
    %v1661 = vpack.c.b16 %v893, %v885
    %v1662 = vpack.c.b16 %v894, %v886
    %v1663 = vpack.c.b16 %v895, %v887
    %v1664 = vpack.c.b16 %v896, %v888
    %v1665 = vpack.c.b16 %v897, %v889
    %v1666 = vpack.c.b16 %v898, %v890
    %v1667 = vpack.c.b16 %v899, %v891
    %v1668 = vpack.c.b16 %v908, %v900
    %v1669 = vpack.c.b16 %v909, %v901
    %v1670 = vpack.c.b16 %v910, %v902
    %v1671 = vpack.c.b16 %v911, %v903
    %v1672 = vpack.c.b16 %v912, %v904
    %v1673 = vpack.c.b16 %v913, %v905
    %v1674 = vpack.c.b16 %v914, %v906
    %v1675 = vpack.c.b16 %v915, %v907
    %v1676 = vpack.c.b16 %v924, %v916
    %v1677 = vpack.c.b16 %v925, %v917
    %v1678 = vpack.c.b16 %v926, %v918
    %v1679 = vpack.c.b16 %v927, %v919
    %v1680 = vpack.c.b16 %v928, %v920
    %v1681 = vpack.c.b16 %v929, %v921
    %v1682 = vpack.c.b16 %v930, %v922
    %v1683 = vpack.c.b16 %v931, %v923
    %v1684 = vpack.c.b16 %v940, %v932
    %v1685 = vpack.c.b16 %v941, %v933
    %v1686 = vpack.c.b16 %v942, %v934
    %v1687 = vpack.c.b16 %v943, %v935
    %v1688 = vpack.c.b16 %v944, %v936
    %v1689 = vpack.c.b16 %v945, %v937
    %v1690 = vpack.c.b16 %v946, %v938
    %v1691 = vpack.c.b16 %v947, %v939
    %v1692 = vpack.c.b16 %v956, %v948
    %v1693 = vpack.c.b16 %v957, %v949
    %v1694 = vpack.c.b16 %v958, %v950
    %v1695 = vpack.c.b16 %v959, %v951
    %v1696 = vpack.c.b16 %v960, %v952
    %v1697 = vpack.c.b16 %v961, %v953
    %v1698 = vpack.c.b16 %v962, %v954
    %v1699 = vpack.c.b16 %v963, %v955
    %v1700 = vpack.c.b16 %v972, %v964
    %v1701 = vpack.c.b16 %v973, %v965
    %v1702 = vpack.c.b16 %v974, %v966
    %v1703 = vpack.c.b16 %v975, %v967
    %v1704 = vpack.c.b16 %v976, %v968
    %v1705 = vpack.c.b16 %v977, %v969
    %v1706 = vpack.c.b16 %v978, %v970
    %v1707 = vpack.c.b16 %v979, %v971
    %v1708 = vpack.c.b16 %v988, %v980
    %v1709 = vpack.c.b16 %v989, %v981
    %v1710 = vpack.c.b16 %v990, %v982
    %v1711 = vpack.c.b16 %v991, %v983
    %v1712 = vpack.c.b16 %v992, %v984
    %v1713 = vpack.c.b16 %v993, %v985
    %v1714 = vpack.c.b16 %v994, %v986
    %v1715 = vpack.c.b16 %v995, %v987
    %v1716 = vpack.c.b16 %v1004, %v996
    %v1717 = vpack.c.b16 %v1005, %v997
    %v1718 = vpack.c.b16 %v1006, %v998
    %v1719 = vpack.c.b16 %v1007, %v999
    %v1720 = vpack.c.b16 %v1008, %v1000
    %v1721 = vpack.c.b16 %v1009, %v1001
    %v1722 = vpack.c.b16 %v1010, %v1002
    %v1723 = vpack.c.b16 %v1011, %v1003
    %v1724 = vpack.c.b16 %v1020, %v1012
    %v1725 = vpack.c.b16 %v1021, %v1013
    %v1726 = vpack.c.b16 %v1022, %v1014
    %v1727 = vpack.c.b16 %v1023, %v1015
    %v1728 = vpack.c.b16 %v1024, %v1016
    %v1729 = vpack.c.b16 %v1025, %v1017
    %v1730 = vpack.c.b16 %v1026, %v1018
    %v1731 = vpack.c.b16 %v1027, %v1019
    %v1732 = vpack.c.b16 %v1036, %v1028
    %v1733 = vpack.c.b16 %v1037, %v1029
    %v1734 = vpack.c.b16 %v1038, %v1030
    %v1735 = vpack.c.b16 %v1039, %v1031
    %v1736 = vpack.c.b16 %v1040, %v1032
    %v1737 = vpack.c.b16 %v1041, %v1033
    %v1738 = vpack.c.b16 %v1042, %v1034
    %v1739 = vpack.c.b16 %v1043, %v1035
    %v1740 = vpack.c.b16 %v1052, %v1044
    %v1741 = vpack.c.b16 %v1053, %v1045
    %v1742 = vpack.c.b16 %v1054, %v1046
    %v1743 = vpack.c.b16 %v1055, %v1047
    %v1744 = vpack.c.b16 %v1056, %v1048
    %v1745 = vpack.c.b16 %v1057, %v1049
    %v1746 = vpack.c.b16 %v1058, %v1050
    %v1747 = vpack.c.b16 %v1059, %v1051
    %v1748 = vpack.c.b16 %v1068, %v1060
    %v1749 = vpack.c.b16 %v1069, %v1061
    %v1750 = vpack.c.b16 %v1070, %v1062
    %v1751 = vpack.c.b16 %v1071, %v1063
    %v1752 = vpack.c.b16 %v1072, %v1064
    %v1753 = vpack.c.b16 %v1073, %v1065
    %v1754 = vpack.c.b16 %v1074, %v1066
    %v1755 = vpack.c.b16 %v1075, %v1067
    %v1756 = vpack.c.b16 %v1084, %v1076
    %v1757 = vpack.c.b16 %v1085, %v1077
    %v1758 = vpack.c.b16 %v1086, %v1078
    %v1759 = vpack.c.b16 %v1087, %v1079
    %v1760 = vpack.c.b16 %v1088, %v1080
    %v1761 = vpack.c.b16 %v1089, %v1081
    %v1762 = vpack.c.b16 %v1090, %v1082
    %v1763 = vpack.c.b16 %v1091, %v1083
    %v1764 = vpack.c.b16 %v1100, %v1092
    %v1765 = vpack.c.b16 %v1101, %v1093
    %v1766 = vpack.c.b16 %v1102, %v1094
    %v1767 = vpack.c.b16 %v1103, %v1095
    %v1768 = vpack.c.b16 %v1104, %v1096
    %v1769 = vpack.c.b16 %v1105, %v1097
    %v1770 = vpack.c.b16 %v1106, %v1098
    %v1771 = vpack.c.b16 %v1107, %v1099
    %v1772 = vpack.c.b16 %v1116, %v1108
    %v1773 = vpack.c.b16 %v1117, %v1109
    %v1774 = vpack.c.b16 %v1118, %v1110
    %v1775 = vpack.c.b16 %v1119, %v1111
    %v1776 = vpack.c.b16 %v1120, %v1112
    %v1777 = vpack.c.b16 %v1121, %v1113
    %v1778 = vpack.c.b16 %v1122, %v1114
    %v1779 = vpack.c.b16 %v1123, %v1115
    %v1780 = vpack.c.b16 %v1132, %v1124
    %v1781 = vpack.c.b16 %v1133, %v1125
    %v1782 = vpack.c.b16 %v1134, %v1126
    %v1783 = vpack.c.b16 %v1135, %v1127
    %v1784 = vpack.c.b16 %v1136, %v1128
    %v1785 = vpack.c.b16 %v1137, %v1129
    %v1786 = vpack.c.b16 %v1138, %v1130
    %v1787 = vpack.c.b16 %v1139, %v1131
    %v1788 = vpack.c.b16 %v1148, %v1140
    %v1789 = vpack.c.b16 %v1149, %v1141
    %v1790 = vpack.c.b16 %v1150, %v1142
    %v1791 = vpack.c.b16 %v1151, %v1143
    %v1792 = vpack.c.b16 %v1152, %v1144
    %v1793 = vpack.c.b16 %v1153, %v1145
    %v1794 = vpack.c.b16 %v1154, %v1146
    %v1795 = vpack.c.b16 %v1155, %v1147
    %v1796 = vpack.c.b16 %v1164, %v1156
    %v1797 = vpack.c.b16 %v1165, %v1157
    %v1798 = vpack.c.b16 %v1166, %v1158
    %v1799 = vpack.c.b16 %v1167, %v1159
    %v1800 = vpack.c.b16 %v1168, %v1160
    %v1801 = vpack.c.b16 %v1169, %v1161
    %v1802 = vpack.c.b16 %v1170, %v1162
    %v1803 = vpack.c.b16 %v1171, %v1163
    %v1804 = vpack.c.b16 %v1180, %v1172
    %v1805 = vpack.c.b16 %v1181, %v1173
    %v1806 = vpack.c.b16 %v1182, %v1174
    %v1807 = vpack.c.b16 %v1183, %v1175
    %v1808 = vpack.c.b16 %v1184, %v1176
    %v1809 = vpack.c.b16 %v1185, %v1177
    %v1810 = vpack.c.b16 %v1186, %v1178
    %v1811 = vpack.c.b16 %v1187, %v1179
    %v1812 = vpack.c.b16 %v1196, %v1188
    %v1813 = vpack.c.b16 %v1197, %v1189
    %v1814 = vpack.c.b16 %v1198, %v1190
    %v1815 = vpack.c.b16 %v1199, %v1191
    %v1816 = vpack.c.b16 %v1200, %v1192
    %v1817 = vpack.c.b16 %v1201, %v1193
    %v1818 = vpack.c.b16 %v1202, %v1194
    %v1819 = vpack.c.b16 %v1203, %v1195
    %v1820 = vpack.c.b16 %v1212, %v1204
    %v1821 = vpack.c.b16 %v1213, %v1205
    %v1822 = vpack.c.b16 %v1214, %v1206
    %v1823 = vpack.c.b16 %v1215, %v1207
    %v1824 = vpack.c.b16 %v1216, %v1208
    %v1825 = vpack.c.b16 %v1217, %v1209
    %v1826 = vpack.c.b16 %v1218, %v1210
    %v1827 = vpack.c.b16 %v1219, %v1211
    %v1828 = vpack.c.b16 %v1228, %v1220
    %v1829 = vpack.c.b16 %v1229, %v1221
    %v1830 = vpack.c.b16 %v1230, %v1222
    %v1831 = vpack.c.b16 %v1231, %v1223
    %v1832 = vpack.c.b16 %v1232, %v1224
    %v1833 = vpack.c.b16 %v1233, %v1225
    %v1834 = vpack.c.b16 %v1234, %v1226
    %v1835 = vpack.c.b16 %v1235, %v1227
    %v1836 = vpack.c.b16 %v1244, %v1236
    %v1837 = vpack.c.b16 %v1245, %v1237
    %v1838 = vpack.c.b16 %v1246, %v1238
    %v1839 = vpack.c.b16 %v1247, %v1239
    %v1840 = vpack.c.b16 %v1248, %v1240
    %v1841 = vpack.c.b16 %v1249, %v1241
    %v1842 = vpack.c.b16 %v1250, %v1242
    %v1843 = vpack.c.b16 %v1251, %v1243
    %v1844 = vpack.c.b16 %v1260, %v1252
    %v1845 = vpack.c.b16 %v1261, %v1253
    %v1846 = vpack.c.b16 %v1262, %v1254
    %v1847 = vpack.c.b16 %v1263, %v1255
    %v1848 = vpack.c.b16 %v1264, %v1256
    %v1849 = vpack.c.b16 %v1265, %v1257
    %v1850 = vpack.c.b16 %v1266, %v1258
    %v1851 = vpack.c.b16 %v1267, %v1259
    %v1852 = vpack.c.b16 %v1276, %v1268
    %v1853 = vpack.c.b16 %v1277, %v1269
    %v1854 = vpack.c.b16 %v1278, %v1270
    %v1855 = vpack.c.b16 %v1279, %v1271
    %v1856 = vpack.c.b16 %v1280, %v1272
    %v1857 = vpack.c.b16 %v1281, %v1273
    %v1858 = vpack.c.b16 %v1282, %v1274
    %v1859 = vpack.c.b16 %v1283, %v1275
    %v1860 = vpack.c.b16 %v1292, %v1284
    %v1861 = vpack.c.b16 %v1293, %v1285
    %v1862 = vpack.c.b16 %v1294, %v1286
    %v1863 = vpack.c.b16 %v1295, %v1287
    %v1864 = vpack.c.b16 %v1296, %v1288
    %v1865 = vpack.c.b16 %v1297, %v1289
    %v1866 = vpack.c.b16 %v1298, %v1290
    %v1867 = vpack.c.b16 %v1299, %v1291
    %v1868 = vpack.c.b16 %v1308, %v1300
    %v1869 = vpack.c.b16 %v1309, %v1301
    %v1870 = vpack.c.b16 %v1310, %v1302
    %v1871 = vpack.c.b16 %v1311, %v1303
    %v1872 = vpack.c.b16 %v1312, %v1304
    %v1873 = vpack.c.b16 %v1313, %v1305
    %v1874 = vpack.c.b16 %v1314, %v1306
    %v1875 = vpack.c.b16 %v1315, %v1307
    %v1876 = vpack.c.b16 %v1324, %v1316
    %v1877 = vpack.c.b16 %v1325, %v1317
    %v1878 = vpack.c.b16 %v1326, %v1318
    %v1879 = vpack.c.b16 %v1327, %v1319
    %v1880 = vpack.c.b16 %v1328, %v1320
    %v1881 = vpack.c.b16 %v1329, %v1321
    %v1882 = vpack.c.b16 %v1330, %v1322
    %v1883 = vpack.c.b16 %v1331, %v1323
    %v1884 = vpack.c.b16 %v1340, %v1332
    %v1885 = vpack.c.b16 %v1341, %v1333
    %v1886 = vpack.c.b16 %v1342, %v1334
    %v1887 = vpack.c.b16 %v1343, %v1335
    %v1888 = vpack.c.b16 %v1344, %v1336
    %v1889 = vpack.c.b16 %v1345, %v1337
    %v1890 = vpack.c.b16 %v1346, %v1338
    %v1891 = vpack.c.b16 %v1347, %v1339
    %v1892 = vpack.c.b16 %v1356, %v1348
    %v1893 = vpack.c.b16 %v1357, %v1349
    %v1894 = vpack.c.b16 %v1358, %v1350
    %v1895 = vpack.c.b16 %v1359, %v1351
    %v1896 = vpack.c.b16 %v1360, %v1352
    %v1897 = vpack.c.b16 %v1361, %v1353
    %v1898 = vpack.c.b16 %v1362, %v1354
    %v1899 = vpack.c.b16 %v1363, %v1355
    %v1900 = vpack.c.b16 %v1372, %v1364
    %v1901 = vpack.c.b16 %v1373, %v1365
    %v1902 = vpack.c.b16 %v1374, %v1366
    %v1903 = vpack.c.b16 %v1375, %v1367
    %v1904 = vpack.c.b16 %v1376, %v1368
    %v1905 = vpack.c.b16 %v1377, %v1369
    %v1906 = vpack.c.b16 %v1378, %v1370
    %v1907 = vpack.c.b16 %v1379, %v1371
    %v1908 = vpack.c.b16 %v1388, %v1380
    %v1909 = vpack.c.b16 %v1389, %v1381
    %v1910 = vpack.c.b16 %v1390, %v1382
    %v1911 = vpack.c.b16 %v1391, %v1383
    %v1912 = vpack.c.b16 %v1392, %v1384
    %v1913 = vpack.c.b16 %v1393, %v1385
    %v1914 = vpack.c.b16 %v1394, %v1386
    %v1915 = vpack.c.b16 %v1395, %v1387
    %v1916 = vpack.c.b16 %v1404, %v1396
    %v1917 = vpack.c.b16 %v1405, %v1397
    %v1918 = vpack.c.b16 %v1406, %v1398
    %v1919 = vpack.c.b16 %v1407, %v1399
    %v1920 = vpack.c.b16 %v1408, %v1400
    %v1921 = vpack.c.b16 %v1409, %v1401
    %v1922 = vpack.c.b16 %v1410, %v1402
    %v1923 = vpack.c.b16 %v1411, %v1403
    %v1924 = vpack.c.b16 %v1420, %v1412
    %v1925 = vpack.c.b16 %v1421, %v1413
    %v1926 = vpack.c.b16 %v1422, %v1414
    %v1927 = vpack.c.b16 %v1423, %v1415
    %v1928 = vpack.c.b16 %v1424, %v1416
    %v1929 = vpack.c.b16 %v1425, %v1417
    %v1930 = vpack.c.b16 %v1426, %v1418
    %v1931 = vpack.c.b16 %v1427, %v1419
    %v1932 = vpack.c.b16 %v1436, %v1428
    %v1933 = vpack.c.b16 %v1437, %v1429
    %v1934 = vpack.c.b16 %v1438, %v1430
    %v1935 = vpack.c.b16 %v1439, %v1431
    %v1936 = vpack.c.b16 %v1440, %v1432
    %v1937 = vpack.c.b16 %v1441, %v1433
    %v1938 = vpack.c.b16 %v1442, %v1434
    %v1939 = vpack.c.b16 %v1443, %v1435
    %v1940 = vpack.c.b16 %v1452, %v1444
    %v1941 = vpack.c.b16 %v1453, %v1445
    %v1942 = vpack.c.b16 %v1454, %v1446
    %v1943 = vpack.c.b16 %v1455, %v1447
    %v1944 = vpack.c.b16 %v1456, %v1448
    %v1945 = vpack.c.b16 %v1457, %v1449
    %v1946 = vpack.c.b16 %v1458, %v1450
    %v1947 = vpack.c.b16 %v1459, %v1451
    %v1948 = vpack.c.b16 %v1468, %v1460
    %v1949 = vpack.c.b16 %v1469, %v1461
    %v1950 = vpack.c.b16 %v1470, %v1462
    %v1951 = vpack.c.b16 %v1471, %v1463
    %v1952 = vpack.c.b16 %v1472, %v1464
    %v1953 = vpack.c.b16 %v1473, %v1465
    %v1954 = vpack.c.b16 %v1474, %v1466
    %v1955 = vpack.c.b16 %v1475, %v1467
    %v1956 = vpack.c.b16 %v1484, %v1476
    %v1957 = vpack.c.b16 %v1485, %v1477
    %v1958 = vpack.c.b16 %v1486, %v1478
    %v1959 = vpack.c.b16 %v1487, %v1479
    %v1960 = vpack.c.b16 %v1488, %v1480
    %v1961 = vpack.c.b16 %v1489, %v1481
    %v1962 = vpack.c.b16 %v1490, %v1482
    %v1963 = vpack.c.b16 %v1491, %v1483
    %v1964 = vpack.c.b16 %v1500, %v1492
    %v1965 = vpack.c.b16 %v1501, %v1493
    %v1966 = vpack.c.b16 %v1502, %v1494
    %v1967 = vpack.c.b16 %v1503, %v1495
    %v1968 = vpack.c.b16 %v1504, %v1496
    %v1969 = vpack.c.b16 %v1505, %v1497
    %v1970 = vpack.c.b16 %v1506, %v1498
    %v1971 = vpack.c.b16 %v1507, %v1499
    %v1972 = vpack.c.b16 %v1516, %v1508
    %v1973 = vpack.c.b16 %v1517, %v1509
    %v1974 = vpack.c.b16 %v1518, %v1510
    %v1975 = vpack.c.b16 %v1519, %v1511
    %v1976 = vpack.c.b16 %v1520, %v1512
    %v1977 = vpack.c.b16 %v1521, %v1513
    %v1978 = vpack.c.b16 %v1522, %v1514
    %v1979 = vpack.c.b16 %v1523, %v1515
    %v1980 = vpack.c.b16 %v1532, %v1524
    %v1981 = vpack.c.b16 %v1533, %v1525
    %v1982 = vpack.c.b16 %v1534, %v1526
    %v1983 = vpack.c.b16 %v1535, %v1527
    %v1984 = vpack.c.b16 %v1536, %v1528
    %v1985 = vpack.c.b16 %v1537, %v1529
    %v1986 = vpack.c.b16 %v1538, %v1530
    %v1987 = vpack.c.b16 %v1539, %v1531
    %v1988 = vpack.c.b16 %v1548, %v1540
    %v1989 = vpack.c.b16 %v1549, %v1541
    %v1990 = vpack.c.b16 %v1550, %v1542
    %v1991 = vpack.c.b16 %v1551, %v1543
    %v1992 = vpack.c.b16 %v1552, %v1544
    %v1993 = vpack.c.b16 %v1553, %v1545
    %v1994 = vpack.c.b16 %v1554, %v1546
    %v1995 = vpack.c.b16 %v1555, %v1547
    %v1996 = vpack.c.b16 %v1564, %v1556
    %v1997 = vpack.c.b16 %v1565, %v1557
    %v1998 = vpack.c.b16 %v1566, %v1558
    %v1999 = vpack.c.b16 %v1567, %v1559
    %v2000 = vpack.c.b16 %v1568, %v1560
    %v2001 = vpack.c.b16 %v1569, %v1561
    %v2002 = vpack.c.b16 %v1570, %v1562
    %v2003 = vpack.c.b16 %v1571, %v1563
    %v2004 = vpack.c.b16 %v1580, %v1572
    %v2005 = vpack.c.b16 %v1581, %v1573
    %v2006 = vpack.c.b16 %v1582, %v1574
    %v2007 = vpack.c.b16 %v1583, %v1575
    %v2008 = vpack.c.b16 %v1584, %v1576
    %v2009 = vpack.c.b16 %v1585, %v1577
    %v2010 = vpack.c.b16 %v1586, %v1578
    %v2011 = vpack.c.b16 %v1587, %v1579
    %v2012 = vpack.c.b16 %v1596, %v1588
    %v2013 = vpack.c.b16 %v1597, %v1589
    %v2014 = vpack.c.b16 %v1598, %v1590
    %v2015 = vpack.c.b16 %v1599, %v1591
    %v2016 = vpack.c.b16 %v1600, %v1592
    %v2017 = vpack.c.b16 %v1601, %v1593
    %v2018 = vpack.c.b16 %v1602, %v1594
    %v2019 = vpack.c.b16 %v1603, %v1595
    %v2020 = vpack.c.b16 %v1612, %v1604
    %v2021 = vpack.c.b16 %v1613, %v1605
    %v2022 = vpack.c.b16 %v1614, %v1606
    %v2023 = vpack.c.b16 %v1615, %v1607
    %v2024 = vpack.c.b16 %v1616, %v1608
    %v2025 = vpack.c.b16 %v1617, %v1609
    %v2026 = vpack.c.b16 %v1618, %v1610
    %v2027 = vpack.c.b16 %v1619, %v1611
    %v2028 = vpack.c.b16 %v1628, %v1620
    %v2029 = vpack.c.b16 %v1629, %v1621
    %v2030 = vpack.c.b16 %v1630, %v1622
    %v2031 = vpack.c.b16 %v1631, %v1623
    %v2032 = vpack.c.b16 %v1632, %v1624
    %v2033 = vpack.c.b16 %v1633, %v1625
    %v2034 = vpack.c.b16 %v1634, %v1626
    %v2035 = vpack.c.b16 %v1635, %v1627
    %v2036 = vpack.c.b16 %v1644, %v1636
    %v2037 = vpack.c.b16 %v1645, %v1637
    %v2038 = vpack.c.b16 %v1646, %v1638
    %v2039 = vpack.c.b16 %v1647, %v1639
    %v2040 = vpack.c.b16 %v1648, %v1640
    %v2041 = vpack.c.b16 %v1649, %v1641
    %v2042 = vpack.c.b16 %v1650, %v1642
    %v2043 = vpack.c.b16 %v1651, %v1643
    %vm2436 = vcmask 130048
    %v2438 = vsel %vm2436, %v41, 0
    %2440 = vmatprep.subr.bf16.mxu0 %v1709
    %2441 = vmatpush1.bf16.msra.mxu0 %v1708
    %2442 = vmatprep.subr.bf16.mxu0 %v1701
    %2443 = vmatpush1.bf16.msra.mxu0 %v1700
    %2444 = vmatprep.subr.bf16.mxu0 %v1693
    %2445 = vmatpush1.bf16.msra.mxu0 %v1692
    %2446 = vmatprep.subr.bf16.mxu0 %v1685
    %2447 = vmatpush1.bf16.msra.mxu0 %v1684
    %2448 = vmatprep.subr.bf16.mxu0 %v1677
    %2449 = vmatpush1.bf16.msra.mxu0 %v1676
    %2450 = vmatprep.subr.bf16.mxu0 %v1669
    %2451 = vmatpush1.bf16.msra.mxu0 %v1668
    %2452 = vmatprep.subr.bf16.mxu0 %v1661
    %2453 = vmatpush1.bf16.msra.mxu0 %v1660
    %2454 = vmatprep.subr.bf16.mxu0 %v1653
    %2455 = vmatpush1.bf16.msra.mxu0 %v1652
    %2456 = vmatprep.subr.bf16.mxu0 %v1773
    %2457 = vmatpush2.bf16.msra.mxu0 %v1772
    %2458 = vmatprep.subr.bf16.mxu0 %v1765
    %2459 = vmatpush2.bf16.msra.mxu0 %v1764
    %2460 = vmatprep.subr.bf16.mxu0 %v1757
    %2461 = vmatpush2.bf16.msra.mxu0 %v1756
    %2462 = vmatprep.subr.bf16.mxu0 %v1749
    %2463 = vmatpush2.bf16.msra.mxu0 %v1748
    %2464 = vmatprep.subr.bf16.mxu0 %v1741
    %2465 = vmatpush2.bf16.msra.mxu0 %v1740
    %2466 = vmatprep.subr.bf16.mxu0 %v1733
    %2467 = vmatpush2.bf16.msra.mxu0 %v1732
    %2468 = vmatprep.subr.bf16.mxu0 %v1725
    %2469 = vmatpush2.bf16.msra.mxu0 %v1724
    %2470 = vmatprep.subr.bf16.mxu0 %v1717
    %2471 = vmatpush2.bf16.msra.mxu0 %v1716
    %2472 = vmatprep.mubr.bf16.mxu0 %v36
    %2473 = vmatmul.mubr.bf16.gmra.mxu0 %v35
    %v2474 = vpop.f32.mrf.mxu0
    %v2475 = vadd.f32 %v439, %v2474
    %v2476 = vpop.f32.mrf.mxu0
    %v2477 = vadd.f32 %v443, %v2476
    %v2478 = vpop.f32.mrf.mxu0
    %v2479 = vpop.f32.mrf.mxu0
    %2480 = vdwg.mxu0
    %2481 = vmatprep.subr.bf16.mxu0 %v1837
    %2482 = vmatpush1.bf16.msra.mxu0 %v1836
    %2483 = vmatprep.subr.bf16.mxu0 %v1829
    %2484 = vmatpush1.bf16.msra.mxu0 %v1828
    %2485 = vmatprep.subr.bf16.mxu0 %v1821
    %2486 = vmatpush1.bf16.msra.mxu0 %v1820
    %2487 = vmatprep.subr.bf16.mxu0 %v1813
    %2488 = vmatpush1.bf16.msra.mxu0 %v1812
    %2489 = vmatprep.subr.bf16.mxu0 %v1805
    %2490 = vmatpush1.bf16.msra.mxu0 %v1804
    %2491 = vmatprep.subr.bf16.mxu0 %v1797
    %2492 = vmatpush1.bf16.msra.mxu0 %v1796
    %2493 = vmatprep.subr.bf16.mxu0 %v1789
    %2494 = vmatpush1.bf16.msra.mxu0 %v1788
    %2495 = vmatprep.subr.bf16.mxu0 %v1781
    %2496 = vmatpush1.bf16.msra.mxu0 %v1780
    %2497 = vmatprep.subr.bf16.mxu0 %v1901
    %2498 = vmatpush2.bf16.msra.mxu0 %v1900
    %2499 = vmatprep.subr.bf16.mxu0 %v1893
    %2500 = vmatpush2.bf16.msra.mxu0 %v1892
    %2501 = vmatprep.subr.bf16.mxu0 %v1885
    %2502 = vmatpush2.bf16.msra.mxu0 %v1884
    %2503 = vmatprep.subr.bf16.mxu0 %v1877
    %2504 = vmatpush2.bf16.msra.mxu0 %v1876
    %2505 = vmatprep.subr.bf16.mxu0 %v1869
    %2506 = vmatpush2.bf16.msra.mxu0 %v1868
    %2507 = vmatprep.subr.bf16.mxu0 %v1861
    %2508 = vmatpush2.bf16.msra.mxu0 %v1860
    %2509 = vmatprep.subr.bf16.mxu0 %v1853
    %2510 = vmatpush2.bf16.msra.mxu0 %v1852
    %2511 = vmatprep.subr.bf16.mxu0 %v1845
    %2512 = vmatpush2.bf16.msra.mxu0 %v1844
    %2513 = vmatprep.mubr.bf16.mxu0 %v38
    %2514 = vmatmul.mubr.bf16.gmra.mxu0 %v37
    %v2515 = vpop.f32.mrf.mxu0
    %v2516 = vadd.f32 %v2475, %v2515
    %v2517 = vpop.f32.mrf.mxu0
    %v2518 = vadd.f32 %v2477, %v2517
    %v2519 = vpop.f32.mrf.mxu0
    %v2520 = vpop.f32.mrf.mxu0
    %2521 = vdwg.mxu0
    %2522 = vmatprep.subr.bf16.mxu0 %v1965
    %2523 = vmatpush1.bf16.msra.mxu0 %v1964
    %2524 = vmatprep.subr.bf16.mxu0 %v1957
    %2525 = vmatpush1.bf16.msra.mxu0 %v1956
    %2526 = vmatprep.subr.bf16.mxu0 %v1949
    %2527 = vmatpush1.bf16.msra.mxu0 %v1948
    %2528 = vmatprep.subr.bf16.mxu0 %v1941
    %2529 = vmatpush1.bf16.msra.mxu0 %v1940
    %2530 = vmatprep.subr.bf16.mxu0 %v1933
    %2531 = vmatpush1.bf16.msra.mxu0 %v1932
    %2532 = vmatprep.subr.bf16.mxu0 %v1925
    %2533 = vmatpush1.bf16.msra.mxu0 %v1924
    %2534 = vmatprep.subr.bf16.mxu0 %v1917
    %2535 = vmatpush1.bf16.msra.mxu0 %v1916
    %2536 = vmatprep.subr.bf16.mxu0 %v1909
    %2537 = vmatpush1.bf16.msra.mxu0 %v1908
    %2538 = vmatprep.subr.bf16.mxu0 %v2029
    %2539 = vmatpush2.bf16.msra.mxu0 %v2028
    %2540 = vmatprep.subr.bf16.mxu0 %v2021
    %2541 = vmatpush2.bf16.msra.mxu0 %v2020
    %2542 = vmatprep.subr.bf16.mxu0 %v2013
    %2543 = vmatpush2.bf16.msra.mxu0 %v2012
    %2544 = vmatprep.subr.bf16.mxu0 %v2005
    %2545 = vmatpush2.bf16.msra.mxu0 %v2004
    %2546 = vmatprep.subr.bf16.mxu0 %v1997
    %2547 = vmatpush2.bf16.msra.mxu0 %v1996
    %2548 = vmatprep.subr.bf16.mxu0 %v1989
    %2549 = vmatpush2.bf16.msra.mxu0 %v1988
    %2550 = vmatprep.subr.bf16.mxu0 %v1981
    %2551 = vmatpush2.bf16.msra.mxu0 %v1980
    %2552 = vmatprep.subr.bf16.mxu0 %v1973
    %2553 = vmatpush2.bf16.msra.mxu0 %v1972
    %2554 = vmatprep.mubr.bf16.mxu0 %v40
    %2555 = vmatmul.mubr.bf16.gmra.mxu0 %v39
    %v2556 = vpop.f32.mrf.mxu0
    %v2557 = vadd.f32 %v2516, %v2556
    %v2558 = vpop.f32.mrf.mxu0
    %v2559 = vadd.f32 %v2518, %v2558
    %v2560 = vpop.f32.mrf.mxu0
    %v2561 = vpop.f32.mrf.mxu0
    %2562 = vdwg.mxu0
    %2563 = vmatprep.subr.bf16.mxu0 0
    %2564 = vmatpush1.bf16.msra.mxu0 0
    %2565 = vmatprep.subr.bf16.mxu0 0
    %2566 = vmatpush1.bf16.msra.mxu0 0
    %2567 = vmatprep.subr.bf16.mxu0 0
    %2568 = vmatpush1.bf16.msra.mxu0 0
    %2569 = vmatprep.subr.bf16.mxu0 0
    %2570 = vmatpush1.bf16.msra.mxu0 0
    %2571 = vmatprep.subr.bf16.mxu0 0
    %2572 = vmatpush1.bf16.msra.mxu0 0
    %2573 = vmatprep.subr.bf16.mxu0 0
    %2574 = vmatpush1.bf16.msra.mxu0 0
    %2575 = vmatprep.subr.bf16.mxu0 0
    %2576 = vmatpush1.bf16.msra.mxu0 0
    %2577 = vmatprep.subr.bf16.mxu0 %v2037
    %2578 = vmatpush1.bf16.msra.mxu0 %v2036
    %2579 = vmatprep.subr.bf16.mxu0 0
    %2580 = vmatpush2.bf16.msra.mxu0 0
    %2581 = vmatprep.subr.bf16.mxu0 0
    %2582 = vmatpush2.bf16.msra.mxu0 0
    %2583 = vmatprep.subr.bf16.mxu0 0
    %2584 = vmatpush2.bf16.msra.mxu0 0
    %2585 = vmatprep.subr.bf16.mxu0 0
    %2586 = vmatpush2.bf16.msra.mxu0 0
    %2587 = vmatprep.subr.bf16.mxu0 0
    %2588 = vmatpush2.bf16.msra.mxu0 0
    %2589 = vmatprep.subr.bf16.mxu0 0
    %2590 = vmatpush2.bf16.msra.mxu0 0
    %2591 = vmatprep.subr.bf16.mxu0 0
    %2592 = vmatpush2.bf16.msra.mxu0 0
    %2593 = vmatprep.subr.bf16.mxu0 0
    %2594 = vmatpush2.bf16.msra.mxu0 0
    %2595 = vmatprep.mubr.bf16.mxu0 0
    %2596 = vmatmul.mubr.bf16.gmra.mxu0 %v2438
    %v2597 = vpop.f32.mrf.mxu0
    %v2598 = vadd.f32 %v2557, %v2597
    %v2599 = vpop.f32.mrf.mxu0
    %v2600 = vadd.f32 %v2559, %v2599
    %v2601 = vpop.f32.mrf.mxu0
    %v2602 = vpop.f32.mrf.mxu0
    %2603 = vdwg.mxu0
    %2604 = vmatprep.subr.bf16.mxu0 %v1711
    %2605 = vmatpush1.bf16.msra.mxu0 %v1710
    %2606 = vmatprep.subr.bf16.mxu0 %v1703
    %2607 = vmatpush1.bf16.msra.mxu0 %v1702
    %2608 = vmatprep.subr.bf16.mxu0 %v1695
    %2609 = vmatpush1.bf16.msra.mxu0 %v1694
    %2610 = vmatprep.subr.bf16.mxu0 %v1687
    %2611 = vmatpush1.bf16.msra.mxu0 %v1686
    %2612 = vmatprep.subr.bf16.mxu0 %v1679
    %2613 = vmatpush1.bf16.msra.mxu0 %v1678
    %2614 = vmatprep.subr.bf16.mxu0 %v1671
    %2615 = vmatpush1.bf16.msra.mxu0 %v1670
    %2616 = vmatprep.subr.bf16.mxu0 %v1663
    %2617 = vmatpush1.bf16.msra.mxu0 %v1662
    %2618 = vmatprep.subr.bf16.mxu0 %v1655
    %2619 = vmatpush1.bf16.msra.mxu0 %v1654
    %2620 = vmatprep.subr.bf16.mxu0 %v1775
    %2621 = vmatpush2.bf16.msra.mxu0 %v1774
    %2622 = vmatprep.subr.bf16.mxu0 %v1767
    %2623 = vmatpush2.bf16.msra.mxu0 %v1766
    %2624 = vmatprep.subr.bf16.mxu0 %v1759
    %2625 = vmatpush2.bf16.msra.mxu0 %v1758
    %2626 = vmatprep.subr.bf16.mxu0 %v1751
    %2627 = vmatpush2.bf16.msra.mxu0 %v1750
    %2628 = vmatprep.subr.bf16.mxu0 %v1743
    %2629 = vmatpush2.bf16.msra.mxu0 %v1742
    %2630 = vmatprep.subr.bf16.mxu0 %v1735
    %2631 = vmatpush2.bf16.msra.mxu0 %v1734
    %2632 = vmatprep.subr.bf16.mxu0 %v1727
    %2633 = vmatpush2.bf16.msra.mxu0 %v1726
    %2634 = vmatprep.subr.bf16.mxu0 %v1719
    %2635 = vmatpush2.bf16.msra.mxu0 %v1718
    %2636 = vmatprep.mubr.bf16.mxu0 %v36
    %2637 = vmatmul.mubr.bf16.gmra.mxu0 %v35
    %v2638 = vpop.f32.mrf.mxu0
    %v2639 = vadd.f32 %v447, %v2638
    %v2640 = vpop.f32.mrf.mxu0
    %v2641 = vadd.f32 %v451, %v2640
    %v2642 = vpop.f32.mrf.mxu0
    %v2643 = vpop.f32.mrf.mxu0
    %2644 = vdwg.mxu0
    %2645 = vmatprep.subr.bf16.mxu0 %v1839
    %2646 = vmatpush1.bf16.msra.mxu0 %v1838
    %2647 = vmatprep.subr.bf16.mxu0 %v1831
    %2648 = vmatpush1.bf16.msra.mxu0 %v1830
    %2649 = vmatprep.subr.bf16.mxu0 %v1823
    %2650 = vmatpush1.bf16.msra.mxu0 %v1822
    %2651 = vmatprep.subr.bf16.mxu0 %v1815
    %2652 = vmatpush1.bf16.msra.mxu0 %v1814
    %2653 = vmatprep.subr.bf16.mxu0 %v1807
    %2654 = vmatpush1.bf16.msra.mxu0 %v1806
    %2655 = vmatprep.subr.bf16.mxu0 %v1799
    %2656 = vmatpush1.bf16.msra.mxu0 %v1798
    %2657 = vmatprep.subr.bf16.mxu0 %v1791
    %2658 = vmatpush1.bf16.msra.mxu0 %v1790
    %2659 = vmatprep.subr.bf16.mxu0 %v1783
    %2660 = vmatpush1.bf16.msra.mxu0 %v1782
    %2661 = vmatprep.subr.bf16.mxu0 %v1903
    %2662 = vmatpush2.bf16.msra.mxu0 %v1902
    %2663 = vmatprep.subr.bf16.mxu0 %v1895
    %2664 = vmatpush2.bf16.msra.mxu0 %v1894
    %2665 = vmatprep.subr.bf16.mxu0 %v1887
    %2666 = vmatpush2.bf16.msra.mxu0 %v1886
    %2667 = vmatprep.subr.bf16.mxu0 %v1879
    %2668 = vmatpush2.bf16.msra.mxu0 %v1878
    %2669 = vmatprep.subr.bf16.mxu0 %v1871
    %2670 = vmatpush2.bf16.msra.mxu0 %v1870
    %2671 = vmatprep.subr.bf16.mxu0 %v1863
    %2672 = vmatpush2.bf16.msra.mxu0 %v1862
    %2673 = vmatprep.subr.bf16.mxu0 %v1855
    %2674 = vmatpush2.bf16.msra.mxu0 %v1854
    %2675 = vmatprep.subr.bf16.mxu0 %v1847
    %2676 = vmatpush2.bf16.msra.mxu0 %v1846
    %2677 = vmatprep.mubr.bf16.mxu0 %v38
    %2678 = vmatmul.mubr.bf16.gmra.mxu0 %v37
    %v2679 = vpop.f32.mrf.mxu0
    %v2680 = vadd.f32 %v2639, %v2679
    %v2681 = vpop.f32.mrf.mxu0
    %v2682 = vadd.f32 %v2641, %v2681
    %v2683 = vpop.f32.mrf.mxu0
    %v2684 = vpop.f32.mrf.mxu0
    %2685 = vdwg.mxu0
    %2686 = vmatprep.subr.bf16.mxu0 %v1967
    %2687 = vmatpush1.bf16.msra.mxu0 %v1966
    %2688 = vmatprep.subr.bf16.mxu0 %v1959
    %2689 = vmatpush1.bf16.msra.mxu0 %v1958
    %2690 = vmatprep.subr.bf16.mxu0 %v1951
    %2691 = vmatpush1.bf16.msra.mxu0 %v1950
    %2692 = vmatprep.subr.bf16.mxu0 %v1943
    %2693 = vmatpush1.bf16.msra.mxu0 %v1942
    %2694 = vmatprep.subr.bf16.mxu0 %v1935
    %2695 = vmatpush1.bf16.msra.mxu0 %v1934
    %2696 = vmatprep.subr.bf16.mxu0 %v1927
    %2697 = vmatpush1.bf16.msra.mxu0 %v1926
    %2698 = vmatprep.subr.bf16.mxu0 %v1919
    %2699 = vmatpush1.bf16.msra.mxu0 %v1918
    %2700 = vmatprep.subr.bf16.mxu0 %v1911
    %2701 = vmatpush1.bf16.msra.mxu0 %v1910
    %2702 = vmatprep.subr.bf16.mxu0 %v2031
    %2703 = vmatpush2.bf16.msra.mxu0 %v2030
    %2704 = vmatprep.subr.bf16.mxu0 %v2023
    %2705 = vmatpush2.bf16.msra.mxu0 %v2022
    %2706 = vmatprep.subr.bf16.mxu0 %v2015
    %2707 = vmatpush2.bf16.msra.mxu0 %v2014
    %2708 = vmatprep.subr.bf16.mxu0 %v2007
    %2709 = vmatpush2.bf16.msra.mxu0 %v2006
    %2710 = vmatprep.subr.bf16.mxu0 %v1999
    %2711 = vmatpush2.bf16.msra.mxu0 %v1998
    %2712 = vmatprep.subr.bf16.mxu0 %v1991
    %2713 = vmatpush2.bf16.msra.mxu0 %v1990
    %2714 = vmatprep.subr.bf16.mxu0 %v1983
    %2715 = vmatpush2.bf16.msra.mxu0 %v1982
    %2716 = vmatprep.subr.bf16.mxu0 %v1975
    %2717 = vmatpush2.bf16.msra.mxu0 %v1974
    %2718 = vmatprep.mubr.bf16.mxu0 %v40
    %2719 = vmatmul.mubr.bf16.gmra.mxu0 %v39
    %v2720 = vpop.f32.mrf.mxu0
    %v2721 = vadd.f32 %v2680, %v2720
    %v2722 = vpop.f32.mrf.mxu0
    %v2723 = vadd.f32 %v2682, %v2722
    %v2724 = vpop.f32.mrf.mxu0
    %v2725 = vpop.f32.mrf.mxu0
    %2726 = vdwg.mxu0
    %2727 = vmatprep.subr.bf16.mxu0 0
    %2728 = vmatpush1.bf16.msra.mxu0 0
    %2729 = vmatprep.subr.bf16.mxu0 0
    %2730 = vmatpush1.bf16.msra.mxu0 0
    %2731 = vmatprep.subr.bf16.mxu0 0
    %2732 = vmatpush1.bf16.msra.mxu0 0
    %2733 = vmatprep.subr.bf16.mxu0 0
    %2734 = vmatpush1.bf16.msra.mxu0 0
    %2735 = vmatprep.subr.bf16.mxu0 0
    %2736 = vmatpush1.bf16.msra.mxu0 0
    %2737 = vmatprep.subr.bf16.mxu0 0
    %2738 = vmatpush1.bf16.msra.mxu0 0
    %2739 = vmatprep.subr.bf16.mxu0 0
    %2740 = vmatpush1.bf16.msra.mxu0 0
    %2741 = vmatprep.subr.bf16.mxu0 %v2039
    %2742 = vmatpush1.bf16.msra.mxu0 %v2038
    %2743 = vmatprep.subr.bf16.mxu0 0
    %2744 = vmatpush2.bf16.msra.mxu0 0
    %2745 = vmatprep.subr.bf16.mxu0 0
    %2746 = vmatpush2.bf16.msra.mxu0 0
    %2747 = vmatprep.subr.bf16.mxu0 0
    %2748 = vmatpush2.bf16.msra.mxu0 0
    %2749 = vmatprep.subr.bf16.mxu0 0
    %2750 = vmatpush2.bf16.msra.mxu0 0
    %2751 = vmatprep.subr.bf16.mxu0 0
    %2752 = vmatpush2.bf16.msra.mxu0 0
    %2753 = vmatprep.subr.bf16.mxu0 0
    %2754 = vmatpush2.bf16.msra.mxu0 0
    %2755 = vmatprep.subr.bf16.mxu0 0
    %2756 = vmatpush2.bf16.msra.mxu0 0
    %2757 = vmatprep.subr.bf16.mxu0 0
    %2758 = vmatpush2.bf16.msra.mxu0 0
    %2759 = vmatprep.mubr.bf16.mxu0 0
    %2760 = vmatmul.mubr.bf16.gmra.mxu0 %v2438
    %v2761 = vpop.f32.mrf.mxu0
    %v2762 = vadd.f32 %v2721, %v2761
    %v2763 = vpop.f32.mrf.mxu0
    %v2764 = vadd.f32 %v2723, %v2763
    %v2765 = vpop.f32.mrf.mxu0
    %v2766 = vpop.f32.mrf.mxu0
    %2767 = vdwg.mxu0
    %2768 = vmatprep.subr.bf16.mxu0 %v1713
    %2769 = vmatpush1.bf16.msra.mxu0 %v1712
    %2770 = vmatprep.subr.bf16.mxu0 %v1705
    %2771 = vmatpush1.bf16.msra.mxu0 %v1704
    %2772 = vmatprep.subr.bf16.mxu0 %v1697
    %2773 = vmatpush1.bf16.msra.mxu0 %v1696
    %2774 = vmatprep.subr.bf16.mxu0 %v1689
    %2775 = vmatpush1.bf16.msra.mxu0 %v1688
    %2776 = vmatprep.subr.bf16.mxu0 %v1681
    %2777 = vmatpush1.bf16.msra.mxu0 %v1680
    %2778 = vmatprep.subr.bf16.mxu0 %v1673
    %2779 = vmatpush1.bf16.msra.mxu0 %v1672
    %2780 = vmatprep.subr.bf16.mxu0 %v1665
    %2781 = vmatpush1.bf16.msra.mxu0 %v1664
    %2782 = vmatprep.subr.bf16.mxu0 %v1657
    %2783 = vmatpush1.bf16.msra.mxu0 %v1656
    %2784 = vmatprep.subr.bf16.mxu0 %v1777
    %2785 = vmatpush2.bf16.msra.mxu0 %v1776
    %2786 = vmatprep.subr.bf16.mxu0 %v1769
    %2787 = vmatpush2.bf16.msra.mxu0 %v1768
    %2788 = vmatprep.subr.bf16.mxu0 %v1761
    %2789 = vmatpush2.bf16.msra.mxu0 %v1760
    %2790 = vmatprep.subr.bf16.mxu0 %v1753
    %2791 = vmatpush2.bf16.msra.mxu0 %v1752
    %2792 = vmatprep.subr.bf16.mxu0 %v1745
    %2793 = vmatpush2.bf16.msra.mxu0 %v1744
    %2794 = vmatprep.subr.bf16.mxu0 %v1737
    %2795 = vmatpush2.bf16.msra.mxu0 %v1736
    %2796 = vmatprep.subr.bf16.mxu0 %v1729
    %2797 = vmatpush2.bf16.msra.mxu0 %v1728
    %2798 = vmatprep.subr.bf16.mxu0 %v1721
    %2799 = vmatpush2.bf16.msra.mxu0 %v1720
    %2800 = vmatprep.mubr.bf16.mxu0 %v36
    %2801 = vmatmul.mubr.bf16.gmra.mxu0 %v35
    %v2802 = vpop.f32.mrf.mxu0
    %v2803 = vadd.f32 %v455, %v2802
    %v2804 = vpop.f32.mrf.mxu0
    %v2805 = vadd.f32 %v459, %v2804
    %v2806 = vpop.f32.mrf.mxu0
    %v2807 = vpop.f32.mrf.mxu0
    %2808 = vdwg.mxu0
    %2809 = vmatprep.subr.bf16.mxu0 %v1841
    %2810 = vmatpush1.bf16.msra.mxu0 %v1840
    %2811 = vmatprep.subr.bf16.mxu0 %v1833
    %2812 = vmatpush1.bf16.msra.mxu0 %v1832
    %2813 = vmatprep.subr.bf16.mxu0 %v1825
    %2814 = vmatpush1.bf16.msra.mxu0 %v1824
    %2815 = vmatprep.subr.bf16.mxu0 %v1817
    %2816 = vmatpush1.bf16.msra.mxu0 %v1816
    %2817 = vmatprep.subr.bf16.mxu0 %v1809
    %2818 = vmatpush1.bf16.msra.mxu0 %v1808
    %2819 = vmatprep.subr.bf16.mxu0 %v1801
    %2820 = vmatpush1.bf16.msra.mxu0 %v1800
    %2821 = vmatprep.subr.bf16.mxu0 %v1793
    %2822 = vmatpush1.bf16.msra.mxu0 %v1792
    %2823 = vmatprep.subr.bf16.mxu0 %v1785
    %2824 = vmatpush1.bf16.msra.mxu0 %v1784
    %2825 = vmatprep.subr.bf16.mxu0 %v1905
    %2826 = vmatpush2.bf16.msra.mxu0 %v1904
    %2827 = vmatprep.subr.bf16.mxu0 %v1897
    %2828 = vmatpush2.bf16.msra.mxu0 %v1896
    %2829 = vmatprep.subr.bf16.mxu0 %v1889
    %2830 = vmatpush2.bf16.msra.mxu0 %v1888
    %2831 = vmatprep.subr.bf16.mxu0 %v1881
    %2832 = vmatpush2.bf16.msra.mxu0 %v1880
    %2833 = vmatprep.subr.bf16.mxu0 %v1873
    %2834 = vmatpush2.bf16.msra.mxu0 %v1872
    %2835 = vmatprep.subr.bf16.mxu0 %v1865
    %2836 = vmatpush2.bf16.msra.mxu0 %v1864
    %2837 = vmatprep.subr.bf16.mxu0 %v1857
    %2838 = vmatpush2.bf16.msra.mxu0 %v1856
    %2839 = vmatprep.subr.bf16.mxu0 %v1849
    %2840 = vmatpush2.bf16.msra.mxu0 %v1848
    %2841 = vmatprep.mubr.bf16.mxu0 %v38
    %2842 = vmatmul.mubr.bf16.gmra.mxu0 %v37
    %v2843 = vpop.f32.mrf.mxu0
    %v2844 = vadd.f32 %v2803, %v2843
    %v2845 = vpop.f32.mrf.mxu0
    %v2846 = vadd.f32 %v2805, %v2845
    %v2847 = vpop.f32.mrf.mxu0
    %v2848 = vpop.f32.mrf.mxu0
    %2849 = vdwg.mxu0
    %2850 = vmatprep.subr.bf16.mxu0 %v1969
    %2851 = vmatpush1.bf16.msra.mxu0 %v1968
    %2852 = vmatprep.subr.bf16.mxu0 %v1961
    %2853 = vmatpush1.bf16.msra.mxu0 %v1960
    %2854 = vmatprep.subr.bf16.mxu0 %v1953
    %2855 = vmatpush1.bf16.msra.mxu0 %v1952
    %2856 = vmatprep.subr.bf16.mxu0 %v1945
    %2857 = vmatpush1.bf16.msra.mxu0 %v1944
    %2858 = vmatprep.subr.bf16.mxu0 %v1937
    %2859 = vmatpush1.bf16.msra.mxu0 %v1936
    %2860 = vmatprep.subr.bf16.mxu0 %v1929
    %2861 = vmatpush1.bf16.msra.mxu0 %v1928
    %2862 = vmatprep.subr.bf16.mxu0 %v1921
    %2863 = vmatpush1.bf16.msra.mxu0 %v1920
    %2864 = vmatprep.subr.bf16.mxu0 %v1913
    %2865 = vmatpush1.bf16.msra.mxu0 %v1912
    %2866 = vmatprep.subr.bf16.mxu0 %v2033
    %2867 = vmatpush2.bf16.msra.mxu0 %v2032
    %2868 = vmatprep.subr.bf16.mxu0 %v2025
    %2869 = vmatpush2.bf16.msra.mxu0 %v2024
    %2870 = vmatprep.subr.bf16.mxu0 %v2017
    %2871 = vmatpush2.bf16.msra.mxu0 %v2016
    %2872 = vmatprep.subr.bf16.mxu0 %v2009
    %2873 = vmatpush2.bf16.msra.mxu0 %v2008
    %2874 = vmatprep.subr.bf16.mxu0 %v2001
    %2875 = vmatpush2.bf16.msra.mxu0 %v2000
    %2876 = vmatprep.subr.bf16.mxu0 %v1993
    %2877 = vmatpush2.bf16.msra.mxu0 %v1992
    %2878 = vmatprep.subr.bf16.mxu0 %v1985
    %2879 = vmatpush2.bf16.msra.mxu0 %v1984
    %2880 = vmatprep.subr.bf16.mxu0 %v1977
    %2881 = vmatpush2.bf16.msra.mxu0 %v1976
    %2882 = vmatprep.mubr.bf16.mxu0 %v40
    %2883 = vmatmul.mubr.bf16.gmra.mxu0 %v39
    %v2884 = vpop.f32.mrf.mxu0
    %v2885 = vadd.f32 %v2844, %v2884
    %v2886 = vpop.f32.mrf.mxu0
    %v2887 = vadd.f32 %v2846, %v2886
    %v2888 = vpop.f32.mrf.mxu0
    %v2889 = vpop.f32.mrf.mxu0
    %2890 = vdwg.mxu0
    %2891 = vmatprep.subr.bf16.mxu0 0
    %2892 = vmatpush1.bf16.msra.mxu0 0
    %2893 = vmatprep.subr.bf16.mxu0 0
    %2894 = vmatpush1.bf16.msra.mxu0 0
    %2895 = vmatprep.subr.bf16.mxu0 0
    %2896 = vmatpush1.bf16.msra.mxu0 0
    %2897 = vmatprep.subr.bf16.mxu0 0
    %2898 = vmatpush1.bf16.msra.mxu0 0
    %2899 = vmatprep.subr.bf16.mxu0 0
    %2900 = vmatpush1.bf16.msra.mxu0 0
    %2901 = vmatprep.subr.bf16.mxu0 0
    %2902 = vmatpush1.bf16.msra.mxu0 0
    %2903 = vmatprep.subr.bf16.mxu0 0
    %2904 = vmatpush1.bf16.msra.mxu0 0
    %2905 = vmatprep.subr.bf16.mxu0 %v2041
    %2906 = vmatpush1.bf16.msra.mxu0 %v2040
    %2907 = vmatprep.subr.bf16.mxu0 0
    %2908 = vmatpush2.bf16.msra.mxu0 0
    %2909 = vmatprep.subr.bf16.mxu0 0
    %2910 = vmatpush2.bf16.msra.mxu0 0
    %2911 = vmatprep.subr.bf16.mxu0 0
    %2912 = vmatpush2.bf16.msra.mxu0 0
    %2913 = vmatprep.subr.bf16.mxu0 0
    %2914 = vmatpush2.bf16.msra.mxu0 0
    %2915 = vmatprep.subr.bf16.mxu0 0
    %2916 = vmatpush2.bf16.msra.mxu0 0
    %2917 = vmatprep.subr.bf16.mxu0 0
    %2918 = vmatpush2.bf16.msra.mxu0 0
    %2919 = vmatprep.subr.bf16.mxu0 0
    %2920 = vmatpush2.bf16.msra.mxu0 0
    %2921 = vmatprep.subr.bf16.mxu0 0
    %2922 = vmatpush2.bf16.msra.mxu0 0
    %2923 = vmatprep.mubr.bf16.mxu0 0
    %2924 = vmatmul.mubr.bf16.gmra.mxu0 %v2438
    %v2925 = vpop.f32.mrf.mxu0
    %v2926 = vadd.f32 %v2885, %v2925
    %v2927 = vpop.f32.mrf.mxu0
    %v2928 = vadd.f32 %v2887, %v2927
    %v2929 = vpop.f32.mrf.mxu0
    %v2930 = vpop.f32.mrf.mxu0
    %2931 = vdwg.mxu0
    %2932 = vmatprep.subr.bf16.mxu0 %v1715
    %2933 = vmatpush1.bf16.msra.mxu0 %v1714
    %2934 = vmatprep.subr.bf16.mxu0 %v1707
    %2935 = vmatpush1.bf16.msra.mxu0 %v1706
    %2936 = vmatprep.subr.bf16.mxu0 %v1699
    %2937 = vmatpush1.bf16.msra.mxu0 %v1698
    %2938 = vmatprep.subr.bf16.mxu0 %v1691
    %2939 = vmatpush1.bf16.msra.mxu0 %v1690
    %2940 = vmatprep.subr.bf16.mxu0 %v1683
    %2941 = vmatpush1.bf16.msra.mxu0 %v1682
    %2942 = vmatprep.subr.bf16.mxu0 %v1675
    %2943 = vmatpush1.bf16.msra.mxu0 %v1674
    %2944 = vmatprep.subr.bf16.mxu0 %v1667
    %2945 = vmatpush1.bf16.msra.mxu0 %v1666
    %2946 = vmatprep.subr.bf16.mxu0 %v1659
    %2947 = vmatpush1.bf16.msra.mxu0 %v1658
    %2948 = vmatprep.subr.bf16.mxu0 %v1779
    %2949 = vmatpush2.bf16.msra.mxu0 %v1778
    %2950 = vmatprep.subr.bf16.mxu0 %v1771
    %2951 = vmatpush2.bf16.msra.mxu0 %v1770
    %2952 = vmatprep.subr.bf16.mxu0 %v1763
    %2953 = vmatpush2.bf16.msra.mxu0 %v1762
    %2954 = vmatprep.subr.bf16.mxu0 %v1755
    %2955 = vmatpush2.bf16.msra.mxu0 %v1754
    %2956 = vmatprep.subr.bf16.mxu0 %v1747
    %2957 = vmatpush2.bf16.msra.mxu0 %v1746
    %2958 = vmatprep.subr.bf16.mxu0 %v1739
    %2959 = vmatpush2.bf16.msra.mxu0 %v1738
    %2960 = vmatprep.subr.bf16.mxu0 %v1731
    %2961 = vmatpush2.bf16.msra.mxu0 %v1730
    %2962 = vmatprep.subr.bf16.mxu0 %v1723
    %2963 = vmatpush2.bf16.msra.mxu0 %v1722
    %2964 = vmatprep.mubr.bf16.mxu0 %v36
    %2965 = vmatmul.mubr.bf16.gmra.mxu0 %v35
    %v2966 = vpop.f32.mrf.mxu0
    %v2967 = vadd.f32 %v463, %v2966
    %v2968 = vpop.f32.mrf.mxu0
    %v2969 = vadd.f32 %v467, %v2968
    %v2970 = vpop.f32.mrf.mxu0
    %v2971 = vpop.f32.mrf.mxu0
    %2972 = vdwg.mxu0
    %2973 = vmatprep.subr.bf16.mxu0 %v1843
    %2974 = vmatpush1.bf16.msra.mxu0 %v1842
    %2975 = vmatprep.subr.bf16.mxu0 %v1835
    %2976 = vmatpush1.bf16.msra.mxu0 %v1834
    %2977 = vmatprep.subr.bf16.mxu0 %v1827
    %2978 = vmatpush1.bf16.msra.mxu0 %v1826
    %2979 = vmatprep.subr.bf16.mxu0 %v1819
    %2980 = vmatpush1.bf16.msra.mxu0 %v1818
    %2981 = vmatprep.subr.bf16.mxu0 %v1811
    %2982 = vmatpush1.bf16.msra.mxu0 %v1810
    %2983 = vmatprep.subr.bf16.mxu0 %v1803
    %2984 = vmatpush1.bf16.msra.mxu0 %v1802
    %2985 = vmatprep.subr.bf16.mxu0 %v1795
    %2986 = vmatpush1.bf16.msra.mxu0 %v1794
    %2987 = vmatprep.subr.bf16.mxu0 %v1787
    %2988 = vmatpush1.bf16.msra.mxu0 %v1786
    %2989 = vmatprep.subr.bf16.mxu0 %v1907
    %2990 = vmatpush2.bf16.msra.mxu0 %v1906
    %2991 = vmatprep.subr.bf16.mxu0 %v1899
    %2992 = vmatpush2.bf16.msra.mxu0 %v1898
    %2993 = vmatprep.subr.bf16.mxu0 %v1891
    %2994 = vmatpush2.bf16.msra.mxu0 %v1890
    %2995 = vmatprep.subr.bf16.mxu0 %v1883
    %2996 = vmatpush2.bf16.msra.mxu0 %v1882
    %2997 = vmatprep.subr.bf16.mxu0 %v1875
    %2998 = vmatpush2.bf16.msra.mxu0 %v1874
    %2999 = vmatprep.subr.bf16.mxu0 %v1867
    %3000 = vmatpush2.bf16.msra.mxu0 %v1866
    %3001 = vmatprep.subr.bf16.mxu0 %v1859
    %3002 = vmatpush2.bf16.msra.mxu0 %v1858
    %3003 = vmatprep.subr.bf16.mxu0 %v1851
    %3004 = vmatpush2.bf16.msra.mxu0 %v1850
    %3005 = vmatprep.mubr.bf16.mxu0 %v38
    %3006 = vmatmul.mubr.bf16.gmra.mxu0 %v37
    %v3007 = vpop.f32.mrf.mxu0
    %v3008 = vadd.f32 %v2967, %v3007
    %v3009 = vpop.f32.mrf.mxu0
    %v3010 = vadd.f32 %v2969, %v3009
    %v3011 = vpop.f32.mrf.mxu0
    %v3012 = vpop.f32.mrf.mxu0
    %3013 = vdwg.mxu0
    %3014 = vmatprep.subr.bf16.mxu0 %v1971
    %3015 = vmatpush1.bf16.msra.mxu0 %v1970
    %3016 = vmatprep.subr.bf16.mxu0 %v1963
    %3017 = vmatpush1.bf16.msra.mxu0 %v1962
    %3018 = vmatprep.subr.bf16.mxu0 %v1955
    %3019 = vmatpush1.bf16.msra.mxu0 %v1954
    %3020 = vmatprep.subr.bf16.mxu0 %v1947
    %3021 = vmatpush1.bf16.msra.mxu0 %v1946
    %3022 = vmatprep.subr.bf16.mxu0 %v1939
    %3023 = vmatpush1.bf16.msra.mxu0 %v1938
    %3024 = vmatprep.subr.bf16.mxu0 %v1931
    %3025 = vmatpush1.bf16.msra.mxu0 %v1930
    %3026 = vmatprep.subr.bf16.mxu0 %v1923
    %3027 = vmatpush1.bf16.msra.mxu0 %v1922
    %3028 = vmatprep.subr.bf16.mxu0 %v1915
    %3029 = vmatpush1.bf16.msra.mxu0 %v1914
    %3030 = vmatprep.subr.bf16.mxu0 %v2035
    %3031 = vmatpush2.bf16.msra.mxu0 %v2034
    %3032 = vmatprep.subr.bf16.mxu0 %v2027
    %3033 = vmatpush2.bf16.msra.mxu0 %v2026
    %3034 = vmatprep.subr.bf16.mxu0 %v2019
    %3035 = vmatpush2.bf16.msra.mxu0 %v2018
    %3036 = vmatprep.subr.bf16.mxu0 %v2011
    %3037 = vmatpush2.bf16.msra.mxu0 %v2010
    %3038 = vmatprep.subr.bf16.mxu0 %v2003
    %3039 = vmatpush2.bf16.msra.mxu0 %v2002
    %3040 = vmatprep.subr.bf16.mxu0 %v1995
    %3041 = vmatpush2.bf16.msra.mxu0 %v1994
    %3042 = vmatprep.subr.bf16.mxu0 %v1987
    %3043 = vmatpush2.bf16.msra.mxu0 %v1986
    %3044 = vmatprep.subr.bf16.mxu0 %v1979
    %3045 = vmatpush2.bf16.msra.mxu0 %v1978
    %3046 = vmatprep.mubr.bf16.mxu0 %v40
    %3047 = vmatmul.mubr.bf16.gmra.mxu0 %v39
    %v3048 = vpop.f32.mrf.mxu0
    %v3049 = vadd.f32 %v3008, %v3048
    %v3050 = vpop.f32.mrf.mxu0
    %v3051 = vadd.f32 %v3010, %v3050
    %v3052 = vpop.f32.mrf.mxu0
    %v3053 = vpop.f32.mrf.mxu0
    %3054 = vdwg.mxu0
    %3055 = vmatprep.subr.bf16.mxu0 0
    %3056 = vmatpush1.bf16.msra.mxu0 0
    %3057 = vmatprep.subr.bf16.mxu0 0
    %3058 = vmatpush1.bf16.msra.mxu0 0
    %3059 = vmatprep.subr.bf16.mxu0 0
    %3060 = vmatpush1.bf16.msra.mxu0 0
    %3061 = vmatprep.subr.bf16.mxu0 0
    %3062 = vmatpush1.bf16.msra.mxu0 0
    %3063 = vmatprep.subr.bf16.mxu0 0
    %3064 = vmatpush1.bf16.msra.mxu0 0
    %3065 = vmatprep.subr.bf16.mxu0 0
    %3066 = vmatpush1.bf16.msra.mxu0 0
    %3067 = vmatprep.subr.bf16.mxu0 0
    %3068 = vmatpush1.bf16.msra.mxu0 0
    %3069 = vmatprep.subr.bf16.mxu0 %v2043
    %3070 = vmatpush1.bf16.msra.mxu0 %v2042
    %3071 = vmatprep.subr.bf16.mxu0 0
    %3072 = vmatpush2.bf16.msra.mxu0 0
    %3073 = vmatprep.subr.bf16.mxu0 0
    %3074 = vmatpush2.bf16.msra.mxu0 0
    %3075 = vmatprep.subr.bf16.mxu0 0
    %3076 = vmatpush2.bf16.msra.mxu0 0
    %3077 = vmatprep.subr.bf16.mxu0 0
    %3078 = vmatpush2.bf16.msra.mxu0 0
    %3079 = vmatprep.subr.bf16.mxu0 0
    %3080 = vmatpush2.bf16.msra.mxu0 0
    %3081 = vmatprep.subr.bf16.mxu0 0
    %3082 = vmatpush2.bf16.msra.mxu0 0
    %3083 = vmatprep.subr.bf16.mxu0 0
    %3084 = vmatpush2.bf16.msra.mxu0 0
    %3085 = vmatprep.subr.bf16.mxu0 0
    %3086 = vmatpush2.bf16.msra.mxu0 0
    %3087 = vmatprep.mubr.bf16.mxu0 0
    %3088 = vmatmul.mubr.bf16.gmra.mxu0 %v2438
    %v3089 = vpop.f32.mrf.mxu0
    %v3090 = vadd.f32 %v3049, %v3089
    %v3091 = vpop.f32.mrf.mxu0
    %v3092 = vadd.f32 %v3051, %v3091
    %v3093 = vpop.f32.mrf.mxu0
    %v3094 = vpop.f32.mrf.mxu0
    %3095 = vdwg.mxu0
    %v3096 = vmax.f32 %v2598, 0.0
    %v3097 = vmax.f32 %v2600, 0.0
    %v3098 = vmax.f32 %v2762, 0.0
    %v3099 = vmax.f32 %v2764, 0.0
    %v3100 = vmax.f32 %v2926, 0.0
    %v3101 = vmax.f32 %v2928, 0.0
    %v3102 = vmax.f32 %v3090, 0.0
    %v3103 = vmax.f32 %v3092, 0.0
    %v3104 = vpack.c.bf16 %v3096, %v3096
    %v3105 = vpack.c.bf16 %v3097, %v3097
    %v3106 = vpack.c.bf16 %v3098, %v3098
    %v3107 = vpack.c.bf16 %v3099, %v3099
    %v3108 = vpack.c.bf16 %v3100, %v3100
    %v3109 = vpack.c.bf16 %v3101, %v3101
    %v3110 = vpack.c.bf16 %v3102, %v3102
    %v3111 = vpack.c.bf16 %v3103, %v3103
    %v3112 = vld [vmem:[%s3] sm:$0xff]
    %v3113 = vld [vmem:[%s3 + $0x8] sm:$0xff]
    %v3114 = vld [vmem:[%s3 + $0x10] sm:$0xff]
    %v3115 = vld [vmem:[%s3 + $0x18] sm:$0xff]
    %v3116 = vld [vmem:[%s3 + $0x20] sm:$0xff]
    %v3117 = vld [vmem:[%s3 + $0x28] sm:$0xff]
    %v3118 = vld [vmem:[%s3 + $0x30] sm:$0xff]
    %v3119 = vld [vmem:[%s3 + $0x38] sm:$0xff]
    %v3120 = vld [vmem:[%s3 + $0x40] sm:$0xff]
    %v3121 = vld [vmem:[%s3 + $0x48] sm:$0xff]
    %v3122 = vld [vmem:[%s3 + $0x50] sm:$0xff]
    %v3123 = vld [vmem:[%s3 + $0x58] sm:$0xff]
    %v3124 = vld [vmem:[%s3 + $0x60] sm:$0xff]
    %v3125 = vld [vmem:[%s3 + $0x68] sm:$0xff]
    %v3126 = vld [vmem:[%s3 + $0x70] sm:$0xff]
    %v3127 = vld [vmem:[%s3 + $0x78] sm:$0xff]
    %v3128 = vld [vmem:[%s3 + $0x80] sm:$0xff]
    %v3129 = vld [vmem:[%s3 + $0x88] sm:$0xff]
    %v3130 = vld [vmem:[%s3 + $0x90] sm:$0xff]
    %v3131 = vld [vmem:[%s3 + $0x98] sm:$0xff]
    %v3132 = vld [vmem:[%s3 + $0xa0] sm:$0xff]
    %v3133 = vld [vmem:[%s3 + $0xa8] sm:$0xff]
    %v3134 = vld [vmem:[%s3 + $0xb0] sm:$0xff]
    %v3135 = vld [vmem:[%s3 + $0xb8] sm:$0xff]
    %v3136 = vld [vmem:[%s3 + $0xc0] sm:$0xff]
    %v3137 = vld [vmem:[%s3 + $0xc8] sm:$0xff]
    %v3138 = vld [vmem:[%s3 + $0xd0] sm:$0xff]
    %v3139 = vld [vmem:[%s3 + $0xd8] sm:$0xff]
    %v3140 = vld [vmem:[%s3 + $0xe0] sm:$0xff]
    %v3141 = vld [vmem:[%s3 + $0xe8] sm:$0xff]
    %v3142 = vld [vmem:[%s3 + $0xf0] sm:$0xff]
    %v3143 = vld [vmem:[%s3 + $0xf8] sm:$0xff]
    %v3144 = vld [vmem:[%s3 + $0x100] sm:$0xff]
    %v3145 = vld [vmem:[%s3 + $0x108] sm:$0xff]
    %v3146 = vld [vmem:[%s3 + $0x110] sm:$0xff]
    %v3147 = vld [vmem:[%s3 + $0x118] sm:$0xff]
    %v3148 = vld [vmem:[%s3 + $0x120] sm:$0xff]
    %v3149 = vld [vmem:[%s3 + $0x128] sm:$0xff]
    %v3150 = vld [vmem:[%s3 + $0x130] sm:$0xff]
    %v3151 = vld [vmem:[%s3 + $0x138] sm:$0xff]
    %v3152 = vld [vmem:[%s3 + $0x140] sm:$0xff]
    %v3153 = vld [vmem:[%s3 + $0x148] sm:$0xff]
    %v3154 = vld [vmem:[%s3 + $0x150] sm:$0xff]
    %v3155 = vld [vmem:[%s3 + $0x158] sm:$0xff]
    %v3156 = vld [vmem:[%s3 + $0x160] sm:$0xff]
    %v3157 = vld [vmem:[%s3 + $0x168] sm:$0xff]
    %v3158 = vld [vmem:[%s3 + $0x170] sm:$0xff]
    %v3159 = vld [vmem:[%s3 + $0x178] sm:$0xff]
    %v3160 = vld [vmem:[%s3 + $0x180] sm:$0xff]
    %v3161 = vld [vmem:[%s3 + $0x188] sm:$0xff]
    %v3162 = vld [vmem:[%s3 + $0x190] sm:$0xff]
    %v3163 = vld [vmem:[%s3 + $0x198] sm:$0xff]
    %v3164 = vld [vmem:[%s3 + $0x1a0] sm:$0xff]
    %v3165 = vld [vmem:[%s3 + $0x1a8] sm:$0xff]
    %v3166 = vld [vmem:[%s3 + $0x1b0] sm:$0xff]
    %v3167 = vld [vmem:[%s3 + $0x1b8] sm:$0xff]
    %v3168 = vld [vmem:[%s3 + $0x1c0] sm:$0xff]
    %v3169 = vld [vmem:[%s3 + $0x1c8] sm:$0xff]
    %v3170 = vld [vmem:[%s3 + $0x1d0] sm:$0xff]
    %v3171 = vld [vmem:[%s3 + $0x1d8] sm:$0xff]
    %v3172 = vld [vmem:[%s3 + $0x1e0] sm:$0xff]
    %v3173 = vld [vmem:[%s3 + $0x1e8] sm:$0xff]
    %v3174 = vld [vmem:[%s3 + $0x1f0] sm:$0xff]
    %v3175 = vld [vmem:[%s3 + $0x1f8] sm:$0xff]
    %v3176 = vld [vmem:[%s3 + $0x200] sm:$0xff]
    %v3177 = vld [vmem:[%s3 + $0x208] sm:$0xff]
    %v3178 = vld [vmem:[%s3 + $0x210] sm:$0xff]
    %v3179 = vld [vmem:[%s3 + $0x218] sm:$0xff]
    %v3180 = vld [vmem:[%s3 + $0x220] sm:$0xff]
    %v3181 = vld [vmem:[%s3 + $0x228] sm:$0xff]
    %v3182 = vld [vmem:[%s3 + $0x230] sm:$0xff]
    %v3183 = vld [vmem:[%s3 + $0x238] sm:$0xff]
    %v3184 = vld [vmem:[%s3 + $0x240] sm:$0xff]
    %v3185 = vld [vmem:[%s3 + $0x248] sm:$0xff]
    %v3186 = vld [vmem:[%s3 + $0x250] sm:$0xff]
    %v3187 = vld [vmem:[%s3 + $0x258] sm:$0xff]
    %v3188 = vld [vmem:[%s3 + $0x260] sm:$0xff]
    %v3189 = vld [vmem:[%s3 + $0x268] sm:$0xff]
    %v3190 = vld [vmem:[%s3 + $0x270] sm:$0xff]
    %v3191 = vld [vmem:[%s3 + $0x278] sm:$0xff]
    %v3192 = vld [vmem:[%s3 + $0x280] sm:$0xff]
    %v3193 = vld [vmem:[%s3 + $0x288] sm:$0xff]
    %v3194 = vld [vmem:[%s3 + $0x290] sm:$0xff]
    %v3195 = vld [vmem:[%s3 + $0x298] sm:$0xff]
    %v3196 = vld [vmem:[%s3 + $0x2a0] sm:$0xff]
    %v3197 = vld [vmem:[%s3 + $0x2a8] sm:$0xff]
    %v3198 = vld [vmem:[%s3 + $0x2b0] sm:$0xff]
    %v3199 = vld [vmem:[%s3 + $0x2b8] sm:$0xff]
    %v3200 = vld [vmem:[%s3 + $0x2c0] sm:$0xff]
    %v3201 = vld [vmem:[%s3 + $0x2c8] sm:$0xff]
    %v3202 = vld [vmem:[%s3 + $0x2d0] sm:$0xff]
    %v3203 = vld [vmem:[%s3 + $0x2d8] sm:$0xff]
    %v3204 = vld [vmem:[%s3 + $0x2e0] sm:$0xff]
    %v3205 = vld [vmem:[%s3 + $0x2e8] sm:$0xff]
    %v3206 = vld [vmem:[%s3 + $0x2f0] sm:$0xff]
    %v3207 = vld [vmem:[%s3 + $0x2f8] sm:$0xff]
    %v3208 = vld [vmem:[%s3 + $0x300] sm:$0xff]
    %v3209 = vld [vmem:[%s3 + $0x308] sm:$0xff]
    %v3210 = vld [vmem:[%s3 + $0x310] sm:$0xff]
    %v3211 = vld [vmem:[%s3 + $0x318] sm:$0xff]
    %v3212 = vld [vmem:[%s3 + $0x320] sm:$0xff]
    %v3213 = vld [vmem:[%s3 + $0x328] sm:$0xff]
    %v3214 = vld [vmem:[%s3 + $0x330] sm:$0xff]
    %v3215 = vld [vmem:[%s3 + $0x338] sm:$0xff]
    %v3216 = vld [vmem:[%s3 + $0x340] sm:$0xff]
    %v3217 = vld [vmem:[%s3 + $0x348] sm:$0xff]
    %v3218 = vld [vmem:[%s3 + $0x350] sm:$0xff]
    %v3219 = vld [vmem:[%s3 + $0x358] sm:$0xff]
    %v3220 = vld [vmem:[%s3 + $0x360] sm:$0xff]
    %v3221 = vld [vmem:[%s3 + $0x368] sm:$0xff]
    %v3222 = vld [vmem:[%s3 + $0x370] sm:$0xff]
    %v3223 = vld [vmem:[%s3 + $0x378] sm:$0xff]
    %v3224 = vld [vmem:[%s3 + $0x380] sm:$0xff]
    %v3225 = vld [vmem:[%s3 + $0x388] sm:$0xff]
    %v3226 = vld [vmem:[%s3 + $0x390] sm:$0xff]
    %v3227 = vld [vmem:[%s3 + $0x398] sm:$0xff]
    %v3228 = vld [vmem:[%s3 + $0x3a0] sm:$0xff]
    %v3229 = vld [vmem:[%s3 + $0x3a8] sm:$0xff]
    %v3230 = vld [vmem:[%s3 + $0x3b0] sm:$0xff]
    %v3231 = vld [vmem:[%s3 + $0x3b8] sm:$0xff]
    %v3232 = vld [vmem:[%s3 + $0x3c0] sm:$0xff]
    %v3233 = vld [vmem:[%s3 + $0x3c8] sm:$0xff]
    %v3234 = vld [vmem:[%s3 + $0x3d0] sm:$0xff]
    %v3235 = vld [vmem:[%s3 + $0x3d8] sm:$0xff]
    %v3236 = vld [vmem:[%s3 + $0x3e0] sm:$0xff]
    %v3237 = vld [vmem:[%s3 + $0x3e8] sm:$0xff]
    %v3238 = vld [vmem:[%s3 + $0x3f0] sm:$0xff]
    %v3239 = vld [vmem:[%s3 + $0x3f8] sm:$0xff]
    %v3240 = vld [vmem:[%s3 + $0x400] sm:$0xff]
    %v3241 = vld [vmem:[%s3 + $0x408] sm:$0xff]
    %v3242 = vld [vmem:[%s3 + $0x410] sm:$0xff]
    %v3243 = vld [vmem:[%s3 + $0x418] sm:$0xff]
    %v3244 = vld [vmem:[%s3 + $0x420] sm:$0xff]
    %v3245 = vld [vmem:[%s3 + $0x428] sm:$0xff]
    %v3246 = vld [vmem:[%s3 + $0x430] sm:$0xff]
    %v3247 = vld [vmem:[%s3 + $0x438] sm:$0xff]
    %v3248 = vld [vmem:[%s3 + $0x440] sm:$0xff]
    %v3249 = vld [vmem:[%s3 + $0x448] sm:$0xff]
    %v3250 = vld [vmem:[%s3 + $0x450] sm:$0xff]
    %v3251 = vld [vmem:[%s3 + $0x458] sm:$0xff]
    %v3252 = vld [vmem:[%s3 + $0x460] sm:$0xff]
    %v3253 = vld [vmem:[%s3 + $0x468] sm:$0xff]
    %v3254 = vld [vmem:[%s3 + $0x470] sm:$0xff]
    %v3255 = vld [vmem:[%s3 + $0x478] sm:$0xff]
    %v3256 = vld [vmem:[%s3 + $0x480] sm:$0xff]
    %v3257 = vld [vmem:[%s3 + $0x488] sm:$0xff]
    %v3258 = vld [vmem:[%s3 + $0x490] sm:$0xff]
    %v3259 = vld [vmem:[%s3 + $0x498] sm:$0xff]
    %v3260 = vld [vmem:[%s3 + $0x4a0] sm:$0xff]
    %v3261 = vld [vmem:[%s3 + $0x4a8] sm:$0xff]
    %v3262 = vld [vmem:[%s3 + $0x4b0] sm:$0xff]
    %v3263 = vld [vmem:[%s3 + $0x4b8] sm:$0xff]
    %v3264 = vld [vmem:[%s3 + $0x4c0] sm:$0xff]
    %v3265 = vld [vmem:[%s3 + $0x4c8] sm:$0xff]
    %v3266 = vld [vmem:[%s3 + $0x4d0] sm:$0xff]
    %v3267 = vld [vmem:[%s3 + $0x4d8] sm:$0xff]
    %v3268 = vld [vmem:[%s3 + $0x4e0] sm:$0xff]
    %v3269 = vld [vmem:[%s3 + $0x4e8] sm:$0xff]
    %v3270 = vld [vmem:[%s3 + $0x4f0] sm:$0xff]
    %v3271 = vld [vmem:[%s3 + $0x4f8] sm:$0xff]
    %v3272 = vld [vmem:[%s3 + $0x500] sm:$0xff]
    %v3273 = vld [vmem:[%s3 + $0x508] sm:$0xff]
    %v3274 = vld [vmem:[%s3 + $0x510] sm:$0xff]
    %v3275 = vld [vmem:[%s3 + $0x518] sm:$0xff]
    %v3276 = vld [vmem:[%s3 + $0x520] sm:$0xff]
    %v3277 = vld [vmem:[%s3 + $0x528] sm:$0xff]
    %v3278 = vld [vmem:[%s3 + $0x530] sm:$0xff]
    %v3279 = vld [vmem:[%s3 + $0x538] sm:$0xff]
    %v3280 = vld [vmem:[%s3 + $0x540] sm:$0xff]
    %v3281 = vld [vmem:[%s3 + $0x548] sm:$0xff]
    %v3282 = vld [vmem:[%s3 + $0x550] sm:$0xff]
    %v3283 = vld [vmem:[%s3 + $0x558] sm:$0xff]
    %v3284 = vld [vmem:[%s3 + $0x560] sm:$0xff]
    %v3285 = vld [vmem:[%s3 + $0x568] sm:$0xff]
    %v3286 = vld [vmem:[%s3 + $0x570] sm:$0xff]
    %v3287 = vld [vmem:[%s3 + $0x578] sm:$0xff]
    %v3288 = vld [vmem:[%s3 + $0x580] sm:$0xff]
    %v3289 = vld [vmem:[%s3 + $0x588] sm:$0xff]
    %v3290 = vld [vmem:[%s3 + $0x590] sm:$0xff]
    %v3291 = vld [vmem:[%s3 + $0x598] sm:$0xff]
    %v3292 = vld [vmem:[%s3 + $0x5a0] sm:$0xff]
    %v3293 = vld [vmem:[%s3 + $0x5a8] sm:$0xff]
    %v3294 = vld [vmem:[%s3 + $0x5b0] sm:$0xff]
    %v3295 = vld [vmem:[%s3 + $0x5b8] sm:$0xff]
    %v3296 = vld [vmem:[%s3 + $0x5c0] sm:$0xff]
    %v3297 = vld [vmem:[%s3 + $0x5c8] sm:$0xff]
    %v3298 = vld [vmem:[%s3 + $0x5d0] sm:$0xff]
    %v3299 = vld [vmem:[%s3 + $0x5d8] sm:$0xff]
    %v3300 = vld [vmem:[%s3 + $0x5e0] sm:$0xff]
    %v3301 = vld [vmem:[%s3 + $0x5e8] sm:$0xff]
    %v3302 = vld [vmem:[%s3 + $0x5f0] sm:$0xff]
    %v3303 = vld [vmem:[%s3 + $0x5f8] sm:$0xff]
    %v3304 = vld [vmem:[%s3 + $0x600] sm:$0xff]
    %v3305 = vld [vmem:[%s3 + $0x608] sm:$0xff]
    %v3306 = vld [vmem:[%s3 + $0x610] sm:$0xff]
    %v3307 = vld [vmem:[%s3 + $0x618] sm:$0xff]
    %v3308 = vld [vmem:[%s3 + $0x620] sm:$0xff]
    %v3309 = vld [vmem:[%s3 + $0x628] sm:$0xff]
    %v3310 = vld [vmem:[%s3 + $0x630] sm:$0xff]
    %v3311 = vld [vmem:[%s3 + $0x638] sm:$0xff]
    %v3312 = vld [vmem:[%s3 + $0x640] sm:$0xff]
    %v3313 = vld [vmem:[%s3 + $0x648] sm:$0xff]
    %v3314 = vld [vmem:[%s3 + $0x650] sm:$0xff]
    %v3315 = vld [vmem:[%s3 + $0x658] sm:$0xff]
    %v3316 = vld [vmem:[%s3 + $0x660] sm:$0xff]
    %v3317 = vld [vmem:[%s3 + $0x668] sm:$0xff]
    %v3318 = vld [vmem:[%s3 + $0x670] sm:$0xff]
    %v3319 = vld [vmem:[%s3 + $0x678] sm:$0xff]
    %v3320 = vld [vmem:[%s3 + $0x680] sm:$0xff]
    %v3321 = vld [vmem:[%s3 + $0x688] sm:$0xff]
    %v3322 = vld [vmem:[%s3 + $0x690] sm:$0xff]
    %v3323 = vld [vmem:[%s3 + $0x698] sm:$0xff]
    %v3324 = vld [vmem:[%s3 + $0x6a0] sm:$0xff]
    %v3325 = vld [vmem:[%s3 + $0x6a8] sm:$0xff]
    %v3326 = vld [vmem:[%s3 + $0x6b0] sm:$0xff]
    %v3327 = vld [vmem:[%s3 + $0x6b8] sm:$0xff]
    %v3328 = vld [vmem:[%s3 + $0x6c0] sm:$0xff]
    %v3329 = vld [vmem:[%s3 + $0x6c8] sm:$0xff]
    %v3330 = vld [vmem:[%s3 + $0x6d0] sm:$0xff]
    %v3331 = vld [vmem:[%s3 + $0x6d8] sm:$0xff]
    %v3332 = vld [vmem:[%s3 + $0x6e0] sm:$0xff]
    %v3333 = vld [vmem:[%s3 + $0x6e8] sm:$0xff]
    %v3334 = vld [vmem:[%s3 + $0x6f0] sm:$0xff]
    %v3335 = vld [vmem:[%s3 + $0x6f8] sm:$0xff]
    %v3336 = vld [vmem:[%s3 + $0x700] sm:$0xff]
    %v3337 = vld [vmem:[%s3 + $0x708] sm:$0xff]
    %v3338 = vld [vmem:[%s3 + $0x710] sm:$0xff]
    %v3339 = vld [vmem:[%s3 + $0x718] sm:$0xff]
    %v3340 = vld [vmem:[%s3 + $0x720] sm:$0xff]
    %v3341 = vld [vmem:[%s3 + $0x728] sm:$0xff]
    %v3342 = vld [vmem:[%s3 + $0x730] sm:$0xff]
    %v3343 = vld [vmem:[%s3 + $0x738] sm:$0xff]
    %v3344 = vld [vmem:[%s3 + $0x740] sm:$0xff]
    %v3345 = vld [vmem:[%s3 + $0x748] sm:$0xff]
    %v3346 = vld [vmem:[%s3 + $0x750] sm:$0xff]
    %v3347 = vld [vmem:[%s3 + $0x758] sm:$0xff]
    %v3348 = vld [vmem:[%s3 + $0x760] sm:$0xff]
    %v3349 = vld [vmem:[%s3 + $0x768] sm:$0xff]
    %v3350 = vld [vmem:[%s3 + $0x770] sm:$0xff]
    %v3351 = vld [vmem:[%s3 + $0x778] sm:$0xff]
    %v3352 = vld [vmem:[%s3 + $0x780] sm:$0xff]
    %v3353 = vld [vmem:[%s3 + $0x788] sm:$0xff]
    %v3354 = vld [vmem:[%s3 + $0x790] sm:$0xff]
    %v3355 = vld [vmem:[%s3 + $0x798] sm:$0xff]
    %v3356 = vld [vmem:[%s3 + $0x7a0] sm:$0xff]
    %v3357 = vld [vmem:[%s3 + $0x7a8] sm:$0xff]
    %v3358 = vld [vmem:[%s3 + $0x7b0] sm:$0xff]
    %v3359 = vld [vmem:[%s3 + $0x7b8] sm:$0xff]
    %v3360 = vld [vmem:[%s3 + $0x7c0] sm:$0xff]
    %v3361 = vld [vmem:[%s3 + $0x7c8] sm:$0xff]
    %v3362 = vld [vmem:[%s3 + $0x7d0] sm:$0xff]
    %v3363 = vld [vmem:[%s3 + $0x7d8] sm:$0xff]
    %v3364 = vld [vmem:[%s3 + $0x7e0] sm:$0xff]
    %v3365 = vld [vmem:[%s3 + $0x7e8] sm:$0xff]
    %v3366 = vld [vmem:[%s3 + $0x7f0] sm:$0xff]
    %v3367 = vld [vmem:[%s3 + $0x7f8] sm:$0xff]
    %v3368 = vld [vmem:[%s3 + $0x800] sm:$0xff]
    %v3369 = vld [vmem:[%s3 + $0x808] sm:$0xff]
    %v3370 = vld [vmem:[%s3 + $0x810] sm:$0xff]
    %v3371 = vld [vmem:[%s3 + $0x818] sm:$0xff]
    %v3372 = vld [vmem:[%s3 + $0x820] sm:$0xff]
    %v3373 = vld [vmem:[%s3 + $0x828] sm:$0xff]
    %v3374 = vld [vmem:[%s3 + $0x830] sm:$0xff]
    %v3375 = vld [vmem:[%s3 + $0x838] sm:$0xff]
    %v3376 = vld [vmem:[%s3 + $0x840] sm:$0xff]
    %v3377 = vld [vmem:[%s3 + $0x848] sm:$0xff]
    %v3378 = vld [vmem:[%s3 + $0x850] sm:$0xff]
    %v3379 = vld [vmem:[%s3 + $0x858] sm:$0xff]
    %v3380 = vld [vmem:[%s3 + $0x860] sm:$0xff]
    %v3381 = vld [vmem:[%s3 + $0x868] sm:$0xff]
    %v3382 = vld [vmem:[%s3 + $0x870] sm:$0xff]
    %v3383 = vld [vmem:[%s3 + $0x878] sm:$0xff]
    %v3384 = vld [vmem:[%s3 + $0x880] sm:$0xff]
    %v3385 = vld [vmem:[%s3 + $0x888] sm:$0xff]
    %v3386 = vld [vmem:[%s3 + $0x890] sm:$0xff]
    %v3387 = vld [vmem:[%s3 + $0x898] sm:$0xff]
    %v3388 = vld [vmem:[%s3 + $0x8a0] sm:$0xff]
    %v3389 = vld [vmem:[%s3 + $0x8a8] sm:$0xff]
    %v3390 = vld [vmem:[%s3 + $0x8b0] sm:$0xff]
    %v3391 = vld [vmem:[%s3 + $0x8b8] sm:$0xff]
    %v3392 = vld [vmem:[%s3 + $0x8c0] sm:$0xff]
    %v3393 = vld [vmem:[%s3 + $0x8c8] sm:$0xff]
    %v3394 = vld [vmem:[%s3 + $0x8d0] sm:$0xff]
    %v3395 = vld [vmem:[%s3 + $0x8d8] sm:$0xff]
    %v3396 = vld [vmem:[%s3 + $0x8e0] sm:$0xff]
    %v3397 = vld [vmem:[%s3 + $0x8e8] sm:$0xff]
    %v3398 = vld [vmem:[%s3 + $0x8f0] sm:$0xff]
    %v3399 = vld [vmem:[%s3 + $0x8f8] sm:$0xff]
    %v3400 = vld [vmem:[%s3 + $0x900] sm:$0xff]
    %v3401 = vld [vmem:[%s3 + $0x908] sm:$0xff]
    %v3402 = vld [vmem:[%s3 + $0x910] sm:$0xff]
    %v3403 = vld [vmem:[%s3 + $0x918] sm:$0xff]
    %v3404 = vld [vmem:[%s3 + $0x920] sm:$0xff]
    %v3405 = vld [vmem:[%s3 + $0x928] sm:$0xff]
    %v3406 = vld [vmem:[%s3 + $0x930] sm:$0xff]
    %v3407 = vld [vmem:[%s3 + $0x938] sm:$0xff]
    %v3408 = vld [vmem:[%s3 + $0x940] sm:$0xff]
    %v3409 = vld [vmem:[%s3 + $0x948] sm:$0xff]
    %v3410 = vld [vmem:[%s3 + $0x950] sm:$0xff]
    %v3411 = vld [vmem:[%s3 + $0x958] sm:$0xff]
    %v3412 = vld [vmem:[%s3 + $0x960] sm:$0xff]
    %v3413 = vld [vmem:[%s3 + $0x968] sm:$0xff]
    %v3414 = vld [vmem:[%s3 + $0x970] sm:$0xff]
    %v3415 = vld [vmem:[%s3 + $0x978] sm:$0xff]
    %v3416 = vld [vmem:[%s3 + $0x980] sm:$0xff]
    %v3417 = vld [vmem:[%s3 + $0x988] sm:$0xff]
    %v3418 = vld [vmem:[%s3 + $0x990] sm:$0xff]
    %v3419 = vld [vmem:[%s3 + $0x998] sm:$0xff]
    %v3420 = vld [vmem:[%s3 + $0x9a0] sm:$0xff]
    %v3421 = vld [vmem:[%s3 + $0x9a8] sm:$0xff]
    %v3422 = vld [vmem:[%s3 + $0x9b0] sm:$0xff]
    %v3423 = vld [vmem:[%s3 + $0x9b8] sm:$0xff]
    %v3424 = vld [vmem:[%s3 + $0x9c0] sm:$0xff]
    %v3425 = vld [vmem:[%s3 + $0x9c8] sm:$0xff]
    %v3426 = vld [vmem:[%s3 + $0x9d0] sm:$0xff]
    %v3427 = vld [vmem:[%s3 + $0x9d8] sm:$0xff]
    %v3428 = vld [vmem:[%s3 + $0x9e0] sm:$0xff]
    %v3429 = vld [vmem:[%s3 + $0x9e8] sm:$0xff]
    %v3430 = vld [vmem:[%s3 + $0x9f0] sm:$0xff]
    %v3431 = vld [vmem:[%s3 + $0x9f8] sm:$0xff]
    %v3432 = vld [vmem:[%s3 + $0xa00] sm:$0xff]
    %v3433 = vld [vmem:[%s3 + $0xa08] sm:$0xff]
    %v3434 = vld [vmem:[%s3 + $0xa10] sm:$0xff]
    %v3435 = vld [vmem:[%s3 + $0xa18] sm:$0xff]
    %v3436 = vld [vmem:[%s3 + $0xa20] sm:$0xff]
    %v3437 = vld [vmem:[%s3 + $0xa28] sm:$0xff]
    %v3438 = vld [vmem:[%s3 + $0xa30] sm:$0xff]
    %v3439 = vld [vmem:[%s3 + $0xa38] sm:$0xff]
    %v3440 = vld [vmem:[%s3 + $0xa40] sm:$0xff]
    %v3441 = vld [vmem:[%s3 + $0xa48] sm:$0xff]
    %v3442 = vld [vmem:[%s3 + $0xa50] sm:$0xff]
    %v3443 = vld [vmem:[%s3 + $0xa58] sm:$0xff]
    %v3444 = vld [vmem:[%s3 + $0xa60] sm:$0xff]
    %v3445 = vld [vmem:[%s3 + $0xa68] sm:$0xff]
    %v3446 = vld [vmem:[%s3 + $0xa70] sm:$0xff]
    %v3447 = vld [vmem:[%s3 + $0xa78] sm:$0xff]
    %v3448 = vld [vmem:[%s3 + $0xa80] sm:$0xff]
    %v3449 = vld [vmem:[%s3 + $0xa88] sm:$0xff]
    %v3450 = vld [vmem:[%s3 + $0xa90] sm:$0xff]
    %v3451 = vld [vmem:[%s3 + $0xa98] sm:$0xff]
    %v3452 = vld [vmem:[%s3 + $0xaa0] sm:$0xff]
    %v3453 = vld [vmem:[%s3 + $0xaa8] sm:$0xff]
    %v3454 = vld [vmem:[%s3 + $0xab0] sm:$0xff]
    %v3455 = vld [vmem:[%s3 + $0xab8] sm:$0xff]
    %v3456 = vld [vmem:[%s3 + $0xac0] sm:$0xff]
    %v3457 = vld [vmem:[%s3 + $0xac8] sm:$0xff]
    %v3458 = vld [vmem:[%s3 + $0xad0] sm:$0xff]
    %v3459 = vld [vmem:[%s3 + $0xad8] sm:$0xff]
    %v3460 = vld [vmem:[%s3 + $0xae0] sm:$0xff]
    %v3461 = vld [vmem:[%s3 + $0xae8] sm:$0xff]
    %v3462 = vld [vmem:[%s3 + $0xaf0] sm:$0xff]
    %v3463 = vld [vmem:[%s3 + $0xaf8] sm:$0xff]
    %v3464 = vld [vmem:[%s3 + $0xb00] sm:$0xff]
    %v3465 = vld [vmem:[%s3 + $0xb08] sm:$0xff]
    %v3466 = vld [vmem:[%s3 + $0xb10] sm:$0xff]
    %v3467 = vld [vmem:[%s3 + $0xb18] sm:$0xff]
    %v3468 = vld [vmem:[%s3 + $0xb20] sm:$0xff]
    %v3469 = vld [vmem:[%s3 + $0xb28] sm:$0xff]
    %v3470 = vld [vmem:[%s3 + $0xb30] sm:$0xff]
    %v3471 = vld [vmem:[%s3 + $0xb38] sm:$0xff]
    %v3472 = vld [vmem:[%s3 + $0xb40] sm:$0xff]
    %v3473 = vld [vmem:[%s3 + $0xb48] sm:$0xff]
    %v3474 = vld [vmem:[%s3 + $0xb50] sm:$0xff]
    %v3475 = vld [vmem:[%s3 + $0xb58] sm:$0xff]
    %v3476 = vld [vmem:[%s3 + $0xb60] sm:$0xff]
    %v3477 = vld [vmem:[%s3 + $0xb68] sm:$0xff]
    %v3478 = vld [vmem:[%s3 + $0xb70] sm:$0xff]
    %v3479 = vld [vmem:[%s3 + $0xb78] sm:$0xff]
    %v3480 = vld [vmem:[%s3 + $0xb80] sm:$0xff]
    %v3481 = vld [vmem:[%s3 + $0xb88] sm:$0xff]
    %v3482 = vld [vmem:[%s3 + $0xb90] sm:$0xff]
    %v3483 = vld [vmem:[%s3 + $0xb98] sm:$0xff]
    %v3484 = vld [vmem:[%s3 + $0xba0] sm:$0xff]
    %v3485 = vld [vmem:[%s3 + $0xba8] sm:$0xff]
    %v3486 = vld [vmem:[%s3 + $0xbb0] sm:$0xff]
    %v3487 = vld [vmem:[%s3 + $0xbb8] sm:$0xff]
    %v3488 = vld [vmem:[%s3 + $0xbc0] sm:$0xff]
    %v3489 = vld [vmem:[%s3 + $0xbc8] sm:$0xff]
    %v3490 = vld [vmem:[%s3 + $0xbd0] sm:$0xff]
    %v3491 = vld [vmem:[%s3 + $0xbd8] sm:$0xff]
    %v3492 = vld [vmem:[%s3 + $0xbe0] sm:$0xff]
    %v3493 = vld [vmem:[%s3 + $0xbe8] sm:$0xff]
    %v3494 = vld [vmem:[%s3 + $0xbf0] sm:$0xff]
    %v3495 = vld [vmem:[%s3 + $0xbf8] sm:$0xff]
    %v3496 = vld [vmem:[%s3 + $0xc00] sm:$0xff]
    %v3497 = vld [vmem:[%s3 + $0xc08] sm:$0xff]
    %v3498 = vld [vmem:[%s3 + $0xc10] sm:$0xff]
    %v3499 = vld [vmem:[%s3 + $0xc18] sm:$0xff]
    %v3500 = vld [vmem:[%s3 + $0xc20] sm:$0xff]
    %v3501 = vld [vmem:[%s3 + $0xc28] sm:$0xff]
    %v3502 = vld [vmem:[%s3 + $0xc30] sm:$0xff]
    %v3503 = vld [vmem:[%s3 + $0xc38] sm:$0xff]
    %v3504 = vld [vmem:[%s3 + $0xc40] sm:$0xff]
    %v3505 = vld [vmem:[%s3 + $0xc48] sm:$0xff]
    %v3506 = vld [vmem:[%s3 + $0xc50] sm:$0xff]
    %v3507 = vld [vmem:[%s3 + $0xc58] sm:$0xff]
    %v3508 = vld [vmem:[%s3 + $0xc60] sm:$0xff]
    %v3509 = vld [vmem:[%s3 + $0xc68] sm:$0xff]
    %v3510 = vld [vmem:[%s3 + $0xc70] sm:$0xff]
    %v3511 = vld [vmem:[%s3 + $0xc78] sm:$0xff]
    %v3512 = vld [vmem:[%s3 + $0xc80] sm:$0xff]
    %v3513 = vld [vmem:[%s3 + $0xc88] sm:$0xff]
    %v3514 = vld [vmem:[%s3 + $0xc90] sm:$0xff]
    %v3515 = vld [vmem:[%s3 + $0xc98] sm:$0xff]
    %v3516 = vld [vmem:[%s3 + $0xca0] sm:$0xff]
    %v3517 = vld [vmem:[%s3 + $0xca8] sm:$0xff]
    %v3518 = vld [vmem:[%s3 + $0xcb0] sm:$0xff]
    %v3519 = vld [vmem:[%s3 + $0xcb8] sm:$0xff]
    %v3520 = vld [vmem:[%s3 + $0xcc0] sm:$0xff]
    %v3521 = vld [vmem:[%s3 + $0xcc8] sm:$0xff]
    %v3522 = vld [vmem:[%s3 + $0xcd0] sm:$0xff]
    %v3523 = vld [vmem:[%s3 + $0xcd8] sm:$0xff]
    %v3524 = vld [vmem:[%s3 + $0xce0] sm:$0xff]
    %v3525 = vld [vmem:[%s3 + $0xce8] sm:$0xff]
    %v3526 = vld [vmem:[%s3 + $0xcf0] sm:$0xff]
    %v3527 = vld [vmem:[%s3 + $0xcf8] sm:$0xff]
    %v3528 = vld [vmem:[%s3 + $0xd00] sm:$0xff]
    %v3529 = vld [vmem:[%s3 + $0xd08] sm:$0xff]
    %v3530 = vld [vmem:[%s3 + $0xd10] sm:$0xff]
    %v3531 = vld [vmem:[%s3 + $0xd18] sm:$0xff]
    %v3532 = vld [vmem:[%s3 + $0xd20] sm:$0xff]
    %v3533 = vld [vmem:[%s3 + $0xd28] sm:$0xff]
    %v3534 = vld [vmem:[%s3 + $0xd30] sm:$0xff]
    %v3535 = vld [vmem:[%s3 + $0xd38] sm:$0xff]
    %v3536 = vld [vmem:[%s3 + $0xd40] sm:$0xff]
    %v3537 = vld [vmem:[%s3 + $0xd48] sm:$0xff]
    %v3538 = vld [vmem:[%s3 + $0xd50] sm:$0xff]
    %v3539 = vld [vmem:[%s3 + $0xd58] sm:$0xff]
    %v3540 = vld [vmem:[%s3 + $0xd60] sm:$0xff]
    %v3541 = vld [vmem:[%s3 + $0xd68] sm:$0xff]
    %v3542 = vld [vmem:[%s3 + $0xd70] sm:$0xff]
    %v3543 = vld [vmem:[%s3 + $0xd78] sm:$0xff]
    %v3544 = vld [vmem:[%s3 + $0xd80] sm:$0xff]
    %v3545 = vld [vmem:[%s3 + $0xd88] sm:$0xff]
    %v3546 = vld [vmem:[%s3 + $0xd90] sm:$0xff]
    %v3547 = vld [vmem:[%s3 + $0xd98] sm:$0xff]
    %v3548 = vld [vmem:[%s3 + $0xda0] sm:$0xff]
    %v3549 = vld [vmem:[%s3 + $0xda8] sm:$0xff]
    %v3550 = vld [vmem:[%s3 + $0xdb0] sm:$0xff]
    %v3551 = vld [vmem:[%s3 + $0xdb8] sm:$0xff]
    %v3552 = vld [vmem:[%s3 + $0xdc0] sm:$0xff]
    %v3553 = vld [vmem:[%s3 + $0xdc8] sm:$0xff]
    %v3554 = vld [vmem:[%s3 + $0xdd0] sm:$0xff]
    %v3555 = vld [vmem:[%s3 + $0xdd8] sm:$0xff]
    %v3556 = vld [vmem:[%s3 + $0xde0] sm:$0xff]
    %v3557 = vld [vmem:[%s3 + $0xde8] sm:$0xff]
    %v3558 = vld [vmem:[%s3 + $0xdf0] sm:$0xff]
    %v3559 = vld [vmem:[%s3 + $0xdf8] sm:$0xff]
    %v3560 = vld [vmem:[%s3 + $0xe00] sm:$0xff]
    %v3561 = vld [vmem:[%s3 + $0xe08] sm:$0xff]
    %v3562 = vld [vmem:[%s3 + $0xe10] sm:$0xff]
    %v3563 = vld [vmem:[%s3 + $0xe18] sm:$0xff]
    %v3564 = vld [vmem:[%s3 + $0xe20] sm:$0xff]
    %v3565 = vld [vmem:[%s3 + $0xe28] sm:$0xff]
    %v3566 = vld [vmem:[%s3 + $0xe30] sm:$0xff]
    %v3567 = vld [vmem:[%s3 + $0xe38] sm:$0xff]
    %v3568 = vld [vmem:[%s3 + $0xe40] sm:$0xff]
    %v3569 = vld [vmem:[%s3 + $0xe48] sm:$0xff]
    %v3570 = vld [vmem:[%s3 + $0xe50] sm:$0xff]
    %v3571 = vld [vmem:[%s3 + $0xe58] sm:$0xff]
    %v3572 = vld [vmem:[%s3 + $0xe60] sm:$0xff]
    %v3573 = vld [vmem:[%s3 + $0xe68] sm:$0xff]
    %v3574 = vld [vmem:[%s3 + $0xe70] sm:$0xff]
    %v3575 = vld [vmem:[%s3 + $0xe78] sm:$0xff]
    %v3576 = vld [vmem:[%s3 + $0xe80] sm:$0xff]
    %v3577 = vld [vmem:[%s3 + $0xe88] sm:$0xff]
    %v3578 = vld [vmem:[%s3 + $0xe90] sm:$0xff]
    %v3579 = vld [vmem:[%s3 + $0xe98] sm:$0xff]
    %v3580 = vld [vmem:[%s3 + $0xea0] sm:$0xff]
    %v3581 = vld [vmem:[%s3 + $0xea8] sm:$0xff]
    %v3582 = vld [vmem:[%s3 + $0xeb0] sm:$0xff]
    %v3583 = vld [vmem:[%s3 + $0xeb8] sm:$0xff]
    %v3584 = vld [vmem:[%s3 + $0xec0] sm:$0xff]
    %v3585 = vld [vmem:[%s3 + $0xec8] sm:$0xff]
    %v3586 = vld [vmem:[%s3 + $0xed0] sm:$0xff]
    %v3587 = vld [vmem:[%s3 + $0xed8] sm:$0xff]
    %v3588 = vld [vmem:[%s3 + $0xee0] sm:$0xff]
    %v3589 = vld [vmem:[%s3 + $0xee8] sm:$0xff]
    %v3590 = vld [vmem:[%s3 + $0xef0] sm:$0xff]
    %v3591 = vld [vmem:[%s3 + $0xef8] sm:$0xff]
    %v3592 = vld [vmem:[%s3 + $0xf00] sm:$0xff]
    %v3593 = vld [vmem:[%s3 + $0xf08] sm:$0xff]
    %v3594 = vld [vmem:[%s3 + $0xf10] sm:$0xff]
    %v3595 = vld [vmem:[%s3 + $0xf18] sm:$0xff]
    %v3596 = vld [vmem:[%s3 + $0xf20] sm:$0xff]
    %v3597 = vld [vmem:[%s3 + $0xf28] sm:$0xff]
    %v3598 = vld [vmem:[%s3 + $0xf30] sm:$0xff]
    %v3599 = vld [vmem:[%s3 + $0xf38] sm:$0xff]
    %v3600 = vld [vmem:[%s3 + $0xf40] sm:$0xff]
    %v3601 = vld [vmem:[%s3 + $0xf48] sm:$0xff]
    %v3602 = vld [vmem:[%s3 + $0xf50] sm:$0xff]
    %v3603 = vld [vmem:[%s3 + $0xf58] sm:$0xff]
    %v3604 = vld [vmem:[%s3 + $0xf60] sm:$0xff]
    %v3605 = vld [vmem:[%s3 + $0xf68] sm:$0xff]
    %v3606 = vld [vmem:[%s3 + $0xf70] sm:$0xff]
    %v3607 = vld [vmem:[%s3 + $0xf78] sm:$0xff]
    %v3608 = vld [vmem:[%s3 + $0xf80] sm:$0xff]
    %v3609 = vld [vmem:[%s3 + $0xf88] sm:$0xff]
    %v3610 = vld [vmem:[%s3 + $0xf90] sm:$0xff]
    %v3611 = vld [vmem:[%s3 + $0xf98] sm:$0xff]
    %v3612 = vld [vmem:[%s3 + $0xfa0] sm:$0xff]
    %v3613 = vld [vmem:[%s3 + $0xfa8] sm:$0xff]
    %v3614 = vld [vmem:[%s3 + $0xfb0] sm:$0xff]
    %v3615 = vld [vmem:[%s3 + $0xfb8] sm:$0xff]
    %v3616 = vld [vmem:[%s3 + $0xfc0] sm:$0xff]
    %v3617 = vld [vmem:[%s3 + $0xfc8] sm:$0xff]
    %v3618 = vld [vmem:[%s3 + $0xfd0] sm:$0xff]
    %v3619 = vld [vmem:[%s3 + $0xfd8] sm:$0xff]
    %v3620 = vld [vmem:[%s3 + $0xfe0] sm:$0xff]
    %v3621 = vld [vmem:[%s3 + $0xfe8] sm:$0xff]
    %v3622 = vld [vmem:[%s3 + $0xff0] sm:$0xff]
    %v3623 = vld [vmem:[%s3 + $0xff8] sm:$0xff]
    %v3624 = vld [vmem:[%s4] sm:$0xff]
    %v3626 = vlaneseq
    %v3627 = vshrl.u32 %v3626, 7
    %v3628 = vsub.s32 0, %v3627
    %v3629 = vrot.slane %v3624, %v3628
    %v3630 = vlaneseq
    %v3631 = vshrl.u32 %v3630, 7
    %v3632 = vsub.s32 1, %v3631
    %v3633 = vrot.slane %v3624, %v3632
    %v3634 = vlaneseq
    %v3635 = vshrl.u32 %v3634, 7
    %v3636 = vsub.s32 2, %v3635
    %v3637 = vrot.slane %v3624, %v3636
    %v3638 = vlaneseq
    %v3639 = vshrl.u32 %v3638, 7
    %v3640 = vsub.s32 3, %v3639
    %v3641 = vrot.slane %v3624, %v3640
    %v3642 = vlaneseq
    %v3643 = vshrl.u32 %v3642, 7
    %v3644 = vsub.s32 4, %v3643
    %v3645 = vrot.slane %v3624, %v3644
    %v3646 = vlaneseq
    %v3647 = vshrl.u32 %v3646, 7
    %v3648 = vsub.s32 5, %v3647
    %v3649 = vrot.slane %v3624, %v3648
    %v3650 = vlaneseq
    %v3651 = vshrl.u32 %v3650, 7
    %v3652 = vsub.s32 6, %v3651
    %v3653 = vrot.slane %v3624, %v3652
    %v3654 = vlaneseq
    %v3655 = vshrl.u32 %v3654, 7
    %v3656 = vsub.s32 7, %v3655
    %v3657 = vrot.slane %v3624, %v3656
    %v4178 = vunpack.c.l.b16 %v3112
    %v4179 = vunpack.c.h.b16 %v3112
    %v4180 = vunpack.c.l.b16 %v3113
    %v4181 = vunpack.c.h.b16 %v3113
    %v4182 = vunpack.c.l.b16 %v3114
    %v4183 = vunpack.c.h.b16 %v3114
    %v4184 = vunpack.c.l.b16 %v3115
    %v4185 = vunpack.c.h.b16 %v3115
    %v4186 = vunpack.c.l.b16 %v3116
    %v4187 = vunpack.c.h.b16 %v3116
    %v4188 = vunpack.c.l.b16 %v3117
    %v4189 = vunpack.c.h.b16 %v3117
    %v4190 = vunpack.c.l.b16 %v3118
    %v4191 = vunpack.c.h.b16 %v3118
    %v4192 = vunpack.c.l.b16 %v3119
    %v4193 = vunpack.c.h.b16 %v3119
    %v4194 = vunpack.c.l.b16 %v3120
    %v4195 = vunpack.c.h.b16 %v3120
    %v4196 = vunpack.c.l.b16 %v3121
    %v4197 = vunpack.c.h.b16 %v3121
    %v4198 = vunpack.c.l.b16 %v3122
    %v4199 = vunpack.c.h.b16 %v3122
    %v4200 = vunpack.c.l.b16 %v3123
    %v4201 = vunpack.c.h.b16 %v3123
    %v4202 = vunpack.c.l.b16 %v3124
    %v4203 = vunpack.c.h.b16 %v3124
    %v4204 = vunpack.c.l.b16 %v3125
    %v4205 = vunpack.c.h.b16 %v3125
    %v4206 = vunpack.c.l.b16 %v3126
    %v4207 = vunpack.c.h.b16 %v3126
    %v4208 = vunpack.c.l.b16 %v3127
    %v4209 = vunpack.c.h.b16 %v3127
    %v4210 = vunpack.c.l.b16 %v3128
    %v4211 = vunpack.c.h.b16 %v3128
    %v4212 = vunpack.c.l.b16 %v3129
    %v4213 = vunpack.c.h.b16 %v3129
    %v4214 = vunpack.c.l.b16 %v3130
    %v4215 = vunpack.c.h.b16 %v3130
    %v4216 = vunpack.c.l.b16 %v3131
    %v4217 = vunpack.c.h.b16 %v3131
    %v4218 = vunpack.c.l.b16 %v3132
    %v4219 = vunpack.c.h.b16 %v3132
    %v4220 = vunpack.c.l.b16 %v3133
    %v4221 = vunpack.c.h.b16 %v3133
    %v4222 = vunpack.c.l.b16 %v3134
    %v4223 = vunpack.c.h.b16 %v3134
    %v4224 = vunpack.c.l.b16 %v3135
    %v4225 = vunpack.c.h.b16 %v3135
    %v4226 = vunpack.c.l.b16 %v3136
    %v4227 = vunpack.c.h.b16 %v3136
    %v4228 = vunpack.c.l.b16 %v3137
    %v4229 = vunpack.c.h.b16 %v3137
    %v4230 = vunpack.c.l.b16 %v3138
    %v4231 = vunpack.c.h.b16 %v3138
    %v4232 = vunpack.c.l.b16 %v3139
    %v4233 = vunpack.c.h.b16 %v3139
    %v4234 = vunpack.c.l.b16 %v3140
    %v4235 = vunpack.c.h.b16 %v3140
    %v4236 = vunpack.c.l.b16 %v3141
    %v4237 = vunpack.c.h.b16 %v3141
    %v4238 = vunpack.c.l.b16 %v3142
    %v4239 = vunpack.c.h.b16 %v3142
    %v4240 = vunpack.c.l.b16 %v3143
    %v4241 = vunpack.c.h.b16 %v3143
    %v4242 = vunpack.c.l.b16 %v3144
    %v4243 = vunpack.c.h.b16 %v3144
    %v4244 = vunpack.c.l.b16 %v3145
    %v4245 = vunpack.c.h.b16 %v3145
    %v4246 = vunpack.c.l.b16 %v3146
    %v4247 = vunpack.c.h.b16 %v3146
    %v4248 = vunpack.c.l.b16 %v3147
    %v4249 = vunpack.c.h.b16 %v3147
    %v4250 = vunpack.c.l.b16 %v3148
    %v4251 = vunpack.c.h.b16 %v3148
    %v4252 = vunpack.c.l.b16 %v3149
    %v4253 = vunpack.c.h.b16 %v3149
    %v4254 = vunpack.c.l.b16 %v3150
    %v4255 = vunpack.c.h.b16 %v3150
    %v4256 = vunpack.c.l.b16 %v3151
    %v4257 = vunpack.c.h.b16 %v3151
    %v4258 = vunpack.c.l.b16 %v3152
    %v4259 = vunpack.c.h.b16 %v3152
    %v4260 = vunpack.c.l.b16 %v3153
    %v4261 = vunpack.c.h.b16 %v3153
    %v4262 = vunpack.c.l.b16 %v3154
    %v4263 = vunpack.c.h.b16 %v3154
    %v4264 = vunpack.c.l.b16 %v3155
    %v4265 = vunpack.c.h.b16 %v3155
    %v4266 = vunpack.c.l.b16 %v3156
    %v4267 = vunpack.c.h.b16 %v3156
    %v4268 = vunpack.c.l.b16 %v3157
    %v4269 = vunpack.c.h.b16 %v3157
    %v4270 = vunpack.c.l.b16 %v3158
    %v4271 = vunpack.c.h.b16 %v3158
    %v4272 = vunpack.c.l.b16 %v3159
    %v4273 = vunpack.c.h.b16 %v3159
    %v4274 = vunpack.c.l.b16 %v3160
    %v4275 = vunpack.c.h.b16 %v3160
    %v4276 = vunpack.c.l.b16 %v3161
    %v4277 = vunpack.c.h.b16 %v3161
    %v4278 = vunpack.c.l.b16 %v3162
    %v4279 = vunpack.c.h.b16 %v3162
    %v4280 = vunpack.c.l.b16 %v3163
    %v4281 = vunpack.c.h.b16 %v3163
    %v4282 = vunpack.c.l.b16 %v3164
    %v4283 = vunpack.c.h.b16 %v3164
    %v4284 = vunpack.c.l.b16 %v3165
    %v4285 = vunpack.c.h.b16 %v3165
    %v4286 = vunpack.c.l.b16 %v3166
    %v4287 = vunpack.c.h.b16 %v3166
    %v4288 = vunpack.c.l.b16 %v3167
    %v4289 = vunpack.c.h.b16 %v3167
    %v4290 = vunpack.c.l.b16 %v3168
    %v4291 = vunpack.c.h.b16 %v3168
    %v4292 = vunpack.c.l.b16 %v3169
    %v4293 = vunpack.c.h.b16 %v3169
    %v4294 = vunpack.c.l.b16 %v3170
    %v4295 = vunpack.c.h.b16 %v3170
    %v4296 = vunpack.c.l.b16 %v3171
    %v4297 = vunpack.c.h.b16 %v3171
    %v4298 = vunpack.c.l.b16 %v3172
    %v4299 = vunpack.c.h.b16 %v3172
    %v4300 = vunpack.c.l.b16 %v3173
    %v4301 = vunpack.c.h.b16 %v3173
    %v4302 = vunpack.c.l.b16 %v3174
    %v4303 = vunpack.c.h.b16 %v3174
    %v4304 = vunpack.c.l.b16 %v3175
    %v4305 = vunpack.c.h.b16 %v3175
    %v4306 = vunpack.c.l.b16 %v3176
    %v4307 = vunpack.c.h.b16 %v3176
    %v4308 = vunpack.c.l.b16 %v3177
    %v4309 = vunpack.c.h.b16 %v3177
    %v4310 = vunpack.c.l.b16 %v3178
    %v4311 = vunpack.c.h.b16 %v3178
    %v4312 = vunpack.c.l.b16 %v3179
    %v4313 = vunpack.c.h.b16 %v3179
    %v4314 = vunpack.c.l.b16 %v3180
    %v4315 = vunpack.c.h.b16 %v3180
    %v4316 = vunpack.c.l.b16 %v3181
    %v4317 = vunpack.c.h.b16 %v3181
    %v4318 = vunpack.c.l.b16 %v3182
    %v4319 = vunpack.c.h.b16 %v3182
    %v4320 = vunpack.c.l.b16 %v3183
    %v4321 = vunpack.c.h.b16 %v3183
    %v4322 = vunpack.c.l.b16 %v3184
    %v4323 = vunpack.c.h.b16 %v3184
    %v4324 = vunpack.c.l.b16 %v3185
    %v4325 = vunpack.c.h.b16 %v3185
    %v4326 = vunpack.c.l.b16 %v3186
    %v4327 = vunpack.c.h.b16 %v3186
    %v4328 = vunpack.c.l.b16 %v3187
    %v4329 = vunpack.c.h.b16 %v3187
    %v4330 = vunpack.c.l.b16 %v3188
    %v4331 = vunpack.c.h.b16 %v3188
    %v4332 = vunpack.c.l.b16 %v3189
    %v4333 = vunpack.c.h.b16 %v3189
    %v4334 = vunpack.c.l.b16 %v3190
    %v4335 = vunpack.c.h.b16 %v3190
    %v4336 = vunpack.c.l.b16 %v3191
    %v4337 = vunpack.c.h.b16 %v3191
    %v4338 = vunpack.c.l.b16 %v3192
    %v4339 = vunpack.c.h.b16 %v3192
    %v4340 = vunpack.c.l.b16 %v3193
    %v4341 = vunpack.c.h.b16 %v3193
    %v4342 = vunpack.c.l.b16 %v3194
    %v4343 = vunpack.c.h.b16 %v3194
    %v4344 = vunpack.c.l.b16 %v3195
    %v4345 = vunpack.c.h.b16 %v3195
    %v4346 = vunpack.c.l.b16 %v3196
    %v4347 = vunpack.c.h.b16 %v3196
    %v4348 = vunpack.c.l.b16 %v3197
    %v4349 = vunpack.c.h.b16 %v3197
    %v4350 = vunpack.c.l.b16 %v3198
    %v4351 = vunpack.c.h.b16 %v3198
    %v4352 = vunpack.c.l.b16 %v3199
    %v4353 = vunpack.c.h.b16 %v3199
    %v4354 = vunpack.c.l.b16 %v3200
    %v4355 = vunpack.c.h.b16 %v3200
    %v4356 = vunpack.c.l.b16 %v3201
    %v4357 = vunpack.c.h.b16 %v3201
    %v4358 = vunpack.c.l.b16 %v3202
    %v4359 = vunpack.c.h.b16 %v3202
    %v4360 = vunpack.c.l.b16 %v3203
    %v4361 = vunpack.c.h.b16 %v3203
    %v4362 = vunpack.c.l.b16 %v3204
    %v4363 = vunpack.c.h.b16 %v3204
    %v4364 = vunpack.c.l.b16 %v3205
    %v4365 = vunpack.c.h.b16 %v3205
    %v4366 = vunpack.c.l.b16 %v3206
    %v4367 = vunpack.c.h.b16 %v3206
    %v4368 = vunpack.c.l.b16 %v3207
    %v4369 = vunpack.c.h.b16 %v3207
    %v4370 = vunpack.c.l.b16 %v3208
    %v4371 = vunpack.c.h.b16 %v3208
    %v4372 = vunpack.c.l.b16 %v3209
    %v4373 = vunpack.c.h.b16 %v3209
    %v4374 = vunpack.c.l.b16 %v3210
    %v4375 = vunpack.c.h.b16 %v3210
    %v4376 = vunpack.c.l.b16 %v3211
    %v4377 = vunpack.c.h.b16 %v3211
    %v4378 = vunpack.c.l.b16 %v3212
    %v4379 = vunpack.c.h.b16 %v3212
    %v4380 = vunpack.c.l.b16 %v3213
    %v4381 = vunpack.c.h.b16 %v3213
    %v4382 = vunpack.c.l.b16 %v3214
    %v4383 = vunpack.c.h.b16 %v3214
    %v4384 = vunpack.c.l.b16 %v3215
    %v4385 = vunpack.c.h.b16 %v3215
    %v4386 = vunpack.c.l.b16 %v3216
    %v4387 = vunpack.c.h.b16 %v3216
    %v4388 = vunpack.c.l.b16 %v3217
    %v4389 = vunpack.c.h.b16 %v3217
    %v4390 = vunpack.c.l.b16 %v3218
    %v4391 = vunpack.c.h.b16 %v3218
    %v4392 = vunpack.c.l.b16 %v3219
    %v4393 = vunpack.c.h.b16 %v3219
    %v4394 = vunpack.c.l.b16 %v3220
    %v4395 = vunpack.c.h.b16 %v3220
    %v4396 = vunpack.c.l.b16 %v3221
    %v4397 = vunpack.c.h.b16 %v3221
    %v4398 = vunpack.c.l.b16 %v3222
    %v4399 = vunpack.c.h.b16 %v3222
    %v4400 = vunpack.c.l.b16 %v3223
    %v4401 = vunpack.c.h.b16 %v3223
    %v4402 = vunpack.c.l.b16 %v3224
    %v4403 = vunpack.c.h.b16 %v3224
    %v4404 = vunpack.c.l.b16 %v3225
    %v4405 = vunpack.c.h.b16 %v3225
    %v4406 = vunpack.c.l.b16 %v3226
    %v4407 = vunpack.c.h.b16 %v3226
    %v4408 = vunpack.c.l.b16 %v3227
    %v4409 = vunpack.c.h.b16 %v3227
    %v4410 = vunpack.c.l.b16 %v3228
    %v4411 = vunpack.c.h.b16 %v3228
    %v4412 = vunpack.c.l.b16 %v3229
    %v4413 = vunpack.c.h.b16 %v3229
    %v4414 = vunpack.c.l.b16 %v3230
    %v4415 = vunpack.c.h.b16 %v3230
    %v4416 = vunpack.c.l.b16 %v3231
    %v4417 = vunpack.c.h.b16 %v3231
    %v4418 = vunpack.c.l.b16 %v3232
    %v4419 = vunpack.c.h.b16 %v3232
    %v4420 = vunpack.c.l.b16 %v3233
    %v4421 = vunpack.c.h.b16 %v3233
    %v4422 = vunpack.c.l.b16 %v3234
    %v4423 = vunpack.c.h.b16 %v3234
    %v4424 = vunpack.c.l.b16 %v3235
    %v4425 = vunpack.c.h.b16 %v3235
    %v4426 = vunpack.c.l.b16 %v3236
    %v4427 = vunpack.c.h.b16 %v3236
    %v4428 = vunpack.c.l.b16 %v3237
    %v4429 = vunpack.c.h.b16 %v3237
    %v4430 = vunpack.c.l.b16 %v3238
    %v4431 = vunpack.c.h.b16 %v3238
    %v4432 = vunpack.c.l.b16 %v3239
    %v4433 = vunpack.c.h.b16 %v3239
    %v4434 = vunpack.c.l.b16 %v3240
    %v4435 = vunpack.c.h.b16 %v3240
    %v4436 = vunpack.c.l.b16 %v3241
    %v4437 = vunpack.c.h.b16 %v3241
    %v4438 = vunpack.c.l.b16 %v3242
    %v4439 = vunpack.c.h.b16 %v3242
    %v4440 = vunpack.c.l.b16 %v3243
    %v4441 = vunpack.c.h.b16 %v3243
    %v4442 = vunpack.c.l.b16 %v3244
    %v4443 = vunpack.c.h.b16 %v3244
    %v4444 = vunpack.c.l.b16 %v3245
    %v4445 = vunpack.c.h.b16 %v3245
    %v4446 = vunpack.c.l.b16 %v3246
    %v4447 = vunpack.c.h.b16 %v3246
    %v4448 = vunpack.c.l.b16 %v3247
    %v4449 = vunpack.c.h.b16 %v3247
    %v4450 = vunpack.c.l.b16 %v3248
    %v4451 = vunpack.c.h.b16 %v3248
    %v4452 = vunpack.c.l.b16 %v3249
    %v4453 = vunpack.c.h.b16 %v3249
    %v4454 = vunpack.c.l.b16 %v3250
    %v4455 = vunpack.c.h.b16 %v3250
    %v4456 = vunpack.c.l.b16 %v3251
    %v4457 = vunpack.c.h.b16 %v3251
    %v4458 = vunpack.c.l.b16 %v3252
    %v4459 = vunpack.c.h.b16 %v3252
    %v4460 = vunpack.c.l.b16 %v3253
    %v4461 = vunpack.c.h.b16 %v3253
    %v4462 = vunpack.c.l.b16 %v3254
    %v4463 = vunpack.c.h.b16 %v3254
    %v4464 = vunpack.c.l.b16 %v3255
    %v4465 = vunpack.c.h.b16 %v3255
    %v4466 = vunpack.c.l.b16 %v3256
    %v4467 = vunpack.c.h.b16 %v3256
    %v4468 = vunpack.c.l.b16 %v3257
    %v4469 = vunpack.c.h.b16 %v3257
    %v4470 = vunpack.c.l.b16 %v3258
    %v4471 = vunpack.c.h.b16 %v3258
    %v4472 = vunpack.c.l.b16 %v3259
    %v4473 = vunpack.c.h.b16 %v3259
    %v4474 = vunpack.c.l.b16 %v3260
    %v4475 = vunpack.c.h.b16 %v3260
    %v4476 = vunpack.c.l.b16 %v3261
    %v4477 = vunpack.c.h.b16 %v3261
    %v4478 = vunpack.c.l.b16 %v3262
    %v4479 = vunpack.c.h.b16 %v3262
    %v4480 = vunpack.c.l.b16 %v3263
    %v4481 = vunpack.c.h.b16 %v3263
    %v4482 = vunpack.c.l.b16 %v3264
    %v4483 = vunpack.c.h.b16 %v3264
    %v4484 = vunpack.c.l.b16 %v3265
    %v4485 = vunpack.c.h.b16 %v3265
    %v4486 = vunpack.c.l.b16 %v3266
    %v4487 = vunpack.c.h.b16 %v3266
    %v4488 = vunpack.c.l.b16 %v3267
    %v4489 = vunpack.c.h.b16 %v3267
    %v4490 = vunpack.c.l.b16 %v3268
    %v4491 = vunpack.c.h.b16 %v3268
    %v4492 = vunpack.c.l.b16 %v3269
    %v4493 = vunpack.c.h.b16 %v3269
    %v4494 = vunpack.c.l.b16 %v3270
    %v4495 = vunpack.c.h.b16 %v3270
    %v4496 = vunpack.c.l.b16 %v3271
    %v4497 = vunpack.c.h.b16 %v3271
    %v4498 = vunpack.c.l.b16 %v3272
    %v4499 = vunpack.c.h.b16 %v3272
    %v4500 = vunpack.c.l.b16 %v3273
    %v4501 = vunpack.c.h.b16 %v3273
    %v4502 = vunpack.c.l.b16 %v3274
    %v4503 = vunpack.c.h.b16 %v3274
    %v4504 = vunpack.c.l.b16 %v3275
    %v4505 = vunpack.c.h.b16 %v3275
    %v4506 = vunpack.c.l.b16 %v3276
    %v4507 = vunpack.c.h.b16 %v3276
    %v4508 = vunpack.c.l.b16 %v3277
    %v4509 = vunpack.c.h.b16 %v3277
    %v4510 = vunpack.c.l.b16 %v3278
    %v4511 = vunpack.c.h.b16 %v3278
    %v4512 = vunpack.c.l.b16 %v3279
    %v4513 = vunpack.c.h.b16 %v3279
    %v4514 = vunpack.c.l.b16 %v3280
    %v4515 = vunpack.c.h.b16 %v3280
    %v4516 = vunpack.c.l.b16 %v3281
    %v4517 = vunpack.c.h.b16 %v3281
    %v4518 = vunpack.c.l.b16 %v3282
    %v4519 = vunpack.c.h.b16 %v3282
    %v4520 = vunpack.c.l.b16 %v3283
    %v4521 = vunpack.c.h.b16 %v3283
    %v4522 = vunpack.c.l.b16 %v3284
    %v4523 = vunpack.c.h.b16 %v3284
    %v4524 = vunpack.c.l.b16 %v3285
    %v4525 = vunpack.c.h.b16 %v3285
    %v4526 = vunpack.c.l.b16 %v3286
    %v4527 = vunpack.c.h.b16 %v3286
    %v4528 = vunpack.c.l.b16 %v3287
    %v4529 = vunpack.c.h.b16 %v3287
    %v4530 = vunpack.c.l.b16 %v3288
    %v4531 = vunpack.c.h.b16 %v3288
    %v4532 = vunpack.c.l.b16 %v3289
    %v4533 = vunpack.c.h.b16 %v3289
    %v4534 = vunpack.c.l.b16 %v3290
    %v4535 = vunpack.c.h.b16 %v3290
    %v4536 = vunpack.c.l.b16 %v3291
    %v4537 = vunpack.c.h.b16 %v3291
    %v4538 = vunpack.c.l.b16 %v3292
    %v4539 = vunpack.c.h.b16 %v3292
    %v4540 = vunpack.c.l.b16 %v3293
    %v4541 = vunpack.c.h.b16 %v3293
    %v4542 = vunpack.c.l.b16 %v3294
    %v4543 = vunpack.c.h.b16 %v3294
    %v4544 = vunpack.c.l.b16 %v3295
    %v4545 = vunpack.c.h.b16 %v3295
    %v4546 = vunpack.c.l.b16 %v3296
    %v4547 = vunpack.c.h.b16 %v3296
    %v4548 = vunpack.c.l.b16 %v3297
    %v4549 = vunpack.c.h.b16 %v3297
    %v4550 = vunpack.c.l.b16 %v3298
    %v4551 = vunpack.c.h.b16 %v3298
    %v4552 = vunpack.c.l.b16 %v3299
    %v4553 = vunpack.c.h.b16 %v3299
    %v4554 = vunpack.c.l.b16 %v3300
    %v4555 = vunpack.c.h.b16 %v3300
    %v4556 = vunpack.c.l.b16 %v3301
    %v4557 = vunpack.c.h.b16 %v3301
    %v4558 = vunpack.c.l.b16 %v3302
    %v4559 = vunpack.c.h.b16 %v3302
    %v4560 = vunpack.c.l.b16 %v3303
    %v4561 = vunpack.c.h.b16 %v3303
    %v4562 = vunpack.c.l.b16 %v3304
    %v4563 = vunpack.c.h.b16 %v3304
    %v4564 = vunpack.c.l.b16 %v3305
    %v4565 = vunpack.c.h.b16 %v3305
    %v4566 = vunpack.c.l.b16 %v3306
    %v4567 = vunpack.c.h.b16 %v3306
    %v4568 = vunpack.c.l.b16 %v3307
    %v4569 = vunpack.c.h.b16 %v3307
    %v4570 = vunpack.c.l.b16 %v3308
    %v4571 = vunpack.c.h.b16 %v3308
    %v4572 = vunpack.c.l.b16 %v3309
    %v4573 = vunpack.c.h.b16 %v3309
    %v4574 = vunpack.c.l.b16 %v3310
    %v4575 = vunpack.c.h.b16 %v3310
    %v4576 = vunpack.c.l.b16 %v3311
    %v4577 = vunpack.c.h.b16 %v3311
    %v4578 = vunpack.c.l.b16 %v3312
    %v4579 = vunpack.c.h.b16 %v3312
    %v4580 = vunpack.c.l.b16 %v3313
    %v4581 = vunpack.c.h.b16 %v3313
    %v4582 = vunpack.c.l.b16 %v3314
    %v4583 = vunpack.c.h.b16 %v3314
    %v4584 = vunpack.c.l.b16 %v3315
    %v4585 = vunpack.c.h.b16 %v3315
    %v4586 = vunpack.c.l.b16 %v3316
    %v4587 = vunpack.c.h.b16 %v3316
    %v4588 = vunpack.c.l.b16 %v3317
    %v4589 = vunpack.c.h.b16 %v3317
    %v4590 = vunpack.c.l.b16 %v3318
    %v4591 = vunpack.c.h.b16 %v3318
    %v4592 = vunpack.c.l.b16 %v3319
    %v4593 = vunpack.c.h.b16 %v3319
    %v4594 = vunpack.c.l.b16 %v3320
    %v4595 = vunpack.c.h.b16 %v3320
    %v4596 = vunpack.c.l.b16 %v3321
    %v4597 = vunpack.c.h.b16 %v3321
    %v4598 = vunpack.c.l.b16 %v3322
    %v4599 = vunpack.c.h.b16 %v3322
    %v4600 = vunpack.c.l.b16 %v3323
    %v4601 = vunpack.c.h.b16 %v3323
    %v4602 = vunpack.c.l.b16 %v3324
    %v4603 = vunpack.c.h.b16 %v3324
    %v4604 = vunpack.c.l.b16 %v3325
    %v4605 = vunpack.c.h.b16 %v3325
    %v4606 = vunpack.c.l.b16 %v3326
    %v4607 = vunpack.c.h.b16 %v3326
    %v4608 = vunpack.c.l.b16 %v3327
    %v4609 = vunpack.c.h.b16 %v3327
    %v4610 = vunpack.c.l.b16 %v3328
    %v4611 = vunpack.c.h.b16 %v3328
    %v4612 = vunpack.c.l.b16 %v3329
    %v4613 = vunpack.c.h.b16 %v3329
    %v4614 = vunpack.c.l.b16 %v3330
    %v4615 = vunpack.c.h.b16 %v3330
    %v4616 = vunpack.c.l.b16 %v3331
    %v4617 = vunpack.c.h.b16 %v3331
    %v4618 = vunpack.c.l.b16 %v3332
    %v4619 = vunpack.c.h.b16 %v3332
    %v4620 = vunpack.c.l.b16 %v3333
    %v4621 = vunpack.c.h.b16 %v3333
    %v4622 = vunpack.c.l.b16 %v3334
    %v4623 = vunpack.c.h.b16 %v3334
    %v4624 = vunpack.c.l.b16 %v3335
    %v4625 = vunpack.c.h.b16 %v3335
    %v4626 = vunpack.c.l.b16 %v3336
    %v4627 = vunpack.c.h.b16 %v3336
    %v4628 = vunpack.c.l.b16 %v3337
    %v4629 = vunpack.c.h.b16 %v3337
    %v4630 = vunpack.c.l.b16 %v3338
    %v4631 = vunpack.c.h.b16 %v3338
    %v4632 = vunpack.c.l.b16 %v3339
    %v4633 = vunpack.c.h.b16 %v3339
    %v4634 = vunpack.c.l.b16 %v3340
    %v4635 = vunpack.c.h.b16 %v3340
    %v4636 = vunpack.c.l.b16 %v3341
    %v4637 = vunpack.c.h.b16 %v3341
    %v4638 = vunpack.c.l.b16 %v3342
    %v4639 = vunpack.c.h.b16 %v3342
    %v4640 = vunpack.c.l.b16 %v3343
    %v4641 = vunpack.c.h.b16 %v3343
    %v4642 = vunpack.c.l.b16 %v3344
    %v4643 = vunpack.c.h.b16 %v3344
    %v4644 = vunpack.c.l.b16 %v3345
    %v4645 = vunpack.c.h.b16 %v3345
    %v4646 = vunpack.c.l.b16 %v3346
    %v4647 = vunpack.c.h.b16 %v3346
    %v4648 = vunpack.c.l.b16 %v3347
    %v4649 = vunpack.c.h.b16 %v3347
    %v4650 = vunpack.c.l.b16 %v3348
    %v4651 = vunpack.c.h.b16 %v3348
    %v4652 = vunpack.c.l.b16 %v3349
    %v4653 = vunpack.c.h.b16 %v3349
    %v4654 = vunpack.c.l.b16 %v3350
    %v4655 = vunpack.c.h.b16 %v3350
    %v4656 = vunpack.c.l.b16 %v3351
    %v4657 = vunpack.c.h.b16 %v3351
    %v4658 = vunpack.c.l.b16 %v3352
    %v4659 = vunpack.c.h.b16 %v3352
    %v4660 = vunpack.c.l.b16 %v3353
    %v4661 = vunpack.c.h.b16 %v3353
    %v4662 = vunpack.c.l.b16 %v3354
    %v4663 = vunpack.c.h.b16 %v3354
    %v4664 = vunpack.c.l.b16 %v3355
    %v4665 = vunpack.c.h.b16 %v3355
    %v4666 = vunpack.c.l.b16 %v3356
    %v4667 = vunpack.c.h.b16 %v3356
    %v4668 = vunpack.c.l.b16 %v3357
    %v4669 = vunpack.c.h.b16 %v3357
    %v4670 = vunpack.c.l.b16 %v3358
    %v4671 = vunpack.c.h.b16 %v3358
    %v4672 = vunpack.c.l.b16 %v3359
    %v4673 = vunpack.c.h.b16 %v3359
    %v4674 = vunpack.c.l.b16 %v3360
    %v4675 = vunpack.c.h.b16 %v3360
    %v4676 = vunpack.c.l.b16 %v3361
    %v4677 = vunpack.c.h.b16 %v3361
    %v4678 = vunpack.c.l.b16 %v3362
    %v4679 = vunpack.c.h.b16 %v3362
    %v4680 = vunpack.c.l.b16 %v3363
    %v4681 = vunpack.c.h.b16 %v3363
    %v4682 = vunpack.c.l.b16 %v3364
    %v4683 = vunpack.c.h.b16 %v3364
    %v4684 = vunpack.c.l.b16 %v3365
    %v4685 = vunpack.c.h.b16 %v3365
    %v4686 = vunpack.c.l.b16 %v3366
    %v4687 = vunpack.c.h.b16 %v3366
    %v4688 = vunpack.c.l.b16 %v3367
    %v4689 = vunpack.c.h.b16 %v3367
    %v4690 = vunpack.c.l.b16 %v3368
    %v4691 = vunpack.c.h.b16 %v3368
    %v4692 = vunpack.c.l.b16 %v3369
    %v4693 = vunpack.c.h.b16 %v3369
    %v4694 = vunpack.c.l.b16 %v3370
    %v4695 = vunpack.c.h.b16 %v3370
    %v4696 = vunpack.c.l.b16 %v3371
    %v4697 = vunpack.c.h.b16 %v3371
    %v4698 = vunpack.c.l.b16 %v3372
    %v4699 = vunpack.c.h.b16 %v3372
    %v4700 = vunpack.c.l.b16 %v3373
    %v4701 = vunpack.c.h.b16 %v3373
    %v4702 = vunpack.c.l.b16 %v3374
    %v4703 = vunpack.c.h.b16 %v3374
    %v4704 = vunpack.c.l.b16 %v3375
    %v4705 = vunpack.c.h.b16 %v3375
    %v4706 = vunpack.c.l.b16 %v3376
    %v4707 = vunpack.c.h.b16 %v3376
    %v4708 = vunpack.c.l.b16 %v3377
    %v4709 = vunpack.c.h.b16 %v3377
    %v4710 = vunpack.c.l.b16 %v3378
    %v4711 = vunpack.c.h.b16 %v3378
    %v4712 = vunpack.c.l.b16 %v3379
    %v4713 = vunpack.c.h.b16 %v3379
    %v4714 = vunpack.c.l.b16 %v3380
    %v4715 = vunpack.c.h.b16 %v3380
    %v4716 = vunpack.c.l.b16 %v3381
    %v4717 = vunpack.c.h.b16 %v3381
    %v4718 = vunpack.c.l.b16 %v3382
    %v4719 = vunpack.c.h.b16 %v3382
    %v4720 = vunpack.c.l.b16 %v3383
    %v4721 = vunpack.c.h.b16 %v3383
    %v4722 = vunpack.c.l.b16 %v3384
    %v4723 = vunpack.c.h.b16 %v3384
    %v4724 = vunpack.c.l.b16 %v3385
    %v4725 = vunpack.c.h.b16 %v3385
    %v4726 = vunpack.c.l.b16 %v3386
    %v4727 = vunpack.c.h.b16 %v3386
    %v4728 = vunpack.c.l.b16 %v3387
    %v4729 = vunpack.c.h.b16 %v3387
    %v4730 = vunpack.c.l.b16 %v3388
    %v4731 = vunpack.c.h.b16 %v3388
    %v4732 = vunpack.c.l.b16 %v3389
    %v4733 = vunpack.c.h.b16 %v3389
    %v4734 = vunpack.c.l.b16 %v3390
    %v4735 = vunpack.c.h.b16 %v3390
    %v4736 = vunpack.c.l.b16 %v3391
    %v4737 = vunpack.c.h.b16 %v3391
    %v4738 = vunpack.c.l.b16 %v3392
    %v4739 = vunpack.c.h.b16 %v3392
    %v4740 = vunpack.c.l.b16 %v3393
    %v4741 = vunpack.c.h.b16 %v3393
    %v4742 = vunpack.c.l.b16 %v3394
    %v4743 = vunpack.c.h.b16 %v3394
    %v4744 = vunpack.c.l.b16 %v3395
    %v4745 = vunpack.c.h.b16 %v3395
    %v4746 = vunpack.c.l.b16 %v3396
    %v4747 = vunpack.c.h.b16 %v3396
    %v4748 = vunpack.c.l.b16 %v3397
    %v4749 = vunpack.c.h.b16 %v3397
    %v4750 = vunpack.c.l.b16 %v3398
    %v4751 = vunpack.c.h.b16 %v3398
    %v4752 = vunpack.c.l.b16 %v3399
    %v4753 = vunpack.c.h.b16 %v3399
    %v4754 = vunpack.c.l.b16 %v3400
    %v4755 = vunpack.c.h.b16 %v3400
    %v4756 = vunpack.c.l.b16 %v3401
    %v4757 = vunpack.c.h.b16 %v3401
    %v4758 = vunpack.c.l.b16 %v3402
    %v4759 = vunpack.c.h.b16 %v3402
    %v4760 = vunpack.c.l.b16 %v3403
    %v4761 = vunpack.c.h.b16 %v3403
    %v4762 = vunpack.c.l.b16 %v3404
    %v4763 = vunpack.c.h.b16 %v3404
    %v4764 = vunpack.c.l.b16 %v3405
    %v4765 = vunpack.c.h.b16 %v3405
    %v4766 = vunpack.c.l.b16 %v3406
    %v4767 = vunpack.c.h.b16 %v3406
    %v4768 = vunpack.c.l.b16 %v3407
    %v4769 = vunpack.c.h.b16 %v3407
    %v4770 = vunpack.c.l.b16 %v3408
    %v4771 = vunpack.c.h.b16 %v3408
    %v4772 = vunpack.c.l.b16 %v3409
    %v4773 = vunpack.c.h.b16 %v3409
    %v4774 = vunpack.c.l.b16 %v3410
    %v4775 = vunpack.c.h.b16 %v3410
    %v4776 = vunpack.c.l.b16 %v3411
    %v4777 = vunpack.c.h.b16 %v3411
    %v4778 = vunpack.c.l.b16 %v3412
    %v4779 = vunpack.c.h.b16 %v3412
    %v4780 = vunpack.c.l.b16 %v3413
    %v4781 = vunpack.c.h.b16 %v3413
    %v4782 = vunpack.c.l.b16 %v3414
    %v4783 = vunpack.c.h.b16 %v3414
    %v4784 = vunpack.c.l.b16 %v3415
    %v4785 = vunpack.c.h.b16 %v3415
    %v4786 = vunpack.c.l.b16 %v3416
    %v4787 = vunpack.c.h.b16 %v3416
    %v4788 = vunpack.c.l.b16 %v3417
    %v4789 = vunpack.c.h.b16 %v3417
    %v4790 = vunpack.c.l.b16 %v3418
    %v4791 = vunpack.c.h.b16 %v3418
    %v4792 = vunpack.c.l.b16 %v3419
    %v4793 = vunpack.c.h.b16 %v3419
    %v4794 = vunpack.c.l.b16 %v3420
    %v4795 = vunpack.c.h.b16 %v3420
    %v4796 = vunpack.c.l.b16 %v3421
    %v4797 = vunpack.c.h.b16 %v3421
    %v4798 = vunpack.c.l.b16 %v3422
    %v4799 = vunpack.c.h.b16 %v3422
    %v4800 = vunpack.c.l.b16 %v3423
    %v4801 = vunpack.c.h.b16 %v3423
    %v4802 = vunpack.c.l.b16 %v3424
    %v4803 = vunpack.c.h.b16 %v3424
    %v4804 = vunpack.c.l.b16 %v3425
    %v4805 = vunpack.c.h.b16 %v3425
    %v4806 = vunpack.c.l.b16 %v3426
    %v4807 = vunpack.c.h.b16 %v3426
    %v4808 = vunpack.c.l.b16 %v3427
    %v4809 = vunpack.c.h.b16 %v3427
    %v4810 = vunpack.c.l.b16 %v3428
    %v4811 = vunpack.c.h.b16 %v3428
    %v4812 = vunpack.c.l.b16 %v3429
    %v4813 = vunpack.c.h.b16 %v3429
    %v4814 = vunpack.c.l.b16 %v3430
    %v4815 = vunpack.c.h.b16 %v3430
    %v4816 = vunpack.c.l.b16 %v3431
    %v4817 = vunpack.c.h.b16 %v3431
    %v4818 = vunpack.c.l.b16 %v3432
    %v4819 = vunpack.c.h.b16 %v3432
    %v4820 = vunpack.c.l.b16 %v3433
    %v4821 = vunpack.c.h.b16 %v3433
    %v4822 = vunpack.c.l.b16 %v3434
    %v4823 = vunpack.c.h.b16 %v3434
    %v4824 = vunpack.c.l.b16 %v3435
    %v4825 = vunpack.c.h.b16 %v3435
    %v4826 = vunpack.c.l.b16 %v3436
    %v4827 = vunpack.c.h.b16 %v3436
    %v4828 = vunpack.c.l.b16 %v3437
    %v4829 = vunpack.c.h.b16 %v3437
    %v4830 = vunpack.c.l.b16 %v3438
    %v4831 = vunpack.c.h.b16 %v3438
    %v4832 = vunpack.c.l.b16 %v3439
    %v4833 = vunpack.c.h.b16 %v3439
    %v4834 = vunpack.c.l.b16 %v3440
    %v4835 = vunpack.c.h.b16 %v3440
    %v4836 = vunpack.c.l.b16 %v3441
    %v4837 = vunpack.c.h.b16 %v3441
    %v4838 = vunpack.c.l.b16 %v3442
    %v4839 = vunpack.c.h.b16 %v3442
    %v4840 = vunpack.c.l.b16 %v3443
    %v4841 = vunpack.c.h.b16 %v3443
    %v4842 = vunpack.c.l.b16 %v3444
    %v4843 = vunpack.c.h.b16 %v3444
    %v4844 = vunpack.c.l.b16 %v3445
    %v4845 = vunpack.c.h.b16 %v3445
    %v4846 = vunpack.c.l.b16 %v3446
    %v4847 = vunpack.c.h.b16 %v3446
    %v4848 = vunpack.c.l.b16 %v3447
    %v4849 = vunpack.c.h.b16 %v3447
    %v4850 = vunpack.c.l.b16 %v3448
    %v4851 = vunpack.c.h.b16 %v3448
    %v4852 = vunpack.c.l.b16 %v3449
    %v4853 = vunpack.c.h.b16 %v3449
    %v4854 = vunpack.c.l.b16 %v3450
    %v4855 = vunpack.c.h.b16 %v3450
    %v4856 = vunpack.c.l.b16 %v3451
    %v4857 = vunpack.c.h.b16 %v3451
    %v4858 = vunpack.c.l.b16 %v3452
    %v4859 = vunpack.c.h.b16 %v3452
    %v4860 = vunpack.c.l.b16 %v3453
    %v4861 = vunpack.c.h.b16 %v3453
    %v4862 = vunpack.c.l.b16 %v3454
    %v4863 = vunpack.c.h.b16 %v3454
    %v4864 = vunpack.c.l.b16 %v3455
    %v4865 = vunpack.c.h.b16 %v3455
    %v4866 = vunpack.c.l.b16 %v3456
    %v4867 = vunpack.c.h.b16 %v3456
    %v4868 = vunpack.c.l.b16 %v3457
    %v4869 = vunpack.c.h.b16 %v3457
    %v4870 = vunpack.c.l.b16 %v3458
    %v4871 = vunpack.c.h.b16 %v3458
    %v4872 = vunpack.c.l.b16 %v3459
    %v4873 = vunpack.c.h.b16 %v3459
    %v4874 = vunpack.c.l.b16 %v3460
    %v4875 = vunpack.c.h.b16 %v3460
    %v4876 = vunpack.c.l.b16 %v3461
    %v4877 = vunpack.c.h.b16 %v3461
    %v4878 = vunpack.c.l.b16 %v3462
    %v4879 = vunpack.c.h.b16 %v3462
    %v4880 = vunpack.c.l.b16 %v3463
    %v4881 = vunpack.c.h.b16 %v3463
    %v4882 = vunpack.c.l.b16 %v3464
    %v4883 = vunpack.c.h.b16 %v3464
    %v4884 = vunpack.c.l.b16 %v3465
    %v4885 = vunpack.c.h.b16 %v3465
    %v4886 = vunpack.c.l.b16 %v3466
    %v4887 = vunpack.c.h.b16 %v3466
    %v4888 = vunpack.c.l.b16 %v3467
    %v4889 = vunpack.c.h.b16 %v3467
    %v4890 = vunpack.c.l.b16 %v3468
    %v4891 = vunpack.c.h.b16 %v3468
    %v4892 = vunpack.c.l.b16 %v3469
    %v4893 = vunpack.c.h.b16 %v3469
    %v4894 = vunpack.c.l.b16 %v3470
    %v4895 = vunpack.c.h.b16 %v3470
    %v4896 = vunpack.c.l.b16 %v3471
    %v4897 = vunpack.c.h.b16 %v3471
    %v4898 = vunpack.c.l.b16 %v3472
    %v4899 = vunpack.c.h.b16 %v3472
    %v4900 = vunpack.c.l.b16 %v3473
    %v4901 = vunpack.c.h.b16 %v3473
    %v4902 = vunpack.c.l.b16 %v3474
    %v4903 = vunpack.c.h.b16 %v3474
    %v4904 = vunpack.c.l.b16 %v3475
    %v4905 = vunpack.c.h.b16 %v3475
    %v4906 = vunpack.c.l.b16 %v3476
    %v4907 = vunpack.c.h.b16 %v3476
    %v4908 = vunpack.c.l.b16 %v3477
    %v4909 = vunpack.c.h.b16 %v3477
    %v4910 = vunpack.c.l.b16 %v3478
    %v4911 = vunpack.c.h.b16 %v3478
    %v4912 = vunpack.c.l.b16 %v3479
    %v4913 = vunpack.c.h.b16 %v3479
    %v4914 = vunpack.c.l.b16 %v3480
    %v4915 = vunpack.c.h.b16 %v3480
    %v4916 = vunpack.c.l.b16 %v3481
    %v4917 = vunpack.c.h.b16 %v3481
    %v4918 = vunpack.c.l.b16 %v3482
    %v4919 = vunpack.c.h.b16 %v3482
    %v4920 = vunpack.c.l.b16 %v3483
    %v4921 = vunpack.c.h.b16 %v3483
    %v4922 = vunpack.c.l.b16 %v3484
    %v4923 = vunpack.c.h.b16 %v3484
    %v4924 = vunpack.c.l.b16 %v3485
    %v4925 = vunpack.c.h.b16 %v3485
    %v4926 = vunpack.c.l.b16 %v3486
    %v4927 = vunpack.c.h.b16 %v3486
    %v4928 = vunpack.c.l.b16 %v3487
    %v4929 = vunpack.c.h.b16 %v3487
    %v4930 = vunpack.c.l.b16 %v3488
    %v4931 = vunpack.c.h.b16 %v3488
    %v4932 = vunpack.c.l.b16 %v3489
    %v4933 = vunpack.c.h.b16 %v3489
    %v4934 = vunpack.c.l.b16 %v3490
    %v4935 = vunpack.c.h.b16 %v3490
    %v4936 = vunpack.c.l.b16 %v3491
    %v4937 = vunpack.c.h.b16 %v3491
    %v4938 = vunpack.c.l.b16 %v3492
    %v4939 = vunpack.c.h.b16 %v3492
    %v4940 = vunpack.c.l.b16 %v3493
    %v4941 = vunpack.c.h.b16 %v3493
    %v4942 = vunpack.c.l.b16 %v3494
    %v4943 = vunpack.c.h.b16 %v3494
    %v4944 = vunpack.c.l.b16 %v3495
    %v4945 = vunpack.c.h.b16 %v3495
    %v4946 = vunpack.c.l.b16 %v3496
    %v4947 = vunpack.c.h.b16 %v3496
    %v4948 = vunpack.c.l.b16 %v3497
    %v4949 = vunpack.c.h.b16 %v3497
    %v4950 = vunpack.c.l.b16 %v3498
    %v4951 = vunpack.c.h.b16 %v3498
    %v4952 = vunpack.c.l.b16 %v3499
    %v4953 = vunpack.c.h.b16 %v3499
    %v4954 = vunpack.c.l.b16 %v3500
    %v4955 = vunpack.c.h.b16 %v3500
    %v4956 = vunpack.c.l.b16 %v3501
    %v4957 = vunpack.c.h.b16 %v3501
    %v4958 = vunpack.c.l.b16 %v3502
    %v4959 = vunpack.c.h.b16 %v3502
    %v4960 = vunpack.c.l.b16 %v3503
    %v4961 = vunpack.c.h.b16 %v3503
    %v4962 = vunpack.c.l.b16 %v3504
    %v4963 = vunpack.c.h.b16 %v3504
    %v4964 = vunpack.c.l.b16 %v3505
    %v4965 = vunpack.c.h.b16 %v3505
    %v4966 = vunpack.c.l.b16 %v3506
    %v4967 = vunpack.c.h.b16 %v3506
    %v4968 = vunpack.c.l.b16 %v3507
    %v4969 = vunpack.c.h.b16 %v3507
    %v4970 = vunpack.c.l.b16 %v3508
    %v4971 = vunpack.c.h.b16 %v3508
    %v4972 = vunpack.c.l.b16 %v3509
    %v4973 = vunpack.c.h.b16 %v3509
    %v4974 = vunpack.c.l.b16 %v3510
    %v4975 = vunpack.c.h.b16 %v3510
    %v4976 = vunpack.c.l.b16 %v3511
    %v4977 = vunpack.c.h.b16 %v3511
    %v4978 = vunpack.c.l.b16 %v3512
    %v4979 = vunpack.c.h.b16 %v3512
    %v4980 = vunpack.c.l.b16 %v3513
    %v4981 = vunpack.c.h.b16 %v3513
    %v4982 = vunpack.c.l.b16 %v3514
    %v4983 = vunpack.c.h.b16 %v3514
    %v4984 = vunpack.c.l.b16 %v3515
    %v4985 = vunpack.c.h.b16 %v3515
    %v4986 = vunpack.c.l.b16 %v3516
    %v4987 = vunpack.c.h.b16 %v3516
    %v4988 = vunpack.c.l.b16 %v3517
    %v4989 = vunpack.c.h.b16 %v3517
    %v4990 = vunpack.c.l.b16 %v3518
    %v4991 = vunpack.c.h.b16 %v3518
    %v4992 = vunpack.c.l.b16 %v3519
    %v4993 = vunpack.c.h.b16 %v3519
    %v4994 = vunpack.c.l.b16 %v3520
    %v4995 = vunpack.c.h.b16 %v3520
    %v4996 = vunpack.c.l.b16 %v3521
    %v4997 = vunpack.c.h.b16 %v3521
    %v4998 = vunpack.c.l.b16 %v3522
    %v4999 = vunpack.c.h.b16 %v3522
    %v5000 = vunpack.c.l.b16 %v3523
    %v5001 = vunpack.c.h.b16 %v3523
    %v5002 = vunpack.c.l.b16 %v3524
    %v5003 = vunpack.c.h.b16 %v3524
    %v5004 = vunpack.c.l.b16 %v3525
    %v5005 = vunpack.c.h.b16 %v3525
    %v5006 = vunpack.c.l.b16 %v3526
    %v5007 = vunpack.c.h.b16 %v3526
    %v5008 = vunpack.c.l.b16 %v3527
    %v5009 = vunpack.c.h.b16 %v3527
    %v5010 = vunpack.c.l.b16 %v3528
    %v5011 = vunpack.c.h.b16 %v3528
    %v5012 = vunpack.c.l.b16 %v3529
    %v5013 = vunpack.c.h.b16 %v3529
    %v5014 = vunpack.c.l.b16 %v3530
    %v5015 = vunpack.c.h.b16 %v3530
    %v5016 = vunpack.c.l.b16 %v3531
    %v5017 = vunpack.c.h.b16 %v3531
    %v5018 = vunpack.c.l.b16 %v3532
    %v5019 = vunpack.c.h.b16 %v3532
    %v5020 = vunpack.c.l.b16 %v3533
    %v5021 = vunpack.c.h.b16 %v3533
    %v5022 = vunpack.c.l.b16 %v3534
    %v5023 = vunpack.c.h.b16 %v3534
    %v5024 = vunpack.c.l.b16 %v3535
    %v5025 = vunpack.c.h.b16 %v3535
    %v5026 = vunpack.c.l.b16 %v3536
    %v5027 = vunpack.c.h.b16 %v3536
    %v5028 = vunpack.c.l.b16 %v3537
    %v5029 = vunpack.c.h.b16 %v3537
    %v5030 = vunpack.c.l.b16 %v3538
    %v5031 = vunpack.c.h.b16 %v3538
    %v5032 = vunpack.c.l.b16 %v3539
    %v5033 = vunpack.c.h.b16 %v3539
    %v5034 = vunpack.c.l.b16 %v3540
    %v5035 = vunpack.c.h.b16 %v3540
    %v5036 = vunpack.c.l.b16 %v3541
    %v5037 = vunpack.c.h.b16 %v3541
    %v5038 = vunpack.c.l.b16 %v3542
    %v5039 = vunpack.c.h.b16 %v3542
    %v5040 = vunpack.c.l.b16 %v3543
    %v5041 = vunpack.c.h.b16 %v3543
    %v5042 = vunpack.c.l.b16 %v3544
    %v5043 = vunpack.c.h.b16 %v3544
    %v5044 = vunpack.c.l.b16 %v3545
    %v5045 = vunpack.c.h.b16 %v3545
    %v5046 = vunpack.c.l.b16 %v3546
    %v5047 = vunpack.c.h.b16 %v3546
    %v5048 = vunpack.c.l.b16 %v3547
    %v5049 = vunpack.c.h.b16 %v3547
    %v5050 = vunpack.c.l.b16 %v3548
    %v5051 = vunpack.c.h.b16 %v3548
    %v5052 = vunpack.c.l.b16 %v3549
    %v5053 = vunpack.c.h.b16 %v3549
    %v5054 = vunpack.c.l.b16 %v3550
    %v5055 = vunpack.c.h.b16 %v3550
    %v5056 = vunpack.c.l.b16 %v3551
    %v5057 = vunpack.c.h.b16 %v3551
    %v5058 = vunpack.c.l.b16 %v3552
    %v5059 = vunpack.c.h.b16 %v3552
    %v5060 = vunpack.c.l.b16 %v3553
    %v5061 = vunpack.c.h.b16 %v3553
    %v5062 = vunpack.c.l.b16 %v3554
    %v5063 = vunpack.c.h.b16 %v3554
    %v5064 = vunpack.c.l.b16 %v3555
    %v5065 = vunpack.c.h.b16 %v3555
    %v5066 = vunpack.c.l.b16 %v3556
    %v5067 = vunpack.c.h.b16 %v3556
    %v5068 = vunpack.c.l.b16 %v3557
    %v5069 = vunpack.c.h.b16 %v3557
    %v5070 = vunpack.c.l.b16 %v3558
    %v5071 = vunpack.c.h.b16 %v3558
    %v5072 = vunpack.c.l.b16 %v3559
    %v5073 = vunpack.c.h.b16 %v3559
    %v5074 = vunpack.c.l.b16 %v3560
    %v5075 = vunpack.c.h.b16 %v3560
    %v5076 = vunpack.c.l.b16 %v3561
    %v5077 = vunpack.c.h.b16 %v3561
    %v5078 = vunpack.c.l.b16 %v3562
    %v5079 = vunpack.c.h.b16 %v3562
    %v5080 = vunpack.c.l.b16 %v3563
    %v5081 = vunpack.c.h.b16 %v3563
    %v5082 = vunpack.c.l.b16 %v3564
    %v5083 = vunpack.c.h.b16 %v3564
    %v5084 = vunpack.c.l.b16 %v3565
    %v5085 = vunpack.c.h.b16 %v3565
    %v5086 = vunpack.c.l.b16 %v3566
    %v5087 = vunpack.c.h.b16 %v3566
    %v5088 = vunpack.c.l.b16 %v3567
    %v5089 = vunpack.c.h.b16 %v3567
    %v5090 = vunpack.c.l.b16 %v3568
    %v5091 = vunpack.c.h.b16 %v3568
    %v5092 = vunpack.c.l.b16 %v3569
    %v5093 = vunpack.c.h.b16 %v3569
    %v5094 = vunpack.c.l.b16 %v3570
    %v5095 = vunpack.c.h.b16 %v3570
    %v5096 = vunpack.c.l.b16 %v3571
    %v5097 = vunpack.c.h.b16 %v3571
    %v5098 = vunpack.c.l.b16 %v3572
    %v5099 = vunpack.c.h.b16 %v3572
    %v5100 = vunpack.c.l.b16 %v3573
    %v5101 = vunpack.c.h.b16 %v3573
    %v5102 = vunpack.c.l.b16 %v3574
    %v5103 = vunpack.c.h.b16 %v3574
    %v5104 = vunpack.c.l.b16 %v3575
    %v5105 = vunpack.c.h.b16 %v3575
    %v5106 = vunpack.c.l.b16 %v3576
    %v5107 = vunpack.c.h.b16 %v3576
    %v5108 = vunpack.c.l.b16 %v3577
    %v5109 = vunpack.c.h.b16 %v3577
    %v5110 = vunpack.c.l.b16 %v3578
    %v5111 = vunpack.c.h.b16 %v3578
    %v5112 = vunpack.c.l.b16 %v3579
    %v5113 = vunpack.c.h.b16 %v3579
    %v5114 = vunpack.c.l.b16 %v3580
    %v5115 = vunpack.c.h.b16 %v3580
    %v5116 = vunpack.c.l.b16 %v3581
    %v5117 = vunpack.c.h.b16 %v3581
    %v5118 = vunpack.c.l.b16 %v3582
    %v5119 = vunpack.c.h.b16 %v3582
    %v5120 = vunpack.c.l.b16 %v3583
    %v5121 = vunpack.c.h.b16 %v3583
    %v5122 = vunpack.c.l.b16 %v3584
    %v5123 = vunpack.c.h.b16 %v3584
    %v5124 = vunpack.c.l.b16 %v3585
    %v5125 = vunpack.c.h.b16 %v3585
    %v5126 = vunpack.c.l.b16 %v3586
    %v5127 = vunpack.c.h.b16 %v3586
    %v5128 = vunpack.c.l.b16 %v3587
    %v5129 = vunpack.c.h.b16 %v3587
    %v5130 = vunpack.c.l.b16 %v3588
    %v5131 = vunpack.c.h.b16 %v3588
    %v5132 = vunpack.c.l.b16 %v3589
    %v5133 = vunpack.c.h.b16 %v3589
    %v5134 = vunpack.c.l.b16 %v3590
    %v5135 = vunpack.c.h.b16 %v3590
    %v5136 = vunpack.c.l.b16 %v3591
    %v5137 = vunpack.c.h.b16 %v3591
    %v5138 = vunpack.c.l.b16 %v3592
    %v5139 = vunpack.c.h.b16 %v3592
    %v5140 = vunpack.c.l.b16 %v3593
    %v5141 = vunpack.c.h.b16 %v3593
    %v5142 = vunpack.c.l.b16 %v3594
    %v5143 = vunpack.c.h.b16 %v3594
    %v5144 = vunpack.c.l.b16 %v3595
    %v5145 = vunpack.c.h.b16 %v3595
    %v5146 = vunpack.c.l.b16 %v3596
    %v5147 = vunpack.c.h.b16 %v3596
    %v5148 = vunpack.c.l.b16 %v3597
    %v5149 = vunpack.c.h.b16 %v3597
    %v5150 = vunpack.c.l.b16 %v3598
    %v5151 = vunpack.c.h.b16 %v3598
    %v5152 = vunpack.c.l.b16 %v3599
    %v5153 = vunpack.c.h.b16 %v3599
    %v5154 = vunpack.c.l.b16 %v3600
    %v5155 = vunpack.c.h.b16 %v3600
    %v5156 = vunpack.c.l.b16 %v3601
    %v5157 = vunpack.c.h.b16 %v3601
    %v5158 = vunpack.c.l.b16 %v3602
    %v5159 = vunpack.c.h.b16 %v3602
    %v5160 = vunpack.c.l.b16 %v3603
    %v5161 = vunpack.c.h.b16 %v3603
    %v5162 = vunpack.c.l.b16 %v3604
    %v5163 = vunpack.c.h.b16 %v3604
    %v5164 = vunpack.c.l.b16 %v3605
    %v5165 = vunpack.c.h.b16 %v3605
    %v5166 = vunpack.c.l.b16 %v3606
    %v5167 = vunpack.c.h.b16 %v3606
    %v5168 = vunpack.c.l.b16 %v3607
    %v5169 = vunpack.c.h.b16 %v3607
    %v5170 = vunpack.c.l.b16 %v3608
    %v5171 = vunpack.c.h.b16 %v3608
    %v5172 = vunpack.c.l.b16 %v3609
    %v5173 = vunpack.c.h.b16 %v3609
    %v5174 = vunpack.c.l.b16 %v3610
    %v5175 = vunpack.c.h.b16 %v3610
    %v5176 = vunpack.c.l.b16 %v3611
    %v5177 = vunpack.c.h.b16 %v3611
    %v5178 = vunpack.c.l.b16 %v3612
    %v5179 = vunpack.c.h.b16 %v3612
    %v5180 = vunpack.c.l.b16 %v3613
    %v5181 = vunpack.c.h.b16 %v3613
    %v5182 = vunpack.c.l.b16 %v3614
    %v5183 = vunpack.c.h.b16 %v3614
    %v5184 = vunpack.c.l.b16 %v3615
    %v5185 = vunpack.c.h.b16 %v3615
    %v5186 = vunpack.c.l.b16 %v3616
    %v5187 = vunpack.c.h.b16 %v3616
    %v5188 = vunpack.c.l.b16 %v3617
    %v5189 = vunpack.c.h.b16 %v3617
    %v5190 = vunpack.c.l.b16 %v3618
    %v5191 = vunpack.c.h.b16 %v3618
    %v5192 = vunpack.c.l.b16 %v3619
    %v5193 = vunpack.c.h.b16 %v3619
    %v5194 = vunpack.c.l.b16 %v3620
    %v5195 = vunpack.c.h.b16 %v3620
    %v5196 = vunpack.c.l.b16 %v3621
    %v5197 = vunpack.c.h.b16 %v3621
    %v5198 = vunpack.c.l.b16 %v3622
    %v5199 = vunpack.c.h.b16 %v3622
    %v5200 = vunpack.c.l.b16 %v3623
    %v5201 = vunpack.c.h.b16 %v3623
    %v5202 = vpack.c.b16 %v4186, %v4178
    %v5203 = vpack.c.b16 %v4187, %v4179
    %v5204 = vpack.c.b16 %v4188, %v4180
    %v5205 = vpack.c.b16 %v4189, %v4181
    %v5206 = vpack.c.b16 %v4190, %v4182
    %v5207 = vpack.c.b16 %v4191, %v4183
    %v5208 = vpack.c.b16 %v4192, %v4184
    %v5209 = vpack.c.b16 %v4193, %v4185
    %v5210 = vpack.c.b16 %v4202, %v4194
    %v5211 = vpack.c.b16 %v4203, %v4195
    %v5212 = vpack.c.b16 %v4204, %v4196
    %v5213 = vpack.c.b16 %v4205, %v4197
    %v5214 = vpack.c.b16 %v4206, %v4198
    %v5215 = vpack.c.b16 %v4207, %v4199
    %v5216 = vpack.c.b16 %v4208, %v4200
    %v5217 = vpack.c.b16 %v4209, %v4201
    %v5218 = vpack.c.b16 %v4218, %v4210
    %v5219 = vpack.c.b16 %v4219, %v4211
    %v5220 = vpack.c.b16 %v4220, %v4212
    %v5221 = vpack.c.b16 %v4221, %v4213
    %v5222 = vpack.c.b16 %v4222, %v4214
    %v5223 = vpack.c.b16 %v4223, %v4215
    %v5224 = vpack.c.b16 %v4224, %v4216
    %v5225 = vpack.c.b16 %v4225, %v4217
    %v5226 = vpack.c.b16 %v4234, %v4226
    %v5227 = vpack.c.b16 %v4235, %v4227
    %v5228 = vpack.c.b16 %v4236, %v4228
    %v5229 = vpack.c.b16 %v4237, %v4229
    %v5230 = vpack.c.b16 %v4238, %v4230
    %v5231 = vpack.c.b16 %v4239, %v4231
    %v5232 = vpack.c.b16 %v4240, %v4232
    %v5233 = vpack.c.b16 %v4241, %v4233
    %v5234 = vpack.c.b16 %v4250, %v4242
    %v5235 = vpack.c.b16 %v4251, %v4243
    %v5236 = vpack.c.b16 %v4252, %v4244
    %v5237 = vpack.c.b16 %v4253, %v4245
    %v5238 = vpack.c.b16 %v4254, %v4246
    %v5239 = vpack.c.b16 %v4255, %v4247
    %v5240 = vpack.c.b16 %v4256, %v4248
    %v5241 = vpack.c.b16 %v4257, %v4249
    %v5242 = vpack.c.b16 %v4266, %v4258
    %v5243 = vpack.c.b16 %v4267, %v4259
    %v5244 = vpack.c.b16 %v4268, %v4260
    %v5245 = vpack.c.b16 %v4269, %v4261
    %v5246 = vpack.c.b16 %v4270, %v4262
    %v5247 = vpack.c.b16 %v4271, %v4263
    %v5248 = vpack.c.b16 %v4272, %v4264
    %v5249 = vpack.c.b16 %v4273, %v4265
    %v5250 = vpack.c.b16 %v4282, %v4274
    %v5251 = vpack.c.b16 %v4283, %v4275
    %v5252 = vpack.c.b16 %v4284, %v4276
    %v5253 = vpack.c.b16 %v4285, %v4277
    %v5254 = vpack.c.b16 %v4286, %v4278
    %v5255 = vpack.c.b16 %v4287, %v4279
    %v5256 = vpack.c.b16 %v4288, %v4280
    %v5257 = vpack.c.b16 %v4289, %v4281
    %v5258 = vpack.c.b16 %v4298, %v4290
    %v5259 = vpack.c.b16 %v4299, %v4291
    %v5260 = vpack.c.b16 %v4300, %v4292
    %v5261 = vpack.c.b16 %v4301, %v4293
    %v5262 = vpack.c.b16 %v4302, %v4294
    %v5263 = vpack.c.b16 %v4303, %v4295
    %v5264 = vpack.c.b16 %v4304, %v4296
    %v5265 = vpack.c.b16 %v4305, %v4297
    %v5266 = vpack.c.b16 %v4314, %v4306
    %v5267 = vpack.c.b16 %v4315, %v4307
    %v5268 = vpack.c.b16 %v4316, %v4308
    %v5269 = vpack.c.b16 %v4317, %v4309
    %v5270 = vpack.c.b16 %v4318, %v4310
    %v5271 = vpack.c.b16 %v4319, %v4311
    %v5272 = vpack.c.b16 %v4320, %v4312
    %v5273 = vpack.c.b16 %v4321, %v4313
    %v5274 = vpack.c.b16 %v4330, %v4322
    %v5275 = vpack.c.b16 %v4331, %v4323
    %v5276 = vpack.c.b16 %v4332, %v4324
    %v5277 = vpack.c.b16 %v4333, %v4325
    %v5278 = vpack.c.b16 %v4334, %v4326
    %v5279 = vpack.c.b16 %v4335, %v4327
    %v5280 = vpack.c.b16 %v4336, %v4328
    %v5281 = vpack.c.b16 %v4337, %v4329
    %v5282 = vpack.c.b16 %v4346, %v4338
    %v5283 = vpack.c.b16 %v4347, %v4339
    %v5284 = vpack.c.b16 %v4348, %v4340
    %v5285 = vpack.c.b16 %v4349, %v4341
    %v5286 = vpack.c.b16 %v4350, %v4342
    %v5287 = vpack.c.b16 %v4351, %v4343
    %v5288 = vpack.c.b16 %v4352, %v4344
    %v5289 = vpack.c.b16 %v4353, %v4345
    %v5290 = vpack.c.b16 %v4362, %v4354
    %v5291 = vpack.c.b16 %v4363, %v4355
    %v5292 = vpack.c.b16 %v4364, %v4356
    %v5293 = vpack.c.b16 %v4365, %v4357
    %v5294 = vpack.c.b16 %v4366, %v4358
    %v5295 = vpack.c.b16 %v4367, %v4359
    %v5296 = vpack.c.b16 %v4368, %v4360
    %v5297 = vpack.c.b16 %v4369, %v4361
    %v5298 = vpack.c.b16 %v4378, %v4370
    %v5299 = vpack.c.b16 %v4379, %v4371
    %v5300 = vpack.c.b16 %v4380, %v4372
    %v5301 = vpack.c.b16 %v4381, %v4373
    %v5302 = vpack.c.b16 %v4382, %v4374
    %v5303 = vpack.c.b16 %v4383, %v4375
    %v5304 = vpack.c.b16 %v4384, %v4376
    %v5305 = vpack.c.b16 %v4385, %v4377
    %v5306 = vpack.c.b16 %v4394, %v4386
    %v5307 = vpack.c.b16 %v4395, %v4387
    %v5308 = vpack.c.b16 %v4396, %v4388
    %v5309 = vpack.c.b16 %v4397, %v4389
    %v5310 = vpack.c.b16 %v4398, %v4390
    %v5311 = vpack.c.b16 %v4399, %v4391
    %v5312 = vpack.c.b16 %v4400, %v4392
    %v5313 = vpack.c.b16 %v4401, %v4393
    %v5314 = vpack.c.b16 %v4410, %v4402
    %v5315 = vpack.c.b16 %v4411, %v4403
    %v5316 = vpack.c.b16 %v4412, %v4404
    %v5317 = vpack.c.b16 %v4413, %v4405
    %v5318 = vpack.c.b16 %v4414, %v4406
    %v5319 = vpack.c.b16 %v4415, %v4407
    %v5320 = vpack.c.b16 %v4416, %v4408
    %v5321 = vpack.c.b16 %v4417, %v4409
    %v5322 = vpack.c.b16 %v4426, %v4418
    %v5323 = vpack.c.b16 %v4427, %v4419
    %v5324 = vpack.c.b16 %v4428, %v4420
    %v5325 = vpack.c.b16 %v4429, %v4421
    %v5326 = vpack.c.b16 %v4430, %v4422
    %v5327 = vpack.c.b16 %v4431, %v4423
    %v5328 = vpack.c.b16 %v4432, %v4424
    %v5329 = vpack.c.b16 %v4433, %v4425
    %v5330 = vpack.c.b16 %v4442, %v4434
    %v5331 = vpack.c.b16 %v4443, %v4435
    %v5332 = vpack.c.b16 %v4444, %v4436
    %v5333 = vpack.c.b16 %v4445, %v4437
    %v5334 = vpack.c.b16 %v4446, %v4438
    %v5335 = vpack.c.b16 %v4447, %v4439
    %v5336 = vpack.c.b16 %v4448, %v4440
    %v5337 = vpack.c.b16 %v4449, %v4441
    %v5338 = vpack.c.b16 %v4458, %v4450
    %v5339 = vpack.c.b16 %v4459, %v4451
    %v5340 = vpack.c.b16 %v4460, %v4452
    %v5341 = vpack.c.b16 %v4461, %v4453
    %v5342 = vpack.c.b16 %v4462, %v4454
    %v5343 = vpack.c.b16 %v4463, %v4455
    %v5344 = vpack.c.b16 %v4464, %v4456
    %v5345 = vpack.c.b16 %v4465, %v4457
    %v5346 = vpack.c.b16 %v4474, %v4466
    %v5347 = vpack.c.b16 %v4475, %v4467
    %v5348 = vpack.c.b16 %v4476, %v4468
    %v5349 = vpack.c.b16 %v4477, %v4469
    %v5350 = vpack.c.b16 %v4478, %v4470
    %v5351 = vpack.c.b16 %v4479, %v4471
    %v5352 = vpack.c.b16 %v4480, %v4472
    %v5353 = vpack.c.b16 %v4481, %v4473
    %v5354 = vpack.c.b16 %v4490, %v4482
    %v5355 = vpack.c.b16 %v4491, %v4483
    %v5356 = vpack.c.b16 %v4492, %v4484
    %v5357 = vpack.c.b16 %v4493, %v4485
    %v5358 = vpack.c.b16 %v4494, %v4486
    %v5359 = vpack.c.b16 %v4495, %v4487
    %v5360 = vpack.c.b16 %v4496, %v4488
    %v5361 = vpack.c.b16 %v4497, %v4489
    %v5362 = vpack.c.b16 %v4506, %v4498
    %v5363 = vpack.c.b16 %v4507, %v4499
    %v5364 = vpack.c.b16 %v4508, %v4500
    %v5365 = vpack.c.b16 %v4509, %v4501
    %v5366 = vpack.c.b16 %v4510, %v4502
    %v5367 = vpack.c.b16 %v4511, %v4503
    %v5368 = vpack.c.b16 %v4512, %v4504
    %v5369 = vpack.c.b16 %v4513, %v4505
    %v5370 = vpack.c.b16 %v4522, %v4514
    %v5371 = vpack.c.b16 %v4523, %v4515
    %v5372 = vpack.c.b16 %v4524, %v4516
    %v5373 = vpack.c.b16 %v4525, %v4517
    %v5374 = vpack.c.b16 %v4526, %v4518
    %v5375 = vpack.c.b16 %v4527, %v4519
    %v5376 = vpack.c.b16 %v4528, %v4520
    %v5377 = vpack.c.b16 %v4529, %v4521
    %v5378 = vpack.c.b16 %v4538, %v4530
    %v5379 = vpack.c.b16 %v4539, %v4531
    %v5380 = vpack.c.b16 %v4540, %v4532
    %v5381 = vpack.c.b16 %v4541, %v4533
    %v5382 = vpack.c.b16 %v4542, %v4534
    %v5383 = vpack.c.b16 %v4543, %v4535
    %v5384 = vpack.c.b16 %v4544, %v4536
    %v5385 = vpack.c.b16 %v4545, %v4537
    %v5386 = vpack.c.b16 %v4554, %v4546
    %v5387 = vpack.c.b16 %v4555, %v4547
    %v5388 = vpack.c.b16 %v4556, %v4548
    %v5389 = vpack.c.b16 %v4557, %v4549
    %v5390 = vpack.c.b16 %v4558, %v4550
    %v5391 = vpack.c.b16 %v4559, %v4551
    %v5392 = vpack.c.b16 %v4560, %v4552
    %v5393 = vpack.c.b16 %v4561, %v4553
    %v5394 = vpack.c.b16 %v4570, %v4562
    %v5395 = vpack.c.b16 %v4571, %v4563
    %v5396 = vpack.c.b16 %v4572, %v4564
    %v5397 = vpack.c.b16 %v4573, %v4565
    %v5398 = vpack.c.b16 %v4574, %v4566
    %v5399 = vpack.c.b16 %v4575, %v4567
    %v5400 = vpack.c.b16 %v4576, %v4568
    %v5401 = vpack.c.b16 %v4577, %v4569
    %v5402 = vpack.c.b16 %v4586, %v4578
    %v5403 = vpack.c.b16 %v4587, %v4579
    %v5404 = vpack.c.b16 %v4588, %v4580
    %v5405 = vpack.c.b16 %v4589, %v4581
    %v5406 = vpack.c.b16 %v4590, %v4582
    %v5407 = vpack.c.b16 %v4591, %v4583
    %v5408 = vpack.c.b16 %v4592, %v4584
    %v5409 = vpack.c.b16 %v4593, %v4585
    %v5410 = vpack.c.b16 %v4602, %v4594
    %v5411 = vpack.c.b16 %v4603, %v4595
    %v5412 = vpack.c.b16 %v4604, %v4596
    %v5413 = vpack.c.b16 %v4605, %v4597
    %v5414 = vpack.c.b16 %v4606, %v4598
    %v5415 = vpack.c.b16 %v4607, %v4599
    %v5416 = vpack.c.b16 %v4608, %v4600
    %v5417 = vpack.c.b16 %v4609, %v4601
    %v5418 = vpack.c.b16 %v4618, %v4610
    %v5419 = vpack.c.b16 %v4619, %v4611
    %v5420 = vpack.c.b16 %v4620, %v4612
    %v5421 = vpack.c.b16 %v4621, %v4613
    %v5422 = vpack.c.b16 %v4622, %v4614
    %v5423 = vpack.c.b16 %v4623, %v4615
    %v5424 = vpack.c.b16 %v4624, %v4616
    %v5425 = vpack.c.b16 %v4625, %v4617
    %v5426 = vpack.c.b16 %v4634, %v4626
    %v5427 = vpack.c.b16 %v4635, %v4627
    %v5428 = vpack.c.b16 %v4636, %v4628
    %v5429 = vpack.c.b16 %v4637, %v4629
    %v5430 = vpack.c.b16 %v4638, %v4630
    %v5431 = vpack.c.b16 %v4639, %v4631
    %v5432 = vpack.c.b16 %v4640, %v4632
    %v5433 = vpack.c.b16 %v4641, %v4633
    %v5434 = vpack.c.b16 %v4650, %v4642
    %v5435 = vpack.c.b16 %v4651, %v4643
    %v5436 = vpack.c.b16 %v4652, %v4644
    %v5437 = vpack.c.b16 %v4653, %v4645
    %v5438 = vpack.c.b16 %v4654, %v4646
    %v5439 = vpack.c.b16 %v4655, %v4647
    %v5440 = vpack.c.b16 %v4656, %v4648
    %v5441 = vpack.c.b16 %v4657, %v4649
    %v5442 = vpack.c.b16 %v4666, %v4658
    %v5443 = vpack.c.b16 %v4667, %v4659
    %v5444 = vpack.c.b16 %v4668, %v4660
    %v5445 = vpack.c.b16 %v4669, %v4661
    %v5446 = vpack.c.b16 %v4670, %v4662
    %v5447 = vpack.c.b16 %v4671, %v4663
    %v5448 = vpack.c.b16 %v4672, %v4664
    %v5449 = vpack.c.b16 %v4673, %v4665
    %v5450 = vpack.c.b16 %v4682, %v4674
    %v5451 = vpack.c.b16 %v4683, %v4675
    %v5452 = vpack.c.b16 %v4684, %v4676
    %v5453 = vpack.c.b16 %v4685, %v4677
    %v5454 = vpack.c.b16 %v4686, %v4678
    %v5455 = vpack.c.b16 %v4687, %v4679
    %v5456 = vpack.c.b16 %v4688, %v4680
    %v5457 = vpack.c.b16 %v4689, %v4681
    %v5458 = vpack.c.b16 %v4698, %v4690
    %v5459 = vpack.c.b16 %v4699, %v4691
    %v5460 = vpack.c.b16 %v4700, %v4692
    %v5461 = vpack.c.b16 %v4701, %v4693
    %v5462 = vpack.c.b16 %v4702, %v4694
    %v5463 = vpack.c.b16 %v4703, %v4695
    %v5464 = vpack.c.b16 %v4704, %v4696
    %v5465 = vpack.c.b16 %v4705, %v4697
    %v5466 = vpack.c.b16 %v4714, %v4706
    %v5467 = vpack.c.b16 %v4715, %v4707
    %v5468 = vpack.c.b16 %v4716, %v4708
    %v5469 = vpack.c.b16 %v4717, %v4709
    %v5470 = vpack.c.b16 %v4718, %v4710
    %v5471 = vpack.c.b16 %v4719, %v4711
    %v5472 = vpack.c.b16 %v4720, %v4712
    %v5473 = vpack.c.b16 %v4721, %v4713
    %v5474 = vpack.c.b16 %v4730, %v4722
    %v5475 = vpack.c.b16 %v4731, %v4723
    %v5476 = vpack.c.b16 %v4732, %v4724
    %v5477 = vpack.c.b16 %v4733, %v4725
    %v5478 = vpack.c.b16 %v4734, %v4726
    %v5479 = vpack.c.b16 %v4735, %v4727
    %v5480 = vpack.c.b16 %v4736, %v4728
    %v5481 = vpack.c.b16 %v4737, %v4729
    %v5482 = vpack.c.b16 %v4746, %v4738
    %v5483 = vpack.c.b16 %v4747, %v4739
    %v5484 = vpack.c.b16 %v4748, %v4740
    %v5485 = vpack.c.b16 %v4749, %v4741
    %v5486 = vpack.c.b16 %v4750, %v4742
    %v5487 = vpack.c.b16 %v4751, %v4743
    %v5488 = vpack.c.b16 %v4752, %v4744
    %v5489 = vpack.c.b16 %v4753, %v4745
    %v5490 = vpack.c.b16 %v4762, %v4754
    %v5491 = vpack.c.b16 %v4763, %v4755
    %v5492 = vpack.c.b16 %v4764, %v4756
    %v5493 = vpack.c.b16 %v4765, %v4757
    %v5494 = vpack.c.b16 %v4766, %v4758
    %v5495 = vpack.c.b16 %v4767, %v4759
    %v5496 = vpack.c.b16 %v4768, %v4760
    %v5497 = vpack.c.b16 %v4769, %v4761
    %v5498 = vpack.c.b16 %v4778, %v4770
    %v5499 = vpack.c.b16 %v4779, %v4771
    %v5500 = vpack.c.b16 %v4780, %v4772
    %v5501 = vpack.c.b16 %v4781, %v4773
    %v5502 = vpack.c.b16 %v4782, %v4774
    %v5503 = vpack.c.b16 %v4783, %v4775
    %v5504 = vpack.c.b16 %v4784, %v4776
    %v5505 = vpack.c.b16 %v4785, %v4777
    %v5506 = vpack.c.b16 %v4794, %v4786
    %v5507 = vpack.c.b16 %v4795, %v4787
    %v5508 = vpack.c.b16 %v4796, %v4788
    %v5509 = vpack.c.b16 %v4797, %v4789
    %v5510 = vpack.c.b16 %v4798, %v4790
    %v5511 = vpack.c.b16 %v4799, %v4791
    %v5512 = vpack.c.b16 %v4800, %v4792
    %v5513 = vpack.c.b16 %v4801, %v4793
    %v5514 = vpack.c.b16 %v4810, %v4802
    %v5515 = vpack.c.b16 %v4811, %v4803
    %v5516 = vpack.c.b16 %v4812, %v4804
    %v5517 = vpack.c.b16 %v4813, %v4805
    %v5518 = vpack.c.b16 %v4814, %v4806
    %v5519 = vpack.c.b16 %v4815, %v4807
    %v5520 = vpack.c.b16 %v4816, %v4808
    %v5521 = vpack.c.b16 %v4817, %v4809
    %v5522 = vpack.c.b16 %v4826, %v4818
    %v5523 = vpack.c.b16 %v4827, %v4819
    %v5524 = vpack.c.b16 %v4828, %v4820
    %v5525 = vpack.c.b16 %v4829, %v4821
    %v5526 = vpack.c.b16 %v4830, %v4822
    %v5527 = vpack.c.b16 %v4831, %v4823
    %v5528 = vpack.c.b16 %v4832, %v4824
    %v5529 = vpack.c.b16 %v4833, %v4825
    %v5530 = vpack.c.b16 %v4842, %v4834
    %v5531 = vpack.c.b16 %v4843, %v4835
    %v5532 = vpack.c.b16 %v4844, %v4836
    %v5533 = vpack.c.b16 %v4845, %v4837
    %v5534 = vpack.c.b16 %v4846, %v4838
    %v5535 = vpack.c.b16 %v4847, %v4839
    %v5536 = vpack.c.b16 %v4848, %v4840
    %v5537 = vpack.c.b16 %v4849, %v4841
    %v5538 = vpack.c.b16 %v4858, %v4850
    %v5539 = vpack.c.b16 %v4859, %v4851
    %v5540 = vpack.c.b16 %v4860, %v4852
    %v5541 = vpack.c.b16 %v4861, %v4853
    %v5542 = vpack.c.b16 %v4862, %v4854
    %v5543 = vpack.c.b16 %v4863, %v4855
    %v5544 = vpack.c.b16 %v4864, %v4856
    %v5545 = vpack.c.b16 %v4865, %v4857
    %v5546 = vpack.c.b16 %v4874, %v4866
    %v5547 = vpack.c.b16 %v4875, %v4867
    %v5548 = vpack.c.b16 %v4876, %v4868
    %v5549 = vpack.c.b16 %v4877, %v4869
    %v5550 = vpack.c.b16 %v4878, %v4870
    %v5551 = vpack.c.b16 %v4879, %v4871
    %v5552 = vpack.c.b16 %v4880, %v4872
    %v5553 = vpack.c.b16 %v4881, %v4873
    %v5554 = vpack.c.b16 %v4890, %v4882
    %v5555 = vpack.c.b16 %v4891, %v4883
    %v5556 = vpack.c.b16 %v4892, %v4884
    %v5557 = vpack.c.b16 %v4893, %v4885
    %v5558 = vpack.c.b16 %v4894, %v4886
    %v5559 = vpack.c.b16 %v4895, %v4887
    %v5560 = vpack.c.b16 %v4896, %v4888
    %v5561 = vpack.c.b16 %v4897, %v4889
    %v5562 = vpack.c.b16 %v4906, %v4898
    %v5563 = vpack.c.b16 %v4907, %v4899
    %v5564 = vpack.c.b16 %v4908, %v4900
    %v5565 = vpack.c.b16 %v4909, %v4901
    %v5566 = vpack.c.b16 %v4910, %v4902
    %v5567 = vpack.c.b16 %v4911, %v4903
    %v5568 = vpack.c.b16 %v4912, %v4904
    %v5569 = vpack.c.b16 %v4913, %v4905
    %v5570 = vpack.c.b16 %v4922, %v4914
    %v5571 = vpack.c.b16 %v4923, %v4915
    %v5572 = vpack.c.b16 %v4924, %v4916
    %v5573 = vpack.c.b16 %v4925, %v4917
    %v5574 = vpack.c.b16 %v4926, %v4918
    %v5575 = vpack.c.b16 %v4927, %v4919
    %v5576 = vpack.c.b16 %v4928, %v4920
    %v5577 = vpack.c.b16 %v4929, %v4921
    %v5578 = vpack.c.b16 %v4938, %v4930
    %v5579 = vpack.c.b16 %v4939, %v4931
    %v5580 = vpack.c.b16 %v4940, %v4932
    %v5581 = vpack.c.b16 %v4941, %v4933
    %v5582 = vpack.c.b16 %v4942, %v4934
    %v5583 = vpack.c.b16 %v4943, %v4935
    %v5584 = vpack.c.b16 %v4944, %v4936
    %v5585 = vpack.c.b16 %v4945, %v4937
    %v5586 = vpack.c.b16 %v4954, %v4946
    %v5587 = vpack.c.b16 %v4955, %v4947
    %v5588 = vpack.c.b16 %v4956, %v4948
    %v5589 = vpack.c.b16 %v4957, %v4949
    %v5590 = vpack.c.b16 %v4958, %v4950
    %v5591 = vpack.c.b16 %v4959, %v4951
    %v5592 = vpack.c.b16 %v4960, %v4952
    %v5593 = vpack.c.b16 %v4961, %v4953
    %v5594 = vpack.c.b16 %v4970, %v4962
    %v5595 = vpack.c.b16 %v4971, %v4963
    %v5596 = vpack.c.b16 %v4972, %v4964
    %v5597 = vpack.c.b16 %v4973, %v4965
    %v5598 = vpack.c.b16 %v4974, %v4966
    %v5599 = vpack.c.b16 %v4975, %v4967
    %v5600 = vpack.c.b16 %v4976, %v4968
    %v5601 = vpack.c.b16 %v4977, %v4969
    %v5602 = vpack.c.b16 %v4986, %v4978
    %v5603 = vpack.c.b16 %v4987, %v4979
    %v5604 = vpack.c.b16 %v4988, %v4980
    %v5605 = vpack.c.b16 %v4989, %v4981
    %v5606 = vpack.c.b16 %v4990, %v4982
    %v5607 = vpack.c.b16 %v4991, %v4983
    %v5608 = vpack.c.b16 %v4992, %v4984
    %v5609 = vpack.c.b16 %v4993, %v4985
    %v5610 = vpack.c.b16 %v5002, %v4994
    %v5611 = vpack.c.b16 %v5003, %v4995
    %v5612 = vpack.c.b16 %v5004, %v4996
    %v5613 = vpack.c.b16 %v5005, %v4997
    %v5614 = vpack.c.b16 %v5006, %v4998
    %v5615 = vpack.c.b16 %v5007, %v4999
    %v5616 = vpack.c.b16 %v5008, %v5000
    %v5617 = vpack.c.b16 %v5009, %v5001
    %v5618 = vpack.c.b16 %v5018, %v5010
    %v5619 = vpack.c.b16 %v5019, %v5011
    %v5620 = vpack.c.b16 %v5020, %v5012
    %v5621 = vpack.c.b16 %v5021, %v5013
    %v5622 = vpack.c.b16 %v5022, %v5014
    %v5623 = vpack.c.b16 %v5023, %v5015
    %v5624 = vpack.c.b16 %v5024, %v5016
    %v5625 = vpack.c.b16 %v5025, %v5017
    %v5626 = vpack.c.b16 %v5034, %v5026
    %v5627 = vpack.c.b16 %v5035, %v5027
    %v5628 = vpack.c.b16 %v5036, %v5028
    %v5629 = vpack.c.b16 %v5037, %v5029
    %v5630 = vpack.c.b16 %v5038, %v5030
    %v5631 = vpack.c.b16 %v5039, %v5031
    %v5632 = vpack.c.b16 %v5040, %v5032
    %v5633 = vpack.c.b16 %v5041, %v5033
    %v5634 = vpack.c.b16 %v5050, %v5042
    %v5635 = vpack.c.b16 %v5051, %v5043
    %v5636 = vpack.c.b16 %v5052, %v5044
    %v5637 = vpack.c.b16 %v5053, %v5045
    %v5638 = vpack.c.b16 %v5054, %v5046
    %v5639 = vpack.c.b16 %v5055, %v5047
    %v5640 = vpack.c.b16 %v5056, %v5048
    %v5641 = vpack.c.b16 %v5057, %v5049
    %v5642 = vpack.c.b16 %v5066, %v5058
    %v5643 = vpack.c.b16 %v5067, %v5059
    %v5644 = vpack.c.b16 %v5068, %v5060
    %v5645 = vpack.c.b16 %v5069, %v5061
    %v5646 = vpack.c.b16 %v5070, %v5062
    %v5647 = vpack.c.b16 %v5071, %v5063
    %v5648 = vpack.c.b16 %v5072, %v5064
    %v5649 = vpack.c.b16 %v5073, %v5065
    %v5650 = vpack.c.b16 %v5082, %v5074
    %v5651 = vpack.c.b16 %v5083, %v5075
    %v5652 = vpack.c.b16 %v5084, %v5076
    %v5653 = vpack.c.b16 %v5085, %v5077
    %v5654 = vpack.c.b16 %v5086, %v5078
    %v5655 = vpack.c.b16 %v5087, %v5079
    %v5656 = vpack.c.b16 %v5088, %v5080
    %v5657 = vpack.c.b16 %v5089, %v5081
    %v5658 = vpack.c.b16 %v5098, %v5090
    %v5659 = vpack.c.b16 %v5099, %v5091
    %v5660 = vpack.c.b16 %v5100, %v5092
    %v5661 = vpack.c.b16 %v5101, %v5093
    %v5662 = vpack.c.b16 %v5102, %v5094
    %v5663 = vpack.c.b16 %v5103, %v5095
    %v5664 = vpack.c.b16 %v5104, %v5096
    %v5665 = vpack.c.b16 %v5105, %v5097
    %v5666 = vpack.c.b16 %v5114, %v5106
    %v5667 = vpack.c.b16 %v5115, %v5107
    %v5668 = vpack.c.b16 %v5116, %v5108
    %v5669 = vpack.c.b16 %v5117, %v5109
    %v5670 = vpack.c.b16 %v5118, %v5110
    %v5671 = vpack.c.b16 %v5119, %v5111
    %v5672 = vpack.c.b16 %v5120, %v5112
    %v5673 = vpack.c.b16 %v5121, %v5113
    %v5674 = vpack.c.b16 %v5130, %v5122
    %v5675 = vpack.c.b16 %v5131, %v5123
    %v5676 = vpack.c.b16 %v5132, %v5124
    %v5677 = vpack.c.b16 %v5133, %v5125
    %v5678 = vpack.c.b16 %v5134, %v5126
    %v5679 = vpack.c.b16 %v5135, %v5127
    %v5680 = vpack.c.b16 %v5136, %v5128
    %v5681 = vpack.c.b16 %v5137, %v5129
    %v5682 = vpack.c.b16 %v5146, %v5138
    %v5683 = vpack.c.b16 %v5147, %v5139
    %v5684 = vpack.c.b16 %v5148, %v5140
    %v5685 = vpack.c.b16 %v5149, %v5141
    %v5686 = vpack.c.b16 %v5150, %v5142
    %v5687 = vpack.c.b16 %v5151, %v5143
    %v5688 = vpack.c.b16 %v5152, %v5144
    %v5689 = vpack.c.b16 %v5153, %v5145
    %v5690 = vpack.c.b16 %v5162, %v5154
    %v5691 = vpack.c.b16 %v5163, %v5155
    %v5692 = vpack.c.b16 %v5164, %v5156
    %v5693 = vpack.c.b16 %v5165, %v5157
    %v5694 = vpack.c.b16 %v5166, %v5158
    %v5695 = vpack.c.b16 %v5167, %v5159
    %v5696 = vpack.c.b16 %v5168, %v5160
    %v5697 = vpack.c.b16 %v5169, %v5161
    %v5698 = vpack.c.b16 %v5178, %v5170
    %v5699 = vpack.c.b16 %v5179, %v5171
    %v5700 = vpack.c.b16 %v5180, %v5172
    %v5701 = vpack.c.b16 %v5181, %v5173
    %v5702 = vpack.c.b16 %v5182, %v5174
    %v5703 = vpack.c.b16 %v5183, %v5175
    %v5704 = vpack.c.b16 %v5184, %v5176
    %v5705 = vpack.c.b16 %v5185, %v5177
    %v5706 = vpack.c.b16 %v5194, %v5186
    %v5707 = vpack.c.b16 %v5195, %v5187
    %v5708 = vpack.c.b16 %v5196, %v5188
    %v5709 = vpack.c.b16 %v5197, %v5189
    %v5710 = vpack.c.b16 %v5198, %v5190
    %v5711 = vpack.c.b16 %v5199, %v5191
    %v5712 = vpack.c.b16 %v5200, %v5192
    %v5713 = vpack.c.b16 %v5201, %v5193
    %6226 = vmatprep.subr.bf16.mxu0 %v5259
    %6227 = vmatpush1.bf16.msra.mxu0 %v5258
    %6228 = vmatprep.subr.bf16.mxu0 %v5251
    %6229 = vmatpush1.bf16.msra.mxu0 %v5250
    %6230 = vmatprep.subr.bf16.mxu0 %v5243
    %6231 = vmatpush1.bf16.msra.mxu0 %v5242
    %6232 = vmatprep.subr.bf16.mxu0 %v5235
    %6233 = vmatpush1.bf16.msra.mxu0 %v5234
    %6234 = vmatprep.subr.bf16.mxu0 %v5227
    %6235 = vmatpush1.bf16.msra.mxu0 %v5226
    %6236 = vmatprep.subr.bf16.mxu0 %v5219
    %6237 = vmatpush1.bf16.msra.mxu0 %v5218
    %6238 = vmatprep.subr.bf16.mxu0 %v5211
    %6239 = vmatpush1.bf16.msra.mxu0 %v5210
    %6240 = vmatprep.subr.bf16.mxu0 %v5203
    %6241 = vmatpush1.bf16.msra.mxu0 %v5202
    %6242 = vmatprep.subr.bf16.mxu0 %v5323
    %6243 = vmatpush2.bf16.msra.mxu0 %v5322
    %6244 = vmatprep.subr.bf16.mxu0 %v5315
    %6245 = vmatpush2.bf16.msra.mxu0 %v5314
    %6246 = vmatprep.subr.bf16.mxu0 %v5307
    %6247 = vmatpush2.bf16.msra.mxu0 %v5306
    %6248 = vmatprep.subr.bf16.mxu0 %v5299
    %6249 = vmatpush2.bf16.msra.mxu0 %v5298
    %6250 = vmatprep.subr.bf16.mxu0 %v5291
    %6251 = vmatpush2.bf16.msra.mxu0 %v5290
    %6252 = vmatprep.subr.bf16.mxu0 %v5283
    %6253 = vmatpush2.bf16.msra.mxu0 %v5282
    %6254 = vmatprep.subr.bf16.mxu0 %v5275
    %6255 = vmatpush2.bf16.msra.mxu0 %v5274
    %6256 = vmatprep.subr.bf16.mxu0 %v5267
    %6257 = vmatpush2.bf16.msra.mxu0 %v5266
    %6258 = vmatprep.mubr.bf16.mxu0 %v3105
    %6259 = vmatmul.mubr.bf16.gmra.mxu0 %v3104
    %v6260 = vpop.f32.mrf.mxu0
    %v6261 = vadd.f32 %v3629, %v6260
    %v6262 = vpop.f32.mrf.mxu0
    %v6263 = vadd.f32 %v3633, %v6262
    %v6264 = vpop.f32.mrf.mxu0
    %v6265 = vpop.f32.mrf.mxu0
    %6266 = vdwg.mxu0
    %6267 = vmatprep.subr.bf16.mxu0 %v5387
    %6268 = vmatpush1.bf16.msra.mxu0 %v5386
    %6269 = vmatprep.subr.bf16.mxu0 %v5379
    %6270 = vmatpush1.bf16.msra.mxu0 %v5378
    %6271 = vmatprep.subr.bf16.mxu0 %v5371
    %6272 = vmatpush1.bf16.msra.mxu0 %v5370
    %6273 = vmatprep.subr.bf16.mxu0 %v5363
    %6274 = vmatpush1.bf16.msra.mxu0 %v5362
    %6275 = vmatprep.subr.bf16.mxu0 %v5355
    %6276 = vmatpush1.bf16.msra.mxu0 %v5354
    %6277 = vmatprep.subr.bf16.mxu0 %v5347
    %6278 = vmatpush1.bf16.msra.mxu0 %v5346
    %6279 = vmatprep.subr.bf16.mxu0 %v5339
    %6280 = vmatpush1.bf16.msra.mxu0 %v5338
    %6281 = vmatprep.subr.bf16.mxu0 %v5331
    %6282 = vmatpush1.bf16.msra.mxu0 %v5330
    %6283 = vmatprep.subr.bf16.mxu0 %v5451
    %6284 = vmatpush2.bf16.msra.mxu0 %v5450
    %6285 = vmatprep.subr.bf16.mxu0 %v5443
    %6286 = vmatpush2.bf16.msra.mxu0 %v5442
    %6287 = vmatprep.subr.bf16.mxu0 %v5435
    %6288 = vmatpush2.bf16.msra.mxu0 %v5434
    %6289 = vmatprep.subr.bf16.mxu0 %v5427
    %6290 = vmatpush2.bf16.msra.mxu0 %v5426
    %6291 = vmatprep.subr.bf16.mxu0 %v5419
    %6292 = vmatpush2.bf16.msra.mxu0 %v5418
    %6293 = vmatprep.subr.bf16.mxu0 %v5411
    %6294 = vmatpush2.bf16.msra.mxu0 %v5410
    %6295 = vmatprep.subr.bf16.mxu0 %v5403
    %6296 = vmatpush2.bf16.msra.mxu0 %v5402
    %6297 = vmatprep.subr.bf16.mxu0 %v5395
    %6298 = vmatpush2.bf16.msra.mxu0 %v5394
    %6299 = vmatprep.mubr.bf16.mxu0 %v3107
    %6300 = vmatmul.mubr.bf16.gmra.mxu0 %v3106
    %v6301 = vpop.f32.mrf.mxu0
    %v6302 = vadd.f32 %v6261, %v6301
    %v6303 = vpop.f32.mrf.mxu0
    %v6304 = vadd.f32 %v6263, %v6303
    %v6305 = vpop.f32.mrf.mxu0
    %v6306 = vpop.f32.mrf.mxu0
    %6307 = vdwg.mxu0
    %6308 = vmatprep.subr.bf16.mxu0 %v5515
    %6309 = vmatpush1.bf16.msra.mxu0 %v5514
    %6310 = vmatprep.subr.bf16.mxu0 %v5507
    %6311 = vmatpush1.bf16.msra.mxu0 %v5506
    %6312 = vmatprep.subr.bf16.mxu0 %v5499
    %6313 = vmatpush1.bf16.msra.mxu0 %v5498
    %6314 = vmatprep.subr.bf16.mxu0 %v5491
    %6315 = vmatpush1.bf16.msra.mxu0 %v5490
    %6316 = vmatprep.subr.bf16.mxu0 %v5483
    %6317 = vmatpush1.bf16.msra.mxu0 %v5482
    %6318 = vmatprep.subr.bf16.mxu0 %v5475
    %6319 = vmatpush1.bf16.msra.mxu0 %v5474
    %6320 = vmatprep.subr.bf16.mxu0 %v5467
    %6321 = vmatpush1.bf16.msra.mxu0 %v5466
    %6322 = vmatprep.subr.bf16.mxu0 %v5459
    %6323 = vmatpush1.bf16.msra.mxu0 %v5458
    %6324 = vmatprep.subr.bf16.mxu0 %v5579
    %6325 = vmatpush2.bf16.msra.mxu0 %v5578
    %6326 = vmatprep.subr.bf16.mxu0 %v5571
    %6327 = vmatpush2.bf16.msra.mxu0 %v5570
    %6328 = vmatprep.subr.bf16.mxu0 %v5563
    %6329 = vmatpush2.bf16.msra.mxu0 %v5562
    %6330 = vmatprep.subr.bf16.mxu0 %v5555
    %6331 = vmatpush2.bf16.msra.mxu0 %v5554
    %6332 = vmatprep.subr.bf16.mxu0 %v5547
    %6333 = vmatpush2.bf16.msra.mxu0 %v5546
    %6334 = vmatprep.subr.bf16.mxu0 %v5539
    %6335 = vmatpush2.bf16.msra.mxu0 %v5538
    %6336 = vmatprep.subr.bf16.mxu0 %v5531
    %6337 = vmatpush2.bf16.msra.mxu0 %v5530
    %6338 = vmatprep.subr.bf16.mxu0 %v5523
    %6339 = vmatpush2.bf16.msra.mxu0 %v5522
    %6340 = vmatprep.mubr.bf16.mxu0 %v3109
    %6341 = vmatmul.mubr.bf16.gmra.mxu0 %v3108
    %v6342 = vpop.f32.mrf.mxu0
    %v6343 = vadd.f32 %v6302, %v6342
    %v6344 = vpop.f32.mrf.mxu0
    %v6345 = vadd.f32 %v6304, %v6344
    %v6346 = vpop.f32.mrf.mxu0
    %v6347 = vpop.f32.mrf.mxu0
    %6348 = vdwg.mxu0
    %6349 = vmatprep.subr.bf16.mxu0 %v5643
    %6350 = vmatpush1.bf16.msra.mxu0 %v5642
    %6351 = vmatprep.subr.bf16.mxu0 %v5635
    %6352 = vmatpush1.bf16.msra.mxu0 %v5634
    %6353 = vmatprep.subr.bf16.mxu0 %v5627
    %6354 = vmatpush1.bf16.msra.mxu0 %v5626
    %6355 = vmatprep.subr.bf16.mxu0 %v5619
    %6356 = vmatpush1.bf16.msra.mxu0 %v5618
    %6357 = vmatprep.subr.bf16.mxu0 %v5611
    %6358 = vmatpush1.bf16.msra.mxu0 %v5610
    %6359 = vmatprep.subr.bf16.mxu0 %v5603
    %6360 = vmatpush1.bf16.msra.mxu0 %v5602
    %6361 = vmatprep.subr.bf16.mxu0 %v5595
    %6362 = vmatpush1.bf16.msra.mxu0 %v5594
    %6363 = vmatprep.subr.bf16.mxu0 %v5587
    %6364 = vmatpush1.bf16.msra.mxu0 %v5586
    %6365 = vmatprep.subr.bf16.mxu0 %v5707
    %6366 = vmatpush2.bf16.msra.mxu0 %v5706
    %6367 = vmatprep.subr.bf16.mxu0 %v5699
    %6368 = vmatpush2.bf16.msra.mxu0 %v5698
    %6369 = vmatprep.subr.bf16.mxu0 %v5691
    %6370 = vmatpush2.bf16.msra.mxu0 %v5690
    %6371 = vmatprep.subr.bf16.mxu0 %v5683
    %6372 = vmatpush2.bf16.msra.mxu0 %v5682
    %6373 = vmatprep.subr.bf16.mxu0 %v5675
    %6374 = vmatpush2.bf16.msra.mxu0 %v5674
    %6375 = vmatprep.subr.bf16.mxu0 %v5667
    %6376 = vmatpush2.bf16.msra.mxu0 %v5666
    %6377 = vmatprep.subr.bf16.mxu0 %v5659
    %6378 = vmatpush2.bf16.msra.mxu0 %v5658
    %6379 = vmatprep.subr.bf16.mxu0 %v5651
    %6380 = vmatpush2.bf16.msra.mxu0 %v5650
    %6381 = vmatprep.mubr.bf16.mxu0 %v3111
    %6382 = vmatmul.mubr.bf16.gmra.mxu0 %v3110
    %v6383 = vpop.f32.mrf.mxu0
    %v6384 = vadd.f32 %v6343, %v6383
    %v6385 = vpop.f32.mrf.mxu0
    %v6386 = vadd.f32 %v6345, %v6385
    %v6387 = vpop.f32.mrf.mxu0
    %v6388 = vpop.f32.mrf.mxu0
    %6389 = vdwg.mxu0
    %6390 = vmatprep.subr.bf16.mxu0 %v5261
    %6391 = vmatpush1.bf16.msra.mxu0 %v5260
    %6392 = vmatprep.subr.bf16.mxu0 %v5253
    %6393 = vmatpush1.bf16.msra.mxu0 %v5252
    %6394 = vmatprep.subr.bf16.mxu0 %v5245
    %6395 = vmatpush1.bf16.msra.mxu0 %v5244
    %6396 = vmatprep.subr.bf16.mxu0 %v5237
    %6397 = vmatpush1.bf16.msra.mxu0 %v5236
    %6398 = vmatprep.subr.bf16.mxu0 %v5229
    %6399 = vmatpush1.bf16.msra.mxu0 %v5228
    %6400 = vmatprep.subr.bf16.mxu0 %v5221
    %6401 = vmatpush1.bf16.msra.mxu0 %v5220
    %6402 = vmatprep.subr.bf16.mxu0 %v5213
    %6403 = vmatpush1.bf16.msra.mxu0 %v5212
    %6404 = vmatprep.subr.bf16.mxu0 %v5205
    %6405 = vmatpush1.bf16.msra.mxu0 %v5204
    %6406 = vmatprep.subr.bf16.mxu0 %v5325
    %6407 = vmatpush2.bf16.msra.mxu0 %v5324
    %6408 = vmatprep.subr.bf16.mxu0 %v5317
    %6409 = vmatpush2.bf16.msra.mxu0 %v5316
    %6410 = vmatprep.subr.bf16.mxu0 %v5309
    %6411 = vmatpush2.bf16.msra.mxu0 %v5308
    %6412 = vmatprep.subr.bf16.mxu0 %v5301
    %6413 = vmatpush2.bf16.msra.mxu0 %v5300
    %6414 = vmatprep.subr.bf16.mxu0 %v5293
    %6415 = vmatpush2.bf16.msra.mxu0 %v5292
    %6416 = vmatprep.subr.bf16.mxu0 %v5285
    %6417 = vmatpush2.bf16.msra.mxu0 %v5284
    %6418 = vmatprep.subr.bf16.mxu0 %v5277
    %6419 = vmatpush2.bf16.msra.mxu0 %v5276
    %6420 = vmatprep.subr.bf16.mxu0 %v5269
    %6421 = vmatpush2.bf16.msra.mxu0 %v5268
    %6422 = vmatprep.mubr.bf16.mxu0 %v3105
    %6423 = vmatmul.mubr.bf16.gmra.mxu0 %v3104
    %v6424 = vpop.f32.mrf.mxu0
    %v6425 = vadd.f32 %v3637, %v6424
    %v6426 = vpop.f32.mrf.mxu0
    %v6427 = vadd.f32 %v3641, %v6426
    %v6428 = vpop.f32.mrf.mxu0
    %v6429 = vpop.f32.mrf.mxu0
    %6430 = vdwg.mxu0
    %6431 = vmatprep.subr.bf16.mxu0 %v5389
    %6432 = vmatpush1.bf16.msra.mxu0 %v5388
    %6433 = vmatprep.subr.bf16.mxu0 %v5381
    %6434 = vmatpush1.bf16.msra.mxu0 %v5380
    %6435 = vmatprep.subr.bf16.mxu0 %v5373
    %6436 = vmatpush1.bf16.msra.mxu0 %v5372
    %6437 = vmatprep.subr.bf16.mxu0 %v5365
    %6438 = vmatpush1.bf16.msra.mxu0 %v5364
    %6439 = vmatprep.subr.bf16.mxu0 %v5357
    %6440 = vmatpush1.bf16.msra.mxu0 %v5356
    %6441 = vmatprep.subr.bf16.mxu0 %v5349
    %6442 = vmatpush1.bf16.msra.mxu0 %v5348
    %6443 = vmatprep.subr.bf16.mxu0 %v5341
    %6444 = vmatpush1.bf16.msra.mxu0 %v5340
    %6445 = vmatprep.subr.bf16.mxu0 %v5333
    %6446 = vmatpush1.bf16.msra.mxu0 %v5332
    %6447 = vmatprep.subr.bf16.mxu0 %v5453
    %6448 = vmatpush2.bf16.msra.mxu0 %v5452
    %6449 = vmatprep.subr.bf16.mxu0 %v5445
    %6450 = vmatpush2.bf16.msra.mxu0 %v5444
    %6451 = vmatprep.subr.bf16.mxu0 %v5437
    %6452 = vmatpush2.bf16.msra.mxu0 %v5436
    %6453 = vmatprep.subr.bf16.mxu0 %v5429
    %6454 = vmatpush2.bf16.msra.mxu0 %v5428
    %6455 = vmatprep.subr.bf16.mxu0 %v5421
    %6456 = vmatpush2.bf16.msra.mxu0 %v5420
    %6457 = vmatprep.subr.bf16.mxu0 %v5413
    %6458 = vmatpush2.bf16.msra.mxu0 %v5412
    %6459 = vmatprep.subr.bf16.mxu0 %v5405
    %6460 = vmatpush2.bf16.msra.mxu0 %v5404
    %6461 = vmatprep.subr.bf16.mxu0 %v5397
    %6462 = vmatpush2.bf16.msra.mxu0 %v5396
    %6463 = vmatprep.mubr.bf16.mxu0 %v3107
    %6464 = vmatmul.mubr.bf16.gmra.mxu0 %v3106
    %v6465 = vpop.f32.mrf.mxu0
    %v6466 = vadd.f32 %v6425, %v6465
    %v6467 = vpop.f32.mrf.mxu0
    %v6468 = vadd.f32 %v6427, %v6467
    %v6469 = vpop.f32.mrf.mxu0
    %v6470 = vpop.f32.mrf.mxu0
    %6471 = vdwg.mxu0
    %6472 = vmatprep.subr.bf16.mxu0 %v5517
    %6473 = vmatpush1.bf16.msra.mxu0 %v5516
    %6474 = vmatprep.subr.bf16.mxu0 %v5509
    %6475 = vmatpush1.bf16.msra.mxu0 %v5508
    %6476 = vmatprep.subr.bf16.mxu0 %v5501
    %6477 = vmatpush1.bf16.msra.mxu0 %v5500
    %6478 = vmatprep.subr.bf16.mxu0 %v5493
    %6479 = vmatpush1.bf16.msra.mxu0 %v5492
    %6480 = vmatprep.subr.bf16.mxu0 %v5485
    %6481 = vmatpush1.bf16.msra.mxu0 %v5484
    %6482 = vmatprep.subr.bf16.mxu0 %v5477
    %6483 = vmatpush1.bf16.msra.mxu0 %v5476
    %6484 = vmatprep.subr.bf16.mxu0 %v5469
    %6485 = vmatpush1.bf16.msra.mxu0 %v5468
    %6486 = vmatprep.subr.bf16.mxu0 %v5461
    %6487 = vmatpush1.bf16.msra.mxu0 %v5460
    %6488 = vmatprep.subr.bf16.mxu0 %v5581
    %6489 = vmatpush2.bf16.msra.mxu0 %v5580
    %6490 = vmatprep.subr.bf16.mxu0 %v5573
    %6491 = vmatpush2.bf16.msra.mxu0 %v5572
    %6492 = vmatprep.subr.bf16.mxu0 %v5565
    %6493 = vmatpush2.bf16.msra.mxu0 %v5564
    %6494 = vmatprep.subr.bf16.mxu0 %v5557
    %6495 = vmatpush2.bf16.msra.mxu0 %v5556
    %6496 = vmatprep.subr.bf16.mxu0 %v5549
    %6497 = vmatpush2.bf16.msra.mxu0 %v5548
    %6498 = vmatprep.subr.bf16.mxu0 %v5541
    %6499 = vmatpush2.bf16.msra.mxu0 %v5540
    %6500 = vmatprep.subr.bf16.mxu0 %v5533
    %6501 = vmatpush2.bf16.msra.mxu0 %v5532
    %6502 = vmatprep.subr.bf16.mxu0 %v5525
    %6503 = vmatpush2.bf16.msra.mxu0 %v5524
    %6504 = vmatprep.mubr.bf16.mxu0 %v3109
    %6505 = vmatmul.mubr.bf16.gmra.mxu0 %v3108
    %v6506 = vpop.f32.mrf.mxu0
    %v6507 = vadd.f32 %v6466, %v6506
    %v6508 = vpop.f32.mrf.mxu0
    %v6509 = vadd.f32 %v6468, %v6508
    %v6510 = vpop.f32.mrf.mxu0
    %v6511 = vpop.f32.mrf.mxu0
    %6512 = vdwg.mxu0
    %6513 = vmatprep.subr.bf16.mxu0 %v5645
    %6514 = vmatpush1.bf16.msra.mxu0 %v5644
    %6515 = vmatprep.subr.bf16.mxu0 %v5637
    %6516 = vmatpush1.bf16.msra.mxu0 %v5636
    %6517 = vmatprep.subr.bf16.mxu0 %v5629
    %6518 = vmatpush1.bf16.msra.mxu0 %v5628
    %6519 = vmatprep.subr.bf16.mxu0 %v5621
    %6520 = vmatpush1.bf16.msra.mxu0 %v5620
    %6521 = vmatprep.subr.bf16.mxu0 %v5613
    %6522 = vmatpush1.bf16.msra.mxu0 %v5612
    %6523 = vmatprep.subr.bf16.mxu0 %v5605
    %6524 = vmatpush1.bf16.msra.mxu0 %v5604
    %6525 = vmatprep.subr.bf16.mxu0 %v5597
    %6526 = vmatpush1.bf16.msra.mxu0 %v5596
    %6527 = vmatprep.subr.bf16.mxu0 %v5589
    %6528 = vmatpush1.bf16.msra.mxu0 %v5588
    %6529 = vmatprep.subr.bf16.mxu0 %v5709
    %6530 = vmatpush2.bf16.msra.mxu0 %v5708
    %6531 = vmatprep.subr.bf16.mxu0 %v5701
    %6532 = vmatpush2.bf16.msra.mxu0 %v5700
    %6533 = vmatprep.subr.bf16.mxu0 %v5693
    %6534 = vmatpush2.bf16.msra.mxu0 %v5692
    %6535 = vmatprep.subr.bf16.mxu0 %v5685
    %6536 = vmatpush2.bf16.msra.mxu0 %v5684
    %6537 = vmatprep.subr.bf16.mxu0 %v5677
    %6538 = vmatpush2.bf16.msra.mxu0 %v5676
    %6539 = vmatprep.subr.bf16.mxu0 %v5669
    %6540 = vmatpush2.bf16.msra.mxu0 %v5668
    %6541 = vmatprep.subr.bf16.mxu0 %v5661
    %6542 = vmatpush2.bf16.msra.mxu0 %v5660
    %6543 = vmatprep.subr.bf16.mxu0 %v5653
    %6544 = vmatpush2.bf16.msra.mxu0 %v5652
    %6545 = vmatprep.mubr.bf16.mxu0 %v3111
    %6546 = vmatmul.mubr.bf16.gmra.mxu0 %v3110
    %v6547 = vpop.f32.mrf.mxu0
    %v6548 = vadd.f32 %v6507, %v6547
    %v6549 = vpop.f32.mrf.mxu0
    %v6550 = vadd.f32 %v6509, %v6549
    %v6551 = vpop.f32.mrf.mxu0
    %v6552 = vpop.f32.mrf.mxu0
    %6553 = vdwg.mxu0
    %6554 = vmatprep.subr.bf16.mxu0 %v5263
    %6555 = vmatpush1.bf16.msra.mxu0 %v5262
    %6556 = vmatprep.subr.bf16.mxu0 %v5255
    %6557 = vmatpush1.bf16.msra.mxu0 %v5254
    %6558 = vmatprep.subr.bf16.mxu0 %v5247
    %6559 = vmatpush1.bf16.msra.mxu0 %v5246
    %6560 = vmatprep.subr.bf16.mxu0 %v5239
    %6561 = vmatpush1.bf16.msra.mxu0 %v5238
    %6562 = vmatprep.subr.bf16.mxu0 %v5231
    %6563 = vmatpush1.bf16.msra.mxu0 %v5230
    %6564 = vmatprep.subr.bf16.mxu0 %v5223
    %6565 = vmatpush1.bf16.msra.mxu0 %v5222
    %6566 = vmatprep.subr.bf16.mxu0 %v5215
    %6567 = vmatpush1.bf16.msra.mxu0 %v5214
    %6568 = vmatprep.subr.bf16.mxu0 %v5207
    %6569 = vmatpush1.bf16.msra.mxu0 %v5206
    %6570 = vmatprep.subr.bf16.mxu0 %v5327
    %6571 = vmatpush2.bf16.msra.mxu0 %v5326
    %6572 = vmatprep.subr.bf16.mxu0 %v5319
    %6573 = vmatpush2.bf16.msra.mxu0 %v5318
    %6574 = vmatprep.subr.bf16.mxu0 %v5311
    %6575 = vmatpush2.bf16.msra.mxu0 %v5310
    %6576 = vmatprep.subr.bf16.mxu0 %v5303
    %6577 = vmatpush2.bf16.msra.mxu0 %v5302
    %6578 = vmatprep.subr.bf16.mxu0 %v5295
    %6579 = vmatpush2.bf16.msra.mxu0 %v5294
    %6580 = vmatprep.subr.bf16.mxu0 %v5287
    %6581 = vmatpush2.bf16.msra.mxu0 %v5286
    %6582 = vmatprep.subr.bf16.mxu0 %v5279
    %6583 = vmatpush2.bf16.msra.mxu0 %v5278
    %6584 = vmatprep.subr.bf16.mxu0 %v5271
    %6585 = vmatpush2.bf16.msra.mxu0 %v5270
    %6586 = vmatprep.mubr.bf16.mxu0 %v3105
    %6587 = vmatmul.mubr.bf16.gmra.mxu0 %v3104
    %v6588 = vpop.f32.mrf.mxu0
    %v6589 = vadd.f32 %v3645, %v6588
    %v6590 = vpop.f32.mrf.mxu0
    %v6591 = vadd.f32 %v3649, %v6590
    %v6592 = vpop.f32.mrf.mxu0
    %v6593 = vpop.f32.mrf.mxu0
    %6594 = vdwg.mxu0
    %6595 = vmatprep.subr.bf16.mxu0 %v5391
    %6596 = vmatpush1.bf16.msra.mxu0 %v5390
    %6597 = vmatprep.subr.bf16.mxu0 %v5383
    %6598 = vmatpush1.bf16.msra.mxu0 %v5382
    %6599 = vmatprep.subr.bf16.mxu0 %v5375
    %6600 = vmatpush1.bf16.msra.mxu0 %v5374
    %6601 = vmatprep.subr.bf16.mxu0 %v5367
    %6602 = vmatpush1.bf16.msra.mxu0 %v5366
    %6603 = vmatprep.subr.bf16.mxu0 %v5359
    %6604 = vmatpush1.bf16.msra.mxu0 %v5358
    %6605 = vmatprep.subr.bf16.mxu0 %v5351
    %6606 = vmatpush1.bf16.msra.mxu0 %v5350
    %6607 = vmatprep.subr.bf16.mxu0 %v5343
    %6608 = vmatpush1.bf16.msra.mxu0 %v5342
    %6609 = vmatprep.subr.bf16.mxu0 %v5335
    %6610 = vmatpush1.bf16.msra.mxu0 %v5334
    %6611 = vmatprep.subr.bf16.mxu0 %v5455
    %6612 = vmatpush2.bf16.msra.mxu0 %v5454
    %6613 = vmatprep.subr.bf16.mxu0 %v5447
    %6614 = vmatpush2.bf16.msra.mxu0 %v5446
    %6615 = vmatprep.subr.bf16.mxu0 %v5439
    %6616 = vmatpush2.bf16.msra.mxu0 %v5438
    %6617 = vmatprep.subr.bf16.mxu0 %v5431
    %6618 = vmatpush2.bf16.msra.mxu0 %v5430
    %6619 = vmatprep.subr.bf16.mxu0 %v5423
    %6620 = vmatpush2.bf16.msra.mxu0 %v5422
    %6621 = vmatprep.subr.bf16.mxu0 %v5415
    %6622 = vmatpush2.bf16.msra.mxu0 %v5414
    %6623 = vmatprep.subr.bf16.mxu0 %v5407
    %6624 = vmatpush2.bf16.msra.mxu0 %v5406
    %6625 = vmatprep.subr.bf16.mxu0 %v5399
    %6626 = vmatpush2.bf16.msra.mxu0 %v5398
    %6627 = vmatprep.mubr.bf16.mxu0 %v3107
    %6628 = vmatmul.mubr.bf16.gmra.mxu0 %v3106
    %v6629 = vpop.f32.mrf.mxu0
    %v6630 = vadd.f32 %v6589, %v6629
    %v6631 = vpop.f32.mrf.mxu0
    %v6632 = vadd.f32 %v6591, %v6631
    %v6633 = vpop.f32.mrf.mxu0
    %v6634 = vpop.f32.mrf.mxu0
    %6635 = vdwg.mxu0
    %6636 = vmatprep.subr.bf16.mxu0 %v5519
    %6637 = vmatpush1.bf16.msra.mxu0 %v5518
    %6638 = vmatprep.subr.bf16.mxu0 %v5511
    %6639 = vmatpush1.bf16.msra.mxu0 %v5510
    %6640 = vmatprep.subr.bf16.mxu0 %v5503
    %6641 = vmatpush1.bf16.msra.mxu0 %v5502
    %6642 = vmatprep.subr.bf16.mxu0 %v5495
    %6643 = vmatpush1.bf16.msra.mxu0 %v5494
    %6644 = vmatprep.subr.bf16.mxu0 %v5487
    %6645 = vmatpush1.bf16.msra.mxu0 %v5486
    %6646 = vmatprep.subr.bf16.mxu0 %v5479
    %6647 = vmatpush1.bf16.msra.mxu0 %v5478
    %6648 = vmatprep.subr.bf16.mxu0 %v5471
    %6649 = vmatpush1.bf16.msra.mxu0 %v5470
    %6650 = vmatprep.subr.bf16.mxu0 %v5463
    %6651 = vmatpush1.bf16.msra.mxu0 %v5462
    %6652 = vmatprep.subr.bf16.mxu0 %v5583
    %6653 = vmatpush2.bf16.msra.mxu0 %v5582
    %6654 = vmatprep.subr.bf16.mxu0 %v5575
    %6655 = vmatpush2.bf16.msra.mxu0 %v5574
    %6656 = vmatprep.subr.bf16.mxu0 %v5567
    %6657 = vmatpush2.bf16.msra.mxu0 %v5566
    %6658 = vmatprep.subr.bf16.mxu0 %v5559
    %6659 = vmatpush2.bf16.msra.mxu0 %v5558
    %6660 = vmatprep.subr.bf16.mxu0 %v5551
    %6661 = vmatpush2.bf16.msra.mxu0 %v5550
    %6662 = vmatprep.subr.bf16.mxu0 %v5543
    %6663 = vmatpush2.bf16.msra.mxu0 %v5542
    %6664 = vmatprep.subr.bf16.mxu0 %v5535
    %6665 = vmatpush2.bf16.msra.mxu0 %v5534
    %6666 = vmatprep.subr.bf16.mxu0 %v5527
    %6667 = vmatpush2.bf16.msra.mxu0 %v5526
    %6668 = vmatprep.mubr.bf16.mxu0 %v3109
    %6669 = vmatmul.mubr.bf16.gmra.mxu0 %v3108
    %v6670 = vpop.f32.mrf.mxu0
    %v6671 = vadd.f32 %v6630, %v6670
    %v6672 = vpop.f32.mrf.mxu0
    %v6673 = vadd.f32 %v6632, %v6672
    %v6674 = vpop.f32.mrf.mxu0
    %v6675 = vpop.f32.mrf.mxu0
    %6676 = vdwg.mxu0
    %6677 = vmatprep.subr.bf16.mxu0 %v5647
    %6678 = vmatpush1.bf16.msra.mxu0 %v5646
    %6679 = vmatprep.subr.bf16.mxu0 %v5639
    %6680 = vmatpush1.bf16.msra.mxu0 %v5638
    %6681 = vmatprep.subr.bf16.mxu0 %v5631
    %6682 = vmatpush1.bf16.msra.mxu0 %v5630
    %6683 = vmatprep.subr.bf16.mxu0 %v5623
    %6684 = vmatpush1.bf16.msra.mxu0 %v5622
    %6685 = vmatprep.subr.bf16.mxu0 %v5615
    %6686 = vmatpush1.bf16.msra.mxu0 %v5614
    %6687 = vmatprep.subr.bf16.mxu0 %v5607
    %6688 = vmatpush1.bf16.msra.mxu0 %v5606
    %6689 = vmatprep.subr.bf16.mxu0 %v5599
    %6690 = vmatpush1.bf16.msra.mxu0 %v5598
    %6691 = vmatprep.subr.bf16.mxu0 %v5591
    %6692 = vmatpush1.bf16.msra.mxu0 %v5590
    %6693 = vmatprep.subr.bf16.mxu0 %v5711
    %6694 = vmatpush2.bf16.msra.mxu0 %v5710
    %6695 = vmatprep.subr.bf16.mxu0 %v5703
    %6696 = vmatpush2.bf16.msra.mxu0 %v5702
    %6697 = vmatprep.subr.bf16.mxu0 %v5695
    %6698 = vmatpush2.bf16.msra.mxu0 %v5694
    %6699 = vmatprep.subr.bf16.mxu0 %v5687
    %6700 = vmatpush2.bf16.msra.mxu0 %v5686
    %6701 = vmatprep.subr.bf16.mxu0 %v5679
    %6702 = vmatpush2.bf16.msra.mxu0 %v5678
    %6703 = vmatprep.subr.bf16.mxu0 %v5671
    %6704 = vmatpush2.bf16.msra.mxu0 %v5670
    %6705 = vmatprep.subr.bf16.mxu0 %v5663
    %6706 = vmatpush2.bf16.msra.mxu0 %v5662
    %6707 = vmatprep.subr.bf16.mxu0 %v5655
    %6708 = vmatpush2.bf16.msra.mxu0 %v5654
    %6709 = vmatprep.mubr.bf16.mxu0 %v3111
    %6710 = vmatmul.mubr.bf16.gmra.mxu0 %v3110
    %v6711 = vpop.f32.mrf.mxu0
    %v6712 = vadd.f32 %v6671, %v6711
    %v6713 = vpop.f32.mrf.mxu0
    %v6714 = vadd.f32 %v6673, %v6713
    %v6715 = vpop.f32.mrf.mxu0
    %v6716 = vpop.f32.mrf.mxu0
    %6717 = vdwg.mxu0
    %6718 = vmatprep.subr.bf16.mxu0 %v5265
    %6719 = vmatpush1.bf16.msra.mxu0 %v5264
    %6720 = vmatprep.subr.bf16.mxu0 %v5257
    %6721 = vmatpush1.bf16.msra.mxu0 %v5256
    %6722 = vmatprep.subr.bf16.mxu0 %v5249
    %6723 = vmatpush1.bf16.msra.mxu0 %v5248
    %6724 = vmatprep.subr.bf16.mxu0 %v5241
    %6725 = vmatpush1.bf16.msra.mxu0 %v5240
    %6726 = vmatprep.subr.bf16.mxu0 %v5233
    %6727 = vmatpush1.bf16.msra.mxu0 %v5232
    %6728 = vmatprep.subr.bf16.mxu0 %v5225
    %6729 = vmatpush1.bf16.msra.mxu0 %v5224
    %6730 = vmatprep.subr.bf16.mxu0 %v5217
    %6731 = vmatpush1.bf16.msra.mxu0 %v5216
    %6732 = vmatprep.subr.bf16.mxu0 %v5209
    %6733 = vmatpush1.bf16.msra.mxu0 %v5208
    %6734 = vmatprep.subr.bf16.mxu0 %v5329
    %6735 = vmatpush2.bf16.msra.mxu0 %v5328
    %6736 = vmatprep.subr.bf16.mxu0 %v5321
    %6737 = vmatpush2.bf16.msra.mxu0 %v5320
    %6738 = vmatprep.subr.bf16.mxu0 %v5313
    %6739 = vmatpush2.bf16.msra.mxu0 %v5312
    %6740 = vmatprep.subr.bf16.mxu0 %v5305
    %6741 = vmatpush2.bf16.msra.mxu0 %v5304
    %6742 = vmatprep.subr.bf16.mxu0 %v5297
    %6743 = vmatpush2.bf16.msra.mxu0 %v5296
    %6744 = vmatprep.subr.bf16.mxu0 %v5289
    %6745 = vmatpush2.bf16.msra.mxu0 %v5288
    %6746 = vmatprep.subr.bf16.mxu0 %v5281
    %6747 = vmatpush2.bf16.msra.mxu0 %v5280
    %6748 = vmatprep.subr.bf16.mxu0 %v5273
    %6749 = vmatpush2.bf16.msra.mxu0 %v5272
    %6750 = vmatprep.mubr.bf16.mxu0 %v3105
    %6751 = vmatmul.mubr.bf16.gmra.mxu0 %v3104
    %v6752 = vpop.f32.mrf.mxu0
    %v6753 = vadd.f32 %v3653, %v6752
    %v6754 = vpop.f32.mrf.mxu0
    %v6755 = vadd.f32 %v3657, %v6754
    %v6756 = vpop.f32.mrf.mxu0
    %v6757 = vpop.f32.mrf.mxu0
    %6758 = vdwg.mxu0
    %6759 = vmatprep.subr.bf16.mxu0 %v5393
    %6760 = vmatpush1.bf16.msra.mxu0 %v5392
    %6761 = vmatprep.subr.bf16.mxu0 %v5385
    %6762 = vmatpush1.bf16.msra.mxu0 %v5384
    %6763 = vmatprep.subr.bf16.mxu0 %v5377
    %6764 = vmatpush1.bf16.msra.mxu0 %v5376
    %6765 = vmatprep.subr.bf16.mxu0 %v5369
    %6766 = vmatpush1.bf16.msra.mxu0 %v5368
    %6767 = vmatprep.subr.bf16.mxu0 %v5361
    %6768 = vmatpush1.bf16.msra.mxu0 %v5360
    %6769 = vmatprep.subr.bf16.mxu0 %v5353
    %6770 = vmatpush1.bf16.msra.mxu0 %v5352
    %6771 = vmatprep.subr.bf16.mxu0 %v5345
    %6772 = vmatpush1.bf16.msra.mxu0 %v5344
    %6773 = vmatprep.subr.bf16.mxu0 %v5337
    %6774 = vmatpush1.bf16.msra.mxu0 %v5336
    %6775 = vmatprep.subr.bf16.mxu0 %v5457
    %6776 = vmatpush2.bf16.msra.mxu0 %v5456
    %6777 = vmatprep.subr.bf16.mxu0 %v5449
    %6778 = vmatpush2.bf16.msra.mxu0 %v5448
    %6779 = vmatprep.subr.bf16.mxu0 %v5441
    %6780 = vmatpush2.bf16.msra.mxu0 %v5440
    %6781 = vmatprep.subr.bf16.mxu0 %v5433
    %6782 = vmatpush2.bf16.msra.mxu0 %v5432
    %6783 = vmatprep.subr.bf16.mxu0 %v5425
    %6784 = vmatpush2.bf16.msra.mxu0 %v5424
    %6785 = vmatprep.subr.bf16.mxu0 %v5417
    %6786 = vmatpush2.bf16.msra.mxu0 %v5416
    %6787 = vmatprep.subr.bf16.mxu0 %v5409
    %6788 = vmatpush2.bf16.msra.mxu0 %v5408
    %6789 = vmatprep.subr.bf16.mxu0 %v5401
    %6790 = vmatpush2.bf16.msra.mxu0 %v5400
    %6791 = vmatprep.mubr.bf16.mxu0 %v3107
    %6792 = vmatmul.mubr.bf16.gmra.mxu0 %v3106
    %v6793 = vpop.f32.mrf.mxu0
    %v6794 = vadd.f32 %v6753, %v6793
    %v6795 = vpop.f32.mrf.mxu0
    %v6796 = vadd.f32 %v6755, %v6795
    %v6797 = vpop.f32.mrf.mxu0
    %v6798 = vpop.f32.mrf.mxu0
    %6799 = vdwg.mxu0
    %6800 = vmatprep.subr.bf16.mxu0 %v5521
    %6801 = vmatpush1.bf16.msra.mxu0 %v5520
    %6802 = vmatprep.subr.bf16.mxu0 %v5513
    %6803 = vmatpush1.bf16.msra.mxu0 %v5512
    %6804 = vmatprep.subr.bf16.mxu0 %v5505
    %6805 = vmatpush1.bf16.msra.mxu0 %v5504
    %6806 = vmatprep.subr.bf16.mxu0 %v5497
    %6807 = vmatpush1.bf16.msra.mxu0 %v5496
    %6808 = vmatprep.subr.bf16.mxu0 %v5489
    %6809 = vmatpush1.bf16.msra.mxu0 %v5488
    %6810 = vmatprep.subr.bf16.mxu0 %v5481
    %6811 = vmatpush1.bf16.msra.mxu0 %v5480
    %6812 = vmatprep.subr.bf16.mxu0 %v5473
    %6813 = vmatpush1.bf16.msra.mxu0 %v5472
    %6814 = vmatprep.subr.bf16.mxu0 %v5465
    %6815 = vmatpush1.bf16.msra.mxu0 %v5464
    %6816 = vmatprep.subr.bf16.mxu0 %v5585
    %6817 = vmatpush2.bf16.msra.mxu0 %v5584
    %6818 = vmatprep.subr.bf16.mxu0 %v5577
    %6819 = vmatpush2.bf16.msra.mxu0 %v5576
    %6820 = vmatprep.subr.bf16.mxu0 %v5569
    %6821 = vmatpush2.bf16.msra.mxu0 %v5568
    %6822 = vmatprep.subr.bf16.mxu0 %v5561
    %6823 = vmatpush2.bf16.msra.mxu0 %v5560
    %6824 = vmatprep.subr.bf16.mxu0 %v5553
    %6825 = vmatpush2.bf16.msra.mxu0 %v5552
    %6826 = vmatprep.subr.bf16.mxu0 %v5545
    %6827 = vmatpush2.bf16.msra.mxu0 %v5544
    %6828 = vmatprep.subr.bf16.mxu0 %v5537
    %6829 = vmatpush2.bf16.msra.mxu0 %v5536
    %6830 = vmatprep.subr.bf16.mxu0 %v5529
    %6831 = vmatpush2.bf16.msra.mxu0 %v5528
    %6832 = vmatprep.mubr.bf16.mxu0 %v3109
    %6833 = vmatmul.mubr.bf16.gmra.mxu0 %v3108
    %v6834 = vpop.f32.mrf.mxu0
    %v6835 = vadd.f32 %v6794, %v6834
    %v6836 = vpop.f32.mrf.mxu0
    %v6837 = vadd.f32 %v6796, %v6836
    %v6838 = vpop.f32.mrf.mxu0
    %v6839 = vpop.f32.mrf.mxu0
    %6840 = vdwg.mxu0
    %6841 = vmatprep.subr.bf16.mxu0 %v5649
    %6842 = vmatpush1.bf16.msra.mxu0 %v5648
    %6843 = vmatprep.subr.bf16.mxu0 %v5641
    %6844 = vmatpush1.bf16.msra.mxu0 %v5640
    %6845 = vmatprep.subr.bf16.mxu0 %v5633
    %6846 = vmatpush1.bf16.msra.mxu0 %v5632
    %6847 = vmatprep.subr.bf16.mxu0 %v5625
    %6848 = vmatpush1.bf16.msra.mxu0 %v5624
    %6849 = vmatprep.subr.bf16.mxu0 %v5617
    %6850 = vmatpush1.bf16.msra.mxu0 %v5616
    %6851 = vmatprep.subr.bf16.mxu0 %v5609
    %6852 = vmatpush1.bf16.msra.mxu0 %v5608
    %6853 = vmatprep.subr.bf16.mxu0 %v5601
    %6854 = vmatpush1.bf16.msra.mxu0 %v5600
    %6855 = vmatprep.subr.bf16.mxu0 %v5593
    %6856 = vmatpush1.bf16.msra.mxu0 %v5592
    %6857 = vmatprep.subr.bf16.mxu0 %v5713
    %6858 = vmatpush2.bf16.msra.mxu0 %v5712
    %6859 = vmatprep.subr.bf16.mxu0 %v5705
    %6860 = vmatpush2.bf16.msra.mxu0 %v5704
    %6861 = vmatprep.subr.bf16.mxu0 %v5697
    %6862 = vmatpush2.bf16.msra.mxu0 %v5696
    %6863 = vmatprep.subr.bf16.mxu0 %v5689
    %6864 = vmatpush2.bf16.msra.mxu0 %v5688
    %6865 = vmatprep.subr.bf16.mxu0 %v5681
    %6866 = vmatpush2.bf16.msra.mxu0 %v5680
    %6867 = vmatprep.subr.bf16.mxu0 %v5673
    %6868 = vmatpush2.bf16.msra.mxu0 %v5672
    %6869 = vmatprep.subr.bf16.mxu0 %v5665
    %6870 = vmatpush2.bf16.msra.mxu0 %v5664
    %6871 = vmatprep.subr.bf16.mxu0 %v5657
    %6872 = vmatpush2.bf16.msra.mxu0 %v5656
    %6873 = vmatprep.mubr.bf16.mxu0 %v3111
    %6874 = vmatmul.mubr.bf16.gmra.mxu0 %v3110
    %v6875 = vpop.f32.mrf.mxu0
    %v6876 = vadd.f32 %v6835, %v6875
    %v6877 = vpop.f32.mrf.mxu0
    %v6878 = vadd.f32 %v6837, %v6877
    %v6879 = vpop.f32.mrf.mxu0
    %v6880 = vpop.f32.mrf.mxu0
    %6881 = vdwg.mxu0
    %v6882 = vmax.f32 %v6384, 0.0
    %v6883 = vmax.f32 %v6386, 0.0
    %v6884 = vmax.f32 %v6548, 0.0
    %v6885 = vmax.f32 %v6550, 0.0
    %v6886 = vmax.f32 %v6712, 0.0
    %v6887 = vmax.f32 %v6714, 0.0
    %v6888 = vmax.f32 %v6876, 0.0
    %v6889 = vmax.f32 %v6878, 0.0
    %v6890 = vpack.c.bf16 %v6882, %v6882
    %v6891 = vpack.c.bf16 %v6883, %v6883
    %v6892 = vpack.c.bf16 %v6884, %v6884
    %v6893 = vpack.c.bf16 %v6885, %v6885
    %v6894 = vpack.c.bf16 %v6886, %v6886
    %v6895 = vpack.c.bf16 %v6887, %v6887
    %v6896 = vpack.c.bf16 %v6888, %v6888
    %v6897 = vpack.c.bf16 %v6889, %v6889
    %v6898 = vld [vmem:[%s5] sm:$0xf]
    %v6899 = vld [vmem:[%s5 + $0x4] sm:$0xf]
    %v6900 = vld [vmem:[%s5 + $0x8] sm:$0xf]
    %v6901 = vld [vmem:[%s5 + $0xc] sm:$0xf]
    %v6902 = vld [vmem:[%s5 + $0x10] sm:$0xf]
    %v6903 = vld [vmem:[%s5 + $0x14] sm:$0xf]
    %v6904 = vld [vmem:[%s5 + $0x18] sm:$0xf]
    %v6905 = vld [vmem:[%s5 + $0x1c] sm:$0xf]
    %v6906 = vld [vmem:[%s5 + $0x20] sm:$0xf]
    %v6907 = vld [vmem:[%s5 + $0x24] sm:$0xf]
    %v6908 = vld [vmem:[%s5 + $0x28] sm:$0xf]
    %v6909 = vld [vmem:[%s5 + $0x2c] sm:$0xf]
    %v6910 = vld [vmem:[%s5 + $0x30] sm:$0xf]
    %v6911 = vld [vmem:[%s5 + $0x34] sm:$0xf]
    %v6912 = vld [vmem:[%s5 + $0x38] sm:$0xf]
    %v6913 = vld [vmem:[%s5 + $0x3c] sm:$0xf]
    %v6914 = vld [vmem:[%s5 + $0x40] sm:$0xf]
    %v6915 = vld [vmem:[%s5 + $0x44] sm:$0xf]
    %v6916 = vld [vmem:[%s5 + $0x48] sm:$0xf]
    %v6917 = vld [vmem:[%s5 + $0x4c] sm:$0xf]
    %v6918 = vld [vmem:[%s5 + $0x50] sm:$0xf]
    %v6919 = vld [vmem:[%s5 + $0x54] sm:$0xf]
    %v6920 = vld [vmem:[%s5 + $0x58] sm:$0xf]
    %v6921 = vld [vmem:[%s5 + $0x5c] sm:$0xf]
    %v6922 = vld [vmem:[%s5 + $0x60] sm:$0xf]
    %v6923 = vld [vmem:[%s5 + $0x64] sm:$0xf]
    %v6924 = vld [vmem:[%s5 + $0x68] sm:$0xf]
    %v6925 = vld [vmem:[%s5 + $0x6c] sm:$0xf]
    %v6926 = vld [vmem:[%s5 + $0x70] sm:$0xf]
    %v6927 = vld [vmem:[%s5 + $0x74] sm:$0xf]
    %v6928 = vld [vmem:[%s5 + $0x78] sm:$0xf]
    %v6929 = vld [vmem:[%s5 + $0x7c] sm:$0xf]
    %v6930 = vld [vmem:[%s5 + $0x80] sm:$0xf]
    %v6931 = vld [vmem:[%s5 + $0x84] sm:$0xf]
    %v6932 = vld [vmem:[%s5 + $0x88] sm:$0xf]
    %v6933 = vld [vmem:[%s5 + $0x8c] sm:$0xf]
    %v6934 = vld [vmem:[%s5 + $0x90] sm:$0xf]
    %v6935 = vld [vmem:[%s5 + $0x94] sm:$0xf]
    %v6936 = vld [vmem:[%s5 + $0x98] sm:$0xf]
    %v6937 = vld [vmem:[%s5 + $0x9c] sm:$0xf]
    %v6938 = vld [vmem:[%s5 + $0xa0] sm:$0xf]
    %v6939 = vld [vmem:[%s5 + $0xa4] sm:$0xf]
    %v6940 = vld [vmem:[%s5 + $0xa8] sm:$0xf]
    %v6941 = vld [vmem:[%s5 + $0xac] sm:$0xf]
    %v6942 = vld [vmem:[%s5 + $0xb0] sm:$0xf]
    %v6943 = vld [vmem:[%s5 + $0xb4] sm:$0xf]
    %v6944 = vld [vmem:[%s5 + $0xb8] sm:$0xf]
    %v6945 = vld [vmem:[%s5 + $0xbc] sm:$0xf]
    %v6946 = vld [vmem:[%s5 + $0xc0] sm:$0xf]
    %v6947 = vld [vmem:[%s5 + $0xc4] sm:$0xf]
    %v6948 = vld [vmem:[%s5 + $0xc8] sm:$0xf]
    %v6949 = vld [vmem:[%s5 + $0xcc] sm:$0xf]
    %v6950 = vld [vmem:[%s5 + $0xd0] sm:$0xf]
    %v6951 = vld [vmem:[%s5 + $0xd4] sm:$0xf]
    %v6952 = vld [vmem:[%s5 + $0xd8] sm:$0xf]
    %v6953 = vld [vmem:[%s5 + $0xdc] sm:$0xf]
    %v6954 = vld [vmem:[%s5 + $0xe0] sm:$0xf]
    %v6955 = vld [vmem:[%s5 + $0xe4] sm:$0xf]
    %v6956 = vld [vmem:[%s5 + $0xe8] sm:$0xf]
    %v6957 = vld [vmem:[%s5 + $0xec] sm:$0xf]
    %v6958 = vld [vmem:[%s5 + $0xf0] sm:$0xf]
    %v6959 = vld [vmem:[%s5 + $0xf4] sm:$0xf]
    %v6960 = vld [vmem:[%s5 + $0xf8] sm:$0xf]
    %v6961 = vld [vmem:[%s5 + $0xfc] sm:$0xf]
    %v6962 = vld [vmem:[%s5 + $0x100] sm:$0xf]
    %v6963 = vld [vmem:[%s5 + $0x104] sm:$0xf]
    %v6964 = vld [vmem:[%s5 + $0x108] sm:$0xf]
    %v6965 = vld [vmem:[%s5 + $0x10c] sm:$0xf]
    %v6966 = vld [vmem:[%s5 + $0x110] sm:$0xf]
    %v6967 = vld [vmem:[%s5 + $0x114] sm:$0xf]
    %v6968 = vld [vmem:[%s5 + $0x118] sm:$0xf]
    %v6969 = vld [vmem:[%s5 + $0x11c] sm:$0xf]
    %v6970 = vld [vmem:[%s5 + $0x120] sm:$0xf]
    %v6971 = vld [vmem:[%s5 + $0x124] sm:$0xf]
    %v6972 = vld [vmem:[%s5 + $0x128] sm:$0xf]
    %v6973 = vld [vmem:[%s5 + $0x12c] sm:$0xf]
    %v6974 = vld [vmem:[%s5 + $0x130] sm:$0xf]
    %v6975 = vld [vmem:[%s5 + $0x134] sm:$0xf]
    %v6976 = vld [vmem:[%s5 + $0x138] sm:$0xf]
    %v6977 = vld [vmem:[%s5 + $0x13c] sm:$0xf]
    %v6978 = vld [vmem:[%s5 + $0x140] sm:$0xf]
    %v6979 = vld [vmem:[%s5 + $0x144] sm:$0xf]
    %v6980 = vld [vmem:[%s5 + $0x148] sm:$0xf]
    %v6981 = vld [vmem:[%s5 + $0x14c] sm:$0xf]
    %v6982 = vld [vmem:[%s5 + $0x150] sm:$0xf]
    %v6983 = vld [vmem:[%s5 + $0x154] sm:$0xf]
    %v6984 = vld [vmem:[%s5 + $0x158] sm:$0xf]
    %v6985 = vld [vmem:[%s5 + $0x15c] sm:$0xf]
    %v6986 = vld [vmem:[%s5 + $0x160] sm:$0xf]
    %v6987 = vld [vmem:[%s5 + $0x164] sm:$0xf]
    %v6988 = vld [vmem:[%s5 + $0x168] sm:$0xf]
    %v6989 = vld [vmem:[%s5 + $0x16c] sm:$0xf]
    %v6990 = vld [vmem:[%s5 + $0x170] sm:$0xf]
    %v6991 = vld [vmem:[%s5 + $0x174] sm:$0xf]
    %v6992 = vld [vmem:[%s5 + $0x178] sm:$0xf]
    %v6993 = vld [vmem:[%s5 + $0x17c] sm:$0xf]
    %v6994 = vld [vmem:[%s5 + $0x180] sm:$0xf]
    %v6995 = vld [vmem:[%s5 + $0x184] sm:$0xf]
    %v6996 = vld [vmem:[%s5 + $0x188] sm:$0xf]
    %v6997 = vld [vmem:[%s5 + $0x18c] sm:$0xf]
    %v6998 = vld [vmem:[%s5 + $0x190] sm:$0xf]
    %v6999 = vld [vmem:[%s5 + $0x194] sm:$0xf]
    %v7000 = vld [vmem:[%s5 + $0x198] sm:$0xf]
    %v7001 = vld [vmem:[%s5 + $0x19c] sm:$0xf]
    %v7002 = vld [vmem:[%s5 + $0x1a0] sm:$0xf]
    %v7003 = vld [vmem:[%s5 + $0x1a4] sm:$0xf]
    %v7004 = vld [vmem:[%s5 + $0x1a8] sm:$0xf]
    %v7005 = vld [vmem:[%s5 + $0x1ac] sm:$0xf]
    %v7006 = vld [vmem:[%s5 + $0x1b0] sm:$0xf]
    %v7007 = vld [vmem:[%s5 + $0x1b4] sm:$0xf]
    %v7008 = vld [vmem:[%s5 + $0x1b8] sm:$0xf]
    %v7009 = vld [vmem:[%s5 + $0x1bc] sm:$0xf]
    %v7010 = vld [vmem:[%s5 + $0x1c0] sm:$0xf]
    %v7011 = vld [vmem:[%s5 + $0x1c4] sm:$0xf]
    %v7012 = vld [vmem:[%s5 + $0x1c8] sm:$0xf]
    %v7013 = vld [vmem:[%s5 + $0x1cc] sm:$0xf]
    %v7014 = vld [vmem:[%s5 + $0x1d0] sm:$0xf]
    %v7015 = vld [vmem:[%s5 + $0x1d4] sm:$0xf]
    %v7016 = vld [vmem:[%s5 + $0x1d8] sm:$0xf]
    %v7017 = vld [vmem:[%s5 + $0x1dc] sm:$0xf]
    %v7018 = vld [vmem:[%s5 + $0x1e0] sm:$0xf]
    %v7019 = vld [vmem:[%s5 + $0x1e4] sm:$0xf]
    %v7020 = vld [vmem:[%s5 + $0x1e8] sm:$0xf]
    %v7021 = vld [vmem:[%s5 + $0x1ec] sm:$0xf]
    %v7022 = vld [vmem:[%s5 + $0x1f0] sm:$0xf]
    %v7023 = vld [vmem:[%s5 + $0x1f4] sm:$0xf]
    %v7024 = vld [vmem:[%s5 + $0x1f8] sm:$0xf]
    %v7025 = vld [vmem:[%s5 + $0x1fc] sm:$0xf]
    %v7026 = vld [vmem:[%s6] sm:$0x1]
    %v7028 = vlaneseq
    %v7029 = vshrl.u32 %v7028, 7
    %v7030 = vsub.s32 0, %v7029
    %v7031 = vrot.slane %v7026, %v7030
    %v7161 = vunpack.c.l.b16 %v6898
    %v7162 = vunpack.c.l.b16 %v6899
    %v7163 = vunpack.c.l.b16 %v6900
    %v7164 = vunpack.c.l.b16 %v6901
    %v7165 = vunpack.c.l.b16 %v6902
    %v7166 = vunpack.c.l.b16 %v6903
    %v7167 = vunpack.c.l.b16 %v6904
    %v7168 = vunpack.c.l.b16 %v6905
    %v7169 = vunpack.c.l.b16 %v6906
    %v7170 = vunpack.c.l.b16 %v6907
    %v7171 = vunpack.c.l.b16 %v6908
    %v7172 = vunpack.c.l.b16 %v6909
    %v7173 = vunpack.c.l.b16 %v6910
    %v7174 = vunpack.c.l.b16 %v6911
    %v7175 = vunpack.c.l.b16 %v6912
    %v7176 = vunpack.c.l.b16 %v6913
    %v7177 = vunpack.c.l.b16 %v6914
    %v7178 = vunpack.c.l.b16 %v6915
    %v7179 = vunpack.c.l.b16 %v6916
    %v7180 = vunpack.c.l.b16 %v6917
    %v7181 = vunpack.c.l.b16 %v6918
    %v7182 = vunpack.c.l.b16 %v6919
    %v7183 = vunpack.c.l.b16 %v6920
    %v7184 = vunpack.c.l.b16 %v6921
    %v7185 = vunpack.c.l.b16 %v6922
    %v7186 = vunpack.c.l.b16 %v6923
    %v7187 = vunpack.c.l.b16 %v6924
    %v7188 = vunpack.c.l.b16 %v6925
    %v7189 = vunpack.c.l.b16 %v6926
    %v7190 = vunpack.c.l.b16 %v6927
    %v7191 = vunpack.c.l.b16 %v6928
    %v7192 = vunpack.c.l.b16 %v6929
    %v7193 = vunpack.c.l.b16 %v6930
    %v7194 = vunpack.c.l.b16 %v6931
    %v7195 = vunpack.c.l.b16 %v6932
    %v7196 = vunpack.c.l.b16 %v6933
    %v7197 = vunpack.c.l.b16 %v6934
    %v7198 = vunpack.c.l.b16 %v6935
    %v7199 = vunpack.c.l.b16 %v6936
    %v7200 = vunpack.c.l.b16 %v6937
    %v7201 = vunpack.c.l.b16 %v6938
    %v7202 = vunpack.c.l.b16 %v6939
    %v7203 = vunpack.c.l.b16 %v6940
    %v7204 = vunpack.c.l.b16 %v6941
    %v7205 = vunpack.c.l.b16 %v6942
    %v7206 = vunpack.c.l.b16 %v6943
    %v7207 = vunpack.c.l.b16 %v6944
    %v7208 = vunpack.c.l.b16 %v6945
    %v7209 = vunpack.c.l.b16 %v6946
    %v7210 = vunpack.c.l.b16 %v6947
    %v7211 = vunpack.c.l.b16 %v6948
    %v7212 = vunpack.c.l.b16 %v6949
    %v7213 = vunpack.c.l.b16 %v6950
    %v7214 = vunpack.c.l.b16 %v6951
    %v7215 = vunpack.c.l.b16 %v6952
    %v7216 = vunpack.c.l.b16 %v6953
    %v7217 = vunpack.c.l.b16 %v6954
    %v7218 = vunpack.c.l.b16 %v6955
    %v7219 = vunpack.c.l.b16 %v6956
    %v7220 = vunpack.c.l.b16 %v6957
    %v7221 = vunpack.c.l.b16 %v6958
    %v7222 = vunpack.c.l.b16 %v6959
    %v7223 = vunpack.c.l.b16 %v6960
    %v7224 = vunpack.c.l.b16 %v6961
    %v7225 = vunpack.c.l.b16 %v6962
    %v7226 = vunpack.c.l.b16 %v6963
    %v7227 = vunpack.c.l.b16 %v6964
    %v7228 = vunpack.c.l.b16 %v6965
    %v7229 = vunpack.c.l.b16 %v6966
    %v7230 = vunpack.c.l.b16 %v6967
    %v7231 = vunpack.c.l.b16 %v6968
    %v7232 = vunpack.c.l.b16 %v6969
    %v7233 = vunpack.c.l.b16 %v6970
    %v7234 = vunpack.c.l.b16 %v6971
    %v7235 = vunpack.c.l.b16 %v6972
    %v7236 = vunpack.c.l.b16 %v6973
    %v7237 = vunpack.c.l.b16 %v6974
    %v7238 = vunpack.c.l.b16 %v6975
    %v7239 = vunpack.c.l.b16 %v6976
    %v7240 = vunpack.c.l.b16 %v6977
    %v7241 = vunpack.c.l.b16 %v6978
    %v7242 = vunpack.c.l.b16 %v6979
    %v7243 = vunpack.c.l.b16 %v6980
    %v7244 = vunpack.c.l.b16 %v6981
    %v7245 = vunpack.c.l.b16 %v6982
    %v7246 = vunpack.c.l.b16 %v6983
    %v7247 = vunpack.c.l.b16 %v6984
    %v7248 = vunpack.c.l.b16 %v6985
    %v7249 = vunpack.c.l.b16 %v6986
    %v7250 = vunpack.c.l.b16 %v6987
    %v7251 = vunpack.c.l.b16 %v6988
    %v7252 = vunpack.c.l.b16 %v6989
    %v7253 = vunpack.c.l.b16 %v6990
    %v7254 = vunpack.c.l.b16 %v6991
    %v7255 = vunpack.c.l.b16 %v6992
    %v7256 = vunpack.c.l.b16 %v6993
    %v7257 = vunpack.c.l.b16 %v6994
    %v7258 = vunpack.c.l.b16 %v6995
    %v7259 = vunpack.c.l.b16 %v6996
    %v7260 = vunpack.c.l.b16 %v6997
    %v7261 = vunpack.c.l.b16 %v6998
    %v7262 = vunpack.c.l.b16 %v6999
    %v7263 = vunpack.c.l.b16 %v7000
    %v7264 = vunpack.c.l.b16 %v7001
    %v7265 = vunpack.c.l.b16 %v7002
    %v7266 = vunpack.c.l.b16 %v7003
    %v7267 = vunpack.c.l.b16 %v7004
    %v7268 = vunpack.c.l.b16 %v7005
    %v7269 = vunpack.c.l.b16 %v7006
    %v7270 = vunpack.c.l.b16 %v7007
    %v7271 = vunpack.c.l.b16 %v7008
    %v7272 = vunpack.c.l.b16 %v7009
    %v7273 = vunpack.c.l.b16 %v7010
    %v7274 = vunpack.c.l.b16 %v7011
    %v7275 = vunpack.c.l.b16 %v7012
    %v7276 = vunpack.c.l.b16 %v7013
    %v7277 = vunpack.c.l.b16 %v7014
    %v7278 = vunpack.c.l.b16 %v7015
    %v7279 = vunpack.c.l.b16 %v7016
    %v7280 = vunpack.c.l.b16 %v7017
    %v7281 = vunpack.c.l.b16 %v7018
    %v7282 = vunpack.c.l.b16 %v7019
    %v7283 = vunpack.c.l.b16 %v7020
    %v7284 = vunpack.c.l.b16 %v7021
    %v7285 = vunpack.c.l.b16 %v7022
    %v7286 = vunpack.c.l.b16 %v7023
    %v7287 = vunpack.c.l.b16 %v7024
    %v7288 = vunpack.c.l.b16 %v7025
    %v7289 = vpack.c.b16 %v7162, %v7161
    %v7290 = vpack.c.b16 %v7164, %v7163
    %v7291 = vpack.c.b16 %v7166, %v7165
    %v7292 = vpack.c.b16 %v7168, %v7167
    %v7293 = vpack.c.b16 %v7170, %v7169
    %v7294 = vpack.c.b16 %v7172, %v7171
    %v7295 = vpack.c.b16 %v7174, %v7173
    %v7296 = vpack.c.b16 %v7176, %v7175
    %v7297 = vpack.c.b16 %v7178, %v7177
    %v7298 = vpack.c.b16 %v7180, %v7179
    %v7299 = vpack.c.b16 %v7182, %v7181
    %v7300 = vpack.c.b16 %v7184, %v7183
    %v7301 = vpack.c.b16 %v7186, %v7185
    %v7302 = vpack.c.b16 %v7188, %v7187
    %v7303 = vpack.c.b16 %v7190, %v7189
    %v7304 = vpack.c.b16 %v7192, %v7191
    %v7305 = vpack.c.b16 %v7194, %v7193
    %v7306 = vpack.c.b16 %v7196, %v7195
    %v7307 = vpack.c.b16 %v7198, %v7197
    %v7308 = vpack.c.b16 %v7200, %v7199
    %v7309 = vpack.c.b16 %v7202, %v7201
    %v7310 = vpack.c.b16 %v7204, %v7203
    %v7311 = vpack.c.b16 %v7206, %v7205
    %v7312 = vpack.c.b16 %v7208, %v7207
    %v7313 = vpack.c.b16 %v7210, %v7209
    %v7314 = vpack.c.b16 %v7212, %v7211
    %v7315 = vpack.c.b16 %v7214, %v7213
    %v7316 = vpack.c.b16 %v7216, %v7215
    %v7317 = vpack.c.b16 %v7218, %v7217
    %v7318 = vpack.c.b16 %v7220, %v7219
    %v7319 = vpack.c.b16 %v7222, %v7221
    %v7320 = vpack.c.b16 %v7224, %v7223
    %v7321 = vpack.c.b16 %v7226, %v7225
    %v7322 = vpack.c.b16 %v7228, %v7227
    %v7323 = vpack.c.b16 %v7230, %v7229
    %v7324 = vpack.c.b16 %v7232, %v7231
    %v7325 = vpack.c.b16 %v7234, %v7233
    %v7326 = vpack.c.b16 %v7236, %v7235
    %v7327 = vpack.c.b16 %v7238, %v7237
    %v7328 = vpack.c.b16 %v7240, %v7239
    %v7329 = vpack.c.b16 %v7242, %v7241
    %v7330 = vpack.c.b16 %v7244, %v7243
    %v7331 = vpack.c.b16 %v7246, %v7245
    %v7332 = vpack.c.b16 %v7248, %v7247
    %v7333 = vpack.c.b16 %v7250, %v7249
    %v7334 = vpack.c.b16 %v7252, %v7251
    %v7335 = vpack.c.b16 %v7254, %v7253
    %v7336 = vpack.c.b16 %v7256, %v7255
    %v7337 = vpack.c.b16 %v7258, %v7257
    %v7338 = vpack.c.b16 %v7260, %v7259
    %v7339 = vpack.c.b16 %v7262, %v7261
    %v7340 = vpack.c.b16 %v7264, %v7263
    %v7341 = vpack.c.b16 %v7266, %v7265
    %v7342 = vpack.c.b16 %v7268, %v7267
    %v7343 = vpack.c.b16 %v7270, %v7269
    %v7344 = vpack.c.b16 %v7272, %v7271
    %v7345 = vpack.c.b16 %v7274, %v7273
    %v7346 = vpack.c.b16 %v7276, %v7275
    %v7347 = vpack.c.b16 %v7278, %v7277
    %v7348 = vpack.c.b16 %v7280, %v7279
    %v7349 = vpack.c.b16 %v7282, %v7281
    %v7350 = vpack.c.b16 %v7284, %v7283
    %v7351 = vpack.c.b16 %v7286, %v7285
    %v7352 = vpack.c.b16 %v7288, %v7287
    %7417 = vmatprep.subr.bf16.mxu0 0
    %7418 = vmatpush1.bf16.msra.mxu0 %v7296
    %7419 = vmatprep.subr.bf16.mxu0 0
    %7420 = vmatpush1.bf16.msra.mxu0 %v7295
    %7421 = vmatprep.subr.bf16.mxu0 0
    %7422 = vmatpush1.bf16.msra.mxu0 %v7294
    %7423 = vmatprep.subr.bf16.mxu0 0
    %7424 = vmatpush1.bf16.msra.mxu0 %v7293
    %7425 = vmatprep.subr.bf16.mxu0 0
    %7426 = vmatpush1.bf16.msra.mxu0 %v7292
    %7427 = vmatprep.subr.bf16.mxu0 0
    %7428 = vmatpush1.bf16.msra.mxu0 %v7291
    %7429 = vmatprep.subr.bf16.mxu0 0
    %7430 = vmatpush1.bf16.msra.mxu0 %v7290
    %7431 = vmatprep.subr.bf16.mxu0 0
    %7432 = vmatpush1.bf16.msra.mxu0 %v7289
    %7433 = vmatprep.subr.bf16.mxu0 0
    %7434 = vmatpush2.bf16.msra.mxu0 %v7304
    %7435 = vmatprep.subr.bf16.mxu0 0
    %7436 = vmatpush2.bf16.msra.mxu0 %v7303
    %7437 = vmatprep.subr.bf16.mxu0 0
    %7438 = vmatpush2.bf16.msra.mxu0 %v7302
    %7439 = vmatprep.subr.bf16.mxu0 0
    %7440 = vmatpush2.bf16.msra.mxu0 %v7301
    %7441 = vmatprep.subr.bf16.mxu0 0
    %7442 = vmatpush2.bf16.msra.mxu0 %v7300
    %7443 = vmatprep.subr.bf16.mxu0 0
    %7444 = vmatpush2.bf16.msra.mxu0 %v7299
    %7445 = vmatprep.subr.bf16.mxu0 0
    %7446 = vmatpush2.bf16.msra.mxu0 %v7298
    %7447 = vmatprep.subr.bf16.mxu0 0
    %7448 = vmatpush2.bf16.msra.mxu0 %v7297
    %7449 = vmatprep.mubr.bf16.mxu0 %v6891
    %7450 = vmatmul.mubr.bf16.gmra.mxu0 %v6890
    %v7451 = vpop.f32.mrf.mxu0
    %v7452 = vadd.f32 %v7031, %v7451
    %v7453 = vpop.f32.mrf.mxu0
    %v7454 = vpop.f32.mrf.mxu0
    %v7455 = vpop.f32.mrf.mxu0
    %7456 = vdwg.mxu0
    %7457 = vmatprep.subr.bf16.mxu0 0
    %7458 = vmatpush1.bf16.msra.mxu0 %v7312
    %7459 = vmatprep.subr.bf16.mxu0 0
    %7460 = vmatpush1.bf16.msra.mxu0 %v7311
    %7461 = vmatprep.subr.bf16.mxu0 0
    %7462 = vmatpush1.bf16.msra.mxu0 %v7310
    %7463 = vmatprep.subr.bf16.mxu0 0
    %7464 = vmatpush1.bf16.msra.mxu0 %v7309
    %7465 = vmatprep.subr.bf16.mxu0 0
    %7466 = vmatpush1.bf16.msra.mxu0 %v7308
    %7467 = vmatprep.subr.bf16.mxu0 0
    %7468 = vmatpush1.bf16.msra.mxu0 %v7307
    %7469 = vmatprep.subr.bf16.mxu0 0
    %7470 = vmatpush1.bf16.msra.mxu0 %v7306
    %7471 = vmatprep.subr.bf16.mxu0 0
    %7472 = vmatpush1.bf16.msra.mxu0 %v7305
    %7473 = vmatprep.subr.bf16.mxu0 0
    %7474 = vmatpush2.bf16.msra.mxu0 %v7320
    %7475 = vmatprep.subr.bf16.mxu0 0
    %7476 = vmatpush2.bf16.msra.mxu0 %v7319
    %7477 = vmatprep.subr.bf16.mxu0 0
    %7478 = vmatpush2.bf16.msra.mxu0 %v7318
    %7479 = vmatprep.subr.bf16.mxu0 0
    %7480 = vmatpush2.bf16.msra.mxu0 %v7317
    %7481 = vmatprep.subr.bf16.mxu0 0
    %7482 = vmatpush2.bf16.msra.mxu0 %v7316
    %7483 = vmatprep.subr.bf16.mxu0 0
    %7484 = vmatpush2.bf16.msra.mxu0 %v7315
    %7485 = vmatprep.subr.bf16.mxu0 0
    %7486 = vmatpush2.bf16.msra.mxu0 %v7314
    %7487 = vmatprep.subr.bf16.mxu0 0
    %7488 = vmatpush2.bf16.msra.mxu0 %v7313
    %7489 = vmatprep.mubr.bf16.mxu0 %v6893
    %7490 = vmatmul.mubr.bf16.gmra.mxu0 %v6892
    %v7491 = vpop.f32.mrf.mxu0
    %v7492 = vadd.f32 %v7452, %v7491
    %v7493 = vpop.f32.mrf.mxu0
    %v7494 = vpop.f32.mrf.mxu0
    %v7495 = vpop.f32.mrf.mxu0
    %7496 = vdwg.mxu0
    %7497 = vmatprep.subr.bf16.mxu0 0
    %7498 = vmatpush1.bf16.msra.mxu0 %v7328
    %7499 = vmatprep.subr.bf16.mxu0 0
    %7500 = vmatpush1.bf16.msra.mxu0 %v7327
    %7501 = vmatprep.subr.bf16.mxu0 0
    %7502 = vmatpush1.bf16.msra.mxu0 %v7326
    %7503 = vmatprep.subr.bf16.mxu0 0
    %7504 = vmatpush1.bf16.msra.mxu0 %v7325
    %7505 = vmatprep.subr.bf16.mxu0 0
    %7506 = vmatpush1.bf16.msra.mxu0 %v7324
    %7507 = vmatprep.subr.bf16.mxu0 0
    %7508 = vmatpush1.bf16.msra.mxu0 %v7323
    %7509 = vmatprep.subr.bf16.mxu0 0
    %7510 = vmatpush1.bf16.msra.mxu0 %v7322
    %7511 = vmatprep.subr.bf16.mxu0 0
    %7512 = vmatpush1.bf16.msra.mxu0 %v7321
    %7513 = vmatprep.subr.bf16.mxu0 0
    %7514 = vmatpush2.bf16.msra.mxu0 %v7336
    %7515 = vmatprep.subr.bf16.mxu0 0
    %7516 = vmatpush2.bf16.msra.mxu0 %v7335
    %7517 = vmatprep.subr.bf16.mxu0 0
    %7518 = vmatpush2.bf16.msra.mxu0 %v7334
    %7519 = vmatprep.subr.bf16.mxu0 0
    %7520 = vmatpush2.bf16.msra.mxu0 %v7333
    %7521 = vmatprep.subr.bf16.mxu0 0
    %7522 = vmatpush2.bf16.msra.mxu0 %v7332
    %7523 = vmatprep.subr.bf16.mxu0 0
    %7524 = vmatpush2.bf16.msra.mxu0 %v7331
    %7525 = vmatprep.subr.bf16.mxu0 0
    %7526 = vmatpush2.bf16.msra.mxu0 %v7330
    %7527 = vmatprep.subr.bf16.mxu0 0
    %7528 = vmatpush2.bf16.msra.mxu0 %v7329
    %7529 = vmatprep.mubr.bf16.mxu0 %v6895
    %7530 = vmatmul.mubr.bf16.gmra.mxu0 %v6894
    %v7531 = vpop.f32.mrf.mxu0
    %v7532 = vadd.f32 %v7492, %v7531
    %v7533 = vpop.f32.mrf.mxu0
    %v7534 = vpop.f32.mrf.mxu0
    %v7535 = vpop.f32.mrf.mxu0
    %7536 = vdwg.mxu0
    %7537 = vmatprep.subr.bf16.mxu0 0
    %7538 = vmatpush1.bf16.msra.mxu0 %v7344
    %7539 = vmatprep.subr.bf16.mxu0 0
    %7540 = vmatpush1.bf16.msra.mxu0 %v7343
    %7541 = vmatprep.subr.bf16.mxu0 0
    %7542 = vmatpush1.bf16.msra.mxu0 %v7342
    %7543 = vmatprep.subr.bf16.mxu0 0
    %7544 = vmatpush1.bf16.msra.mxu0 %v7341
    %7545 = vmatprep.subr.bf16.mxu0 0
    %7546 = vmatpush1.bf16.msra.mxu0 %v7340
    %7547 = vmatprep.subr.bf16.mxu0 0
    %7548 = vmatpush1.bf16.msra.mxu0 %v7339
    %7549 = vmatprep.subr.bf16.mxu0 0
    %7550 = vmatpush1.bf16.msra.mxu0 %v7338
    %7551 = vmatprep.subr.bf16.mxu0 0
    %7552 = vmatpush1.bf16.msra.mxu0 %v7337
    %7553 = vmatprep.subr.bf16.mxu0 0
    %7554 = vmatpush2.bf16.msra.mxu0 %v7352
    %7555 = vmatprep.subr.bf16.mxu0 0
    %7556 = vmatpush2.bf16.msra.mxu0 %v7351
    %7557 = vmatprep.subr.bf16.mxu0 0
    %7558 = vmatpush2.bf16.msra.mxu0 %v7350
    %7559 = vmatprep.subr.bf16.mxu0 0
    %7560 = vmatpush2.bf16.msra.mxu0 %v7349
    %7561 = vmatprep.subr.bf16.mxu0 0
    %7562 = vmatpush2.bf16.msra.mxu0 %v7348
    %7563 = vmatprep.subr.bf16.mxu0 0
    %7564 = vmatpush2.bf16.msra.mxu0 %v7347
    %7565 = vmatprep.subr.bf16.mxu0 0
    %7566 = vmatpush2.bf16.msra.mxu0 %v7346
    %7567 = vmatprep.subr.bf16.mxu0 0
    %7568 = vmatpush2.bf16.msra.mxu0 %v7345
    %7569 = vmatprep.mubr.bf16.mxu0 %v6897
    %7570 = vmatmul.mubr.bf16.gmra.mxu0 %v6896
    %v7571 = vpop.f32.mrf.mxu0
    %v7572 = vadd.f32 %v7532, %v7571
    %v7573 = vpop.f32.mrf.mxu0
    %v7574 = vpop.f32.mrf.mxu0
    %v7575 = vpop.f32.mrf.mxu0
    %7576 = vdwg.mxu0
    %7577 = vst [vmem:[#allocation2] sm:$0xff] %v7572
    // Predicated region
    $region30: #{simple_fcn_forward.1} parent=1 // pred_check
      _
    $region31: #{simple_fcn_forward.1} parent=1 // pred_check_branch
      %7579 = sbr.rel (0) target = $region33
    $region32: #{simple_fcn_forward.1} parent=1 // pred_region
      %s7581 = ssub.s32 128, 128
      %7582 = vsyncadd [#allocation3], %s7581
      %s7584 = sshll.u32 [#allocation2], 4
      %s7585 = int_to_ptr.vmem [resolvable:$true] %s7584
      %7587 = dma.vmem_to_hbm [thread:$0]  %s7585, 128, %s7, [#allocation3]
    $region33: #{simple_fcn_forward.1} parent=1 // pred_fallthru
      _
    // Predicated region
    $region34: #{simple_fcn_forward.1} parent=1 // pred_check
      _
    $region35: #{simple_fcn_forward.1} parent=1 // pred_check_branch
      %7589 = sbr.rel (0) target = $region37
    $region36: #{simple_fcn_forward.1} parent=1 // pred_region
      %7590 = dma.done [#allocation3], 128
    $region37: #{simple_fcn_forward.1} parent=1 // pred_fallthru
      _
    %7591 = vsyncpa [#allocation3], 1

</llo_original>
